<compile_context>
chip_gen: v5e
topology: v5e:2x2
jax: 0.10.0
libtpu: 0.0.40
codegen_flags: <defaults>
</compile_context>

<pallas_src>
import functools

import numpy as np
import jax
import jax.numpy as jnp
from jax.experimental import pallas as pl
from jax.experimental.pallas import tpu as pltpu


_LPAD = 8  # halo width of the conv2 scratch -> sublane-aligned interior stores


def _decoder_kernel(up_ref, w1_ref, s1_ref, t1_ref, w2_ref, s2_ref, t2_ref,
                    o_ref, pad2, col1, col2, *, dot_dtype):
    """One batch element per grid step.

    up_ref : (H2+2, W2+2, Cin) bf16  zero-padded unpooled image (NHWC)
    w1_ref : (9*Cin, Cout) bf16      conv1 taps stacked as (ky, kx, cin) rows
    w2_ref : (9*Cout, Cout) bf16     conv2 taps
    s1/t1  : (1, Cout)  f32          folded BN1 scale / shift
    s2/t2  : (Cout, 1)  f32          folded BN2 scale / shift (lane-dense side)
    o_ref  : (Cout, H2*W2) f32       channel-softmax output, lane-dense NCHW
    pad2   : (H2+2, W2+2*LPAD, Cout) f32  scratch holding conv1 activations
    col1   : (H2*W2, 9*Cin)  bf16    im2col operand for conv1
    col2   : (H2*W2, 9*Cout) bf16    im2col operand for conv2
    dot_dtype : dtype of the matmul operands (bf16 on TPU, f32 elsewhere)
    """
    Hp2, Wp2, Cin = up_ref.shape
    H2, W2 = Hp2 - 2, Wp2 - 2
    Cout = o_ref.shape[0]
    M = H2 * W2

    # ---- conv1: single im2col matmul (M, 9*Cin) x (9*Cin, Cout) ------------
    for dy in range(3):
        for dx in range(3):
            k = dy * 3 + dx
            slab = up_ref[dy:dy + H2, dx:dx + W2, :]           # (H2, W2, Cin)
            col1[:, k * Cin:(k + 1) * Cin] = slab.reshape(M, Cin)
    y1 = jnp.dot(col1[...].astype(dot_dtype), w1_ref[...].astype(dot_dtype),
                 preferred_element_type=jnp.float32)
    y1 = jnp.maximum(y1 * s1_ref[...] + t1_ref[...], 0.0)      # BN1 + ReLU

    # ---- stage conv1 output in a padded scratch for conv2 ------------------
    # Zero only the 1-px halo that conv2's taps read; the bands are LPAD wide
    # so every store here stays sublane-aligned (no full-image zero pass).
    WP = W2 + 2 * _LPAD
    pad2[0, :, :] = jnp.zeros((WP, Cout), pad2.dtype)
    pad2[H2 + 1, :, :] = jnp.zeros((WP, Cout), pad2.dtype)
    pad2[1:H2 + 1, 0:_LPAD, :] = jnp.zeros((H2, _LPAD, Cout), pad2.dtype)
    pad2[1:H2 + 1, _LPAD + W2:WP, :] = jnp.zeros((H2, _LPAD, Cout), pad2.dtype)
    pad2[1:H2 + 1, _LPAD:_LPAD + W2, :] = y1.reshape(H2, W2, Cout)

    # ---- conv2: single im2col matmul (M, 9*Cout) x (9*Cout, Cout) ----------
    for dy in range(3):
        for dx in range(3):
            k = dy * 3 + dx
            x0 = _LPAD - 1 + dx
            slab = pad2[dy:dy + H2, x0:x0 + W2, :]             # (H2, W2, Cout)
            col2[:, k * Cout:(k + 1) * Cout] = (
                slab.reshape(M, Cout).astype(jnp.bfloat16))
    y2 = jnp.dot(col2[...].astype(dot_dtype), w2_ref[...].astype(dot_dtype),
                 preferred_element_type=jnp.float32)

    # ---- BN2 + ReLU + Softmax2d on the lane-dense (Cout, spatial) tile -----
    lt = jnp.transpose(y2)                                     # (Cout, M)
    lt = jnp.maximum(lt * s2_ref[...] + t2_ref[...], 0.0)
    mx = jnp.max(lt, axis=0, keepdims=True)                    # sublane reduce
    ex = jnp.exp(lt - mx)
    o_ref[...] = (ex / jnp.sum(ex, axis=0, keepdims=True)).astype(o_ref.dtype)


def decoder_forward(x_nchw, idx_nchw, out_size, params):
    """Pallas-backed _Decoder.forward(x, indices, size). NCHW in, NCHW out."""
    N, Cin, H, W = x_nchw.shape
    H2, W2 = out_size
    Cout = params["w2"].shape[-1]
    M = H2 * W2

    # --- max_unpool2d(2, 2) prep -------------------------------------------
    # Indices come from max_pool2d(2, 2, return_indices=True), so each index
    # lies inside its own 2x2 window: the scatter is equivalent to keeping the
    # nearest-upsampled value where the flat index equals the output position.
    # The select is done here at pooled/bf16 granularity so the kernel DMAs a
    # single 2 B/px image instead of f32 values + i32 indices (8 B/px).
    x = jnp.transpose(x_nchw, (0, 2, 3, 1)).astype(jnp.float32)     # NHWC
    idx = jnp.transpose(idx_nchw, (0, 2, 3, 1)).astype(jnp.int32)
    x_up = jnp.repeat(jnp.repeat(x, 2, axis=1), 2, axis=2)
    idx_up = jnp.repeat(jnp.repeat(idx, 2, axis=1), 2, axis=2)
    lin = (jnp.arange(H2, dtype=jnp.int32)[:, None] * W2
           + jnp.arange(W2, dtype=jnp.int32)[None, :])[None, :, :, None]
    up = jnp.where(idx_up == lin, x_up, 0.0).astype(jnp.bfloat16)
    up = jnp.pad(up, ((0, 0), (1, 1), (1, 1), (0, 0)))              # conv1 halo

    w1 = params["w1"].reshape(9 * Cin, Cout).astype(jnp.bfloat16)
    w2 = params["w2"].reshape(9 * Cout, Cout).astype(jnp.bfloat16)
    s1 = params["a1"].reshape(1, Cout).astype(jnp.float32)
    t1 = params["b1"].reshape(1, Cout).astype(jnp.float32)
    s2 = params["a2"].reshape(Cout, 1).astype(jnp.float32)
    t2 = params["b2"].reshape(Cout, 1).astype(jnp.float32)

    # Native bf16 MXU dot on TPU; f32 dot elsewhere (CPU/interpret has no
    # bf16 x bf16 = f32 dot thunk). Operand values are bf16-rounded either way.
    dot_dtype = jnp.bfloat16 if jax.default_backend() == "tpu" else jnp.float32
    kernel = functools.partial(_decoder_kernel, dot_dtype=dot_dtype)

    out = pl.pallas_call(
        kernel,
        out_shape=jax.ShapeDtypeStruct((N, Cout, M), jnp.float32),
        grid_spec=pltpu.PrefetchScalarGridSpec(
            num_scalar_prefetch=0,
            grid=(N,),
            in_specs=[
                pl.BlockSpec((None, H2 + 2, W2 + 2, Cin), lambda n: (n, 0, 0, 0)),
                pl.BlockSpec((9 * Cin, Cout), lambda n: (0, 0)),
                pl.BlockSpec((1, Cout), lambda n: (0, 0)),
                pl.BlockSpec((1, Cout), lambda n: (0, 0)),
                pl.BlockSpec((9 * Cout, Cout), lambda n: (0, 0)),
                pl.BlockSpec((Cout, 1), lambda n: (0, 0)),
                pl.BlockSpec((Cout, 1), lambda n: (0, 0)),
            ],
            out_specs=pl.BlockSpec((None, Cout, M), lambda n: (n, 0, 0)),
            scratch_shapes=[
                pltpu.VMEM((H2 + 2, W2 + 2 * _LPAD, Cout), jnp.float32),
                pltpu.VMEM((M, 9 * Cin), jnp.bfloat16),
                pltpu.VMEM((M, 9 * Cout), jnp.bfloat16),
            ],
        ),
        compiler_params=pltpu.CompilerParams(dimension_semantics=("parallel",)),
    )(up, w1, s1, t1, w2, s2, t2)

    # Splitting the last dim is a free (metadata-only) reshape -- no HBM pass.
    return out.reshape(N, Cout, H2, W2)


def init_params(key, n_in, n_out, eps=1e-5):
    """Deterministic synthetic Conv2d + BatchNorm2d parameters (BN folded)."""
    ks = jax.random.split(key, 14)
    w1 = jax.random.normal(ks[0], (3, 3, n_in, n_out), jnp.float32) * 0.2
    bias1 = jax.random.normal(ks[1], (n_out,), jnp.float32) * 0.1
    g1 = jax.random.uniform(ks[2], (n_out,), jnp.float32, 0.5, 1.5)
    beta1 = jax.random.normal(ks[3], (n_out,), jnp.float32) * 0.1
    m1 = jax.random.normal(ks[4], (n_out,), jnp.float32) * 0.1
    v1 = jax.random.uniform(ks[5], (n_out,), jnp.float32, 0.5, 1.5)
    w2 = jax.random.normal(ks[6], (3, 3, n_out, n_out), jnp.float32) * 0.2
    bias2 = jax.random.normal(ks[7], (n_out,), jnp.float32) * 0.1
    g2 = jax.random.uniform(ks[8], (n_out,), jnp.float32, 0.5, 1.5)
    beta2 = jax.random.normal(ks[9], (n_out,), jnp.float32) * 0.1
    m2 = jax.random.normal(ks[10], (n_out,), jnp.float32) * 0.1
    v2 = jax.random.uniform(ks[11], (n_out,), jnp.float32, 0.5, 1.5)

    a1 = g1 / jnp.sqrt(v1 + eps)
    b1f = beta1 + (bias1 - m1) * a1
    a2 = g2 / jnp.sqrt(v2 + eps)
    b2f = beta2 + (bias2 - m2) * a2
    return {"w1": w1, "a1": a1, "b1": b1f, "w2": w2, "a2": a2, "b2": b2f}


def reference_forward(x_nchw, idx_nchw, out_size, params):
    """Pure-JAX reference (true scatter unpool + explicit 3x3 convs).

    Conv operands are rounded to bf16 (f32 accumulation) to match the
    kernel's matmul operand precision.
    """
    N, Cin, H, W = x_nchw.shape
    H2, W2 = out_size
    flat_x = x_nchw.reshape(N, Cin, H * W).astype(jnp.float32)
    flat_idx = idx_nchw.reshape(N, Cin, H * W)
    up = jnp.zeros((N, Cin, H2 * W2), jnp.float32)
    n_ix = jnp.arange(N)[:, None, None]
    c_ix = jnp.arange(Cin)[None, :, None]
    up = up.at[n_ix, c_ix, flat_idx].set(flat_x)
    up = up.reshape(N, Cin, H2, W2).transpose(0, 2, 3, 1)   # NHWC

    def conv_bn_relu(xin, w_hwio, a, b):
        xb = xin.astype(jnp.bfloat16).astype(jnp.float32)
        wb = w_hwio.astype(jnp.bfloat16).astype(jnp.float32)
        xp = jnp.pad(xb, ((0, 0), (1, 1), (1, 1), (0, 0)))
        out = jnp.zeros(xin.shape[:3] + (w_hwio.shape[-1],), jnp.float32)
        for dy in range(3):
            for dx in range(3):
                out = out + jnp.einsum(
                    "nhwc,co->nhwo",
                    xp[:, dy:dy + H2, dx:dx + W2, :], wb[dy, dx],
                    preferred_element_type=jnp.float32)
        return jnp.maximum(out * a + b, 0.0)

    y = conv_bn_relu(up, params["w1"], params["a1"], params["b1"])
    y = conv_bn_relu(y, params["w2"], params["a2"], params["b2"])
    y = jax.nn.softmax(y, axis=-1)
    return y.transpose(0, 3, 1, 2)


if __name__ == "__main__":
    key = jax.random.PRNGKey(0)
    N, Cin, Cout = 2, 8, 4
    H, W = 8, 8                 # pooled spatial size (decoder input)
    H2, W2 = 2 * H, 2 * W       # unpooled output size

    k_pre, k_params = jax.random.split(key)

    # Emulate max_pool2d(kernel=2, stride=2, return_indices=True) to get a
    # (pooled, indices) pair exactly like the PyTorch encoder would produce.
    pre = jax.random.normal(k_pre, (N, Cin, H2, W2), jnp.float32)
    win = pre.reshape(N, Cin, H, 2, W, 2)
    pooled = win.max(axis=(3, 5))
    wflat = win.transpose(0, 1, 2, 4, 3, 5).reshape(N, Cin, H, W, 4)
    widx = jnp.argmax(wflat, axis=-1).astype(jnp.int32)
    di, dj = widx // 2, widx % 2
    ii = jnp.arange(H, dtype=jnp.int32)[:, None]
    jj = jnp.arange(W, dtype=jnp.int32)[None, :]
    indices = (2 * ii + di) * W2 + (2 * jj + dj)            # flat H2*W2 index

    params = init_params(k_params, Cin, Cout)

    out = decoder_forward(pooled, indices, (H2, W2), params)
    out = jax.block_until_ready(out)
    assert out.shape == (N, Cout, H2, W2)

    ref = reference_forward(pooled, indices, (H2, W2), params)
    np.testing.assert_allclose(np.asarray(out), np.asarray(ref),
                               atol=1e-3, rtol=1e-3)

    print("KERNEL_OK")
</pallas_src>

<mosaic_0001>
module attributes {stable_mosaic.version = 11 : i64} {
  func.func @_decoder_kernel(%arg0: i32, %arg1: memref<1x18x18x8xbf16, #tpu.memory_space<vmem>>, %arg2: memref<72x4xbf16, #tpu.memory_space<vmem>>, %arg3: memref<1x4xf32, #tpu.memory_space<vmem>>, %arg4: memref<1x4xf32, #tpu.memory_space<vmem>>, %arg5: memref<36x4xbf16, #tpu.memory_space<vmem>>, %arg6: memref<4x1xf32, #tpu.memory_space<vmem>>, %arg7: memref<4x1xf32, #tpu.memory_space<vmem>>, %arg8: memref<1x4x256xf32, #tpu.memory_space<vmem>>, %arg9: memref<18x32x4xf32, #tpu.memory_space<vmem>>, %arg10: memref<256x72xbf16, #tpu.memory_space<vmem>>, %arg11: memref<256x36xbf16, #tpu.memory_space<vmem>>) attributes {dimension_semantics = [#tpu.dimension_semantics<parallel>], iteration_bounds = array<i64: 2>, scalar_prefetch = 0 : i64, scratch_operands = 3 : i64, tpu.core_type = #tpu.core_type<tc>, window_params = [{transform_indices = @transform_0, window_bounds = array<i64: 1, 18, 18, 8>}, {pipeline_mode = #tpu.pipeline_mode<synchronous>, transform_indices = @transform_1, window_bounds = array<i64: 72, 4>}, {pipeline_mode = #tpu.pipeline_mode<synchronous>, transform_indices = @transform_2, window_bounds = array<i64: 1, 4>}, {pipeline_mode = #tpu.pipeline_mode<synchronous>, transform_indices = @transform_3, window_bounds = array<i64: 1, 4>}, {pipeline_mode = #tpu.pipeline_mode<synchronous>, transform_indices = @transform_4, window_bounds = array<i64: 36, 4>}, {pipeline_mode = #tpu.pipeline_mode<synchronous>, transform_indices = @transform_5, window_bounds = array<i64: 4, 1>}, {pipeline_mode = #tpu.pipeline_mode<synchronous>, transform_indices = @transform_6, window_bounds = array<i64: 4, 1>}, {transform_indices = @transform_7, window_bounds = array<i64: 1, 4, 256>}]} {
    %c0 = arith.constant 0 : index
    %c0_0 = arith.constant 0 : index
    %c0_1 = arith.constant 0 : index
    %c0_2 = arith.constant 0 : index
    %0 = vector.load %arg1[%c0, %c0_0, %c0_1, %c0_2] : memref<1x18x18x8xbf16, #tpu.memory_space<vmem>>, vector<1x16x16x8xbf16>
    %1 = vector.shape_cast %0 : vector<1x16x16x8xbf16> to vector<16x16x8xbf16>
    %2 = vector.shape_cast %1 : vector<16x16x8xbf16> to vector<256x8xbf16>
    %c0_3 = arith.constant 0 : index
    %c0_4 = arith.constant 0 : index
    %3 = vector.load %arg10[%c0_3, %c0_4] : memref<256x72xbf16, #tpu.memory_space<vmem>>, vector<256x8xbf16>
    tpu.vector_store %arg10[%c0_3, %c0_4], %2 {strides = array<i32>} : memref<256x72xbf16, #tpu.memory_space<vmem>>, vector<256x8xbf16>,
    %c0_5 = arith.constant 0 : index
    %c0_6 = arith.constant 0 : index
    %c1 = arith.constant 1 : index
    %c0_7 = arith.constant 0 : index
    %4 = vector.load %arg1[%c0_5, %c0_6, %c1, %c0_7] : memref<1x18x18x8xbf16, #tpu.memory_space<vmem>>, vector<1x16x16x8xbf16>
    %5 = vector.shape_cast %4 : vector<1x16x16x8xbf16> to vector<16x16x8xbf16>
    %6 = vector.shape_cast %5 : vector<16x16x8xbf16> to vector<256x8xbf16>
    %c0_8 = arith.constant 0 : index
    %c8 = arith.constant 8 : index
    %7 = vector.load %arg10[%c0_8, %c8] : memref<256x72xbf16, #tpu.memory_space<vmem>>, vector<256x8xbf16>
    tpu.vector_store %arg10[%c0_8, %c8], %6 {strides = array<i32>} : memref<256x72xbf16, #tpu.memory_space<vmem>>, vector<256x8xbf16>,
    %c0_9 = arith.constant 0 : index
    %c0_10 = arith.constant 0 : index
    %c2 = arith.constant 2 : index
    %c0_11 = arith.constant 0 : index
    %8 = vector.load %arg1[%c0_9, %c0_10, %c2, %c0_11] : memref<1x18x18x8xbf16, #tpu.memory_space<vmem>>, vector<1x16x16x8xbf16>
    %9 = vector.shape_cast %8 : vector<1x16x16x8xbf16> to vector<16x16x8xbf16>
    %10 = vector.shape_cast %9 : vector<16x16x8xbf16> to vector<256x8xbf16>
    %c0_12 = arith.constant 0 : index
    %c16 = arith.constant 16 : index
    %11 = vector.load %arg10[%c0_12, %c16] : memref<256x72xbf16, #tpu.memory_space<vmem>>, vector<256x8xbf16>
    tpu.vector_store %arg10[%c0_12, %c16], %10 {strides = array<i32>} : memref<256x72xbf16, #tpu.memory_space<vmem>>, vector<256x8xbf16>,
    %c0_13 = arith.constant 0 : index
    %c1_14 = arith.constant 1 : index
    %c0_15 = arith.constant 0 : index
    %c0_16 = arith.constant 0 : index
    %12 = vector.load %arg1[%c0_13, %c1_14, %c0_15, %c0_16] : memref<1x18x18x8xbf16, #tpu.memory_space<vmem>>, vector<1x16x16x8xbf16>
    %13 = vector.shape_cast %12 : vector<1x16x16x8xbf16> to vector<16x16x8xbf16>
    %14 = vector.shape_cast %13 : vector<16x16x8xbf16> to vector<256x8xbf16>
    %c0_17 = arith.constant 0 : index
    %c24 = arith.constant 24 : index
    %15 = vector.load %arg10[%c0_17, %c24] : memref<256x72xbf16, #tpu.memory_space<vmem>>, vector<256x8xbf16>
    tpu.vector_store %arg10[%c0_17, %c24], %14 {strides = array<i32>} : memref<256x72xbf16, #tpu.memory_space<vmem>>, vector<256x8xbf16>,
    %c0_18 = arith.constant 0 : index
    %c1_19 = arith.constant 1 : index
    %c1_20 = arith.constant 1 : index
    %c0_21 = arith.constant 0 : index
    %16 = vector.load %arg1[%c0_18, %c1_19, %c1_20, %c0_21] : memref<1x18x18x8xbf16, #tpu.memory_space<vmem>>, vector<1x16x16x8xbf16>
    %17 = vector.shape_cast %16 : vector<1x16x16x8xbf16> to vector<16x16x8xbf16>
    %18 = vector.shape_cast %17 : vector<16x16x8xbf16> to vector<256x8xbf16>
    %c0_22 = arith.constant 0 : index
    %c32 = arith.constant 32 : index
    %19 = vector.load %arg10[%c0_22, %c32] : memref<256x72xbf16, #tpu.memory_space<vmem>>, vector<256x8xbf16>
    tpu.vector_store %arg10[%c0_22, %c32], %18 {strides = array<i32>} : memref<256x72xbf16, #tpu.memory_space<vmem>>, vector<256x8xbf16>,
    %c0_23 = arith.constant 0 : index
    %c1_24 = arith.constant 1 : index
    %c2_25 = arith.constant 2 : index
    %c0_26 = arith.constant 0 : index
    %20 = vector.load %arg1[%c0_23, %c1_24, %c2_25, %c0_26] : memref<1x18x18x8xbf16, #tpu.memory_space<vmem>>, vector<1x16x16x8xbf16>
    %21 = vector.shape_cast %20 : vector<1x16x16x8xbf16> to vector<16x16x8xbf16>
    %22 = vector.shape_cast %21 : vector<16x16x8xbf16> to vector<256x8xbf16>
    %c0_27 = arith.constant 0 : index
    %c40 = arith.constant 40 : index
    %23 = vector.load %arg10[%c0_27, %c40] : memref<256x72xbf16, #tpu.memory_space<vmem>>, vector<256x8xbf16>
    tpu.vector_store %arg10[%c0_27, %c40], %22 {strides = array<i32>} : memref<256x72xbf16, #tpu.memory_space<vmem>>, vector<256x8xbf16>,
    %c0_28 = arith.constant 0 : index
    %c2_29 = arith.constant 2 : index
    %c0_30 = arith.constant 0 : index
    %c0_31 = arith.constant 0 : index
    %24 = vector.load %arg1[%c0_28, %c2_29, %c0_30, %c0_31] : memref<1x18x18x8xbf16, #tpu.memory_space<vmem>>, vector<1x16x16x8xbf16>
    %25 = vector.shape_cast %24 : vector<1x16x16x8xbf16> to vector<16x16x8xbf16>
    %26 = vector.shape_cast %25 : vector<16x16x8xbf16> to vector<256x8xbf16>
    %c0_32 = arith.constant 0 : index
    %c48 = arith.constant 48 : index
    %27 = vector.load %arg10[%c0_32, %c48] : memref<256x72xbf16, #tpu.memory_space<vmem>>, vector<256x8xbf16>
    tpu.vector_store %arg10[%c0_32, %c48], %26 {strides = array<i32>} : memref<256x72xbf16, #tpu.memory_space<vmem>>, vector<256x8xbf16>,
    %c0_33 = arith.constant 0 : index
    %c2_34 = arith.constant 2 : index
    %c1_35 = arith.constant 1 : index
    %c0_36 = arith.constant 0 : index
    %28 = vector.load %arg1[%c0_33, %c2_34, %c1_35, %c0_36] : memref<1x18x18x8xbf16, #tpu.memory_space<vmem>>, vector<1x16x16x8xbf16>
    %29 = vector.shape_cast %28 : vector<1x16x16x8xbf16> to vector<16x16x8xbf16>
    %30 = vector.shape_cast %29 : vector<16x16x8xbf16> to vector<256x8xbf16>
    %c0_37 = arith.constant 0 : index
    %c56 = arith.constant 56 : index
    %31 = vector.load %arg10[%c0_37, %c56] : memref<256x72xbf16, #tpu.memory_space<vmem>>, vector<256x8xbf16>
    tpu.vector_store %arg10[%c0_37, %c56], %30 {strides = array<i32>} : memref<256x72xbf16, #tpu.memory_space<vmem>>, vector<256x8xbf16>,
    %c0_38 = arith.constant 0 : index
    %c2_39 = arith.constant 2 : index
    %c2_40 = arith.constant 2 : index
    %c0_41 = arith.constant 0 : index
    %32 = vector.load %arg1[%c0_38, %c2_39, %c2_40, %c0_41] : memref<1x18x18x8xbf16, #tpu.memory_space<vmem>>, vector<1x16x16x8xbf16>
    %33 = vector.shape_cast %32 : vector<1x16x16x8xbf16> to vector<16x16x8xbf16>
    %34 = vector.shape_cast %33 : vector<16x16x8xbf16> to vector<256x8xbf16>
    %c0_42 = arith.constant 0 : index
    %c64 = arith.constant 64 : index
    %35 = vector.load %arg10[%c0_42, %c64] : memref<256x72xbf16, #tpu.memory_space<vmem>>, vector<256x8xbf16>
    tpu.vector_store %arg10[%c0_42, %c64], %34 {strides = array<i32>} : memref<256x72xbf16, #tpu.memory_space<vmem>>, vector<256x8xbf16>,
    %c0_43 = arith.constant 0 : index
    %c0_44 = arith.constant 0 : index
    %36 = vector.load %arg10[%c0_43, %c0_44] : memref<256x72xbf16, #tpu.memory_space<vmem>>, vector<256x72xbf16>
    %37 = arith.extf %36 : vector<256x72xbf16> to vector<256x72xf32>
    %c0_45 = arith.constant 0 : index
    %c0_46 = arith.constant 0 : index
    %38 = vector.load %arg2[%c0_45, %c0_46] : memref<72x4xbf16, #tpu.memory_space<vmem>>, vector<72x4xbf16>
    %39 = arith.extf %38 : vector<72x4xbf16> to vector<72x4xf32>
    %cst = arith.constant dense<0.000000e+00> : vector<256x4xf32>
    %40 = tpu.matmul %37, %39, %cst {dimension_numbers = #tpu.dot_dimension_numbers<[1], [0], [0], [1], [0, 0, 1, 1], [], []>} : vector<256x72xf32>, vector<72x4xf32>, vector<256x4xf32> -> vector<256x4xf32>
    %c0_47 = arith.constant 0 : index
    %c0_48 = arith.constant 0 : index
    %41 = vector.load %arg3[%c0_47, %c0_48] : memref<1x4xf32, #tpu.memory_space<vmem>>, vector<1x4xf32>
    %42 = vector.broadcast %41 : vector<1x4xf32> to vector<256x4xf32>
    %43 = arith.mulf %40, %42 : vector<256x4xf32>
    %c0_49 = arith.constant 0 : index
    %c0_50 = arith.constant 0 : index
    %44 = vector.load %arg4[%c0_49, %c0_50] : memref<1x4xf32, #tpu.memory_space<vmem>>, vector<1x4xf32>
    %45 = vector.broadcast %44 : vector<1x4xf32> to vector<256x4xf32>
    %46 = arith.addf %43, %45 : vector<256x4xf32>
    %cst_51 = arith.constant 0.000000e+00 : f32
    %47 = vector.broadcast %cst_51 : f32 to vector<256x4xf32>
    %48 = arith.maximumf %46, %47 : vector<256x4xf32>
    %cst_52 = arith.constant 0.000000e+00 : f32
    %49 = vector.broadcast %cst_52 : f32 to vector<32x4xf32>
    %c0_53 = arith.constant 0 : index
    %c0_54 = arith.constant 0 : index
    %c0_55 = arith.constant 0 : index
    %50 = vector.load %arg9[%c0_53, %c0_54, %c0_55] : memref<18x32x4xf32, #tpu.memory_space<vmem>>, vector<1x32x4xf32>
    %51 = vector.shape_cast %50 : vector<1x32x4xf32> to vector<32x4xf32>
    %52 = vector.shape_cast %49 : vector<32x4xf32> to vector<1x32x4xf32>
    tpu.vector_store %arg9[%c0_53, %c0_54, %c0_55], %52 {strides = array<i32>} : memref<18x32x4xf32, #tpu.memory_space<vmem>>, vector<1x32x4xf32>,
    %cst_56 = arith.constant 0.000000e+00 : f32
    %53 = vector.broadcast %cst_56 : f32 to vector<32x4xf32>
    %c17 = arith.constant 17 : index
    %c0_57 = arith.constant 0 : index
    %c0_58 = arith.constant 0 : index
    %54 = vector.load %arg9[%c17, %c0_57, %c0_58] : memref<18x32x4xf32, #tpu.memory_space<vmem>>, vector<1x32x4xf32>
    %55 = vector.shape_cast %54 : vector<1x32x4xf32> to vector<32x4xf32>
    %56 = vector.shape_cast %53 : vector<32x4xf32> to vector<1x32x4xf32>
    tpu.vector_store %arg9[%c17, %c0_57, %c0_58], %56 {strides = array<i32>} : memref<18x32x4xf32, #tpu.memory_space<vmem>>, vector<1x32x4xf32>,
    %cst_59 = arith.constant 0.000000e+00 : f32
    %57 = vector.broadcast %cst_59 : f32 to vector<16x8x4xf32>
    %c1_60 = arith.constant 1 : index
    %c0_61 = arith.constant 0 : index
    %c0_62 = arith.constant 0 : index
    %58 = vector.load %arg9[%c1_60, %c0_61, %c0_62] : memref<18x32x4xf32, #tpu.memory_space<vmem>>, vector<16x8x4xf32>
    tpu.vector_store %arg9[%c1_60, %c0_61, %c0_62], %57 {strides = array<i32>} : memref<18x32x4xf32, #tpu.memory_space<vmem>>, vector<16x8x4xf32>,
    %cst_63 = arith.constant 0.000000e+00 : f32
    %59 = vector.broadcast %cst_63 : f32 to vector<16x8x4xf32>
    %c1_64 = arith.constant 1 : index
    %c24_65 = arith.constant 24 : index
    %c0_66 = arith.constant 0 : index
    %60 = vector.load %arg9[%c1_64, %c24_65, %c0_66] : memref<18x32x4xf32, #tpu.memory_space<vmem>>, vector<16x8x4xf32>
    tpu.vector_store %arg9[%c1_64, %c24_65, %c0_66], %59 {strides = array<i32>} : memref<18x32x4xf32, #tpu.memory_space<vmem>>, vector<16x8x4xf32>,
    %61 = vector.shape_cast %48 : vector<256x4xf32> to vector<16x16x4xf32>
    %c1_67 = arith.constant 1 : index
    %c8_68 = arith.constant 8 : index
    %c0_69 = arith.constant 0 : index
    %62 = vector.load %arg9[%c1_67, %c8_68, %c0_69] : memref<18x32x4xf32, #tpu.memory_space<vmem>>, vector<16x16x4xf32>
    tpu.vector_store %arg9[%c1_67, %c8_68, %c0_69], %61 {strides = array<i32>} : memref<18x32x4xf32, #tpu.memory_space<vmem>>, vector<16x16x4xf32>,
    %c0_70 = arith.constant 0 : index
    %c7 = arith.constant 7 : index
    %c0_71 = arith.constant 0 : index
    %63 = vector.load %arg9[%c0_70, %c7, %c0_71] : memref<18x32x4xf32, #tpu.memory_space<vmem>>, vector<16x16x4xf32>
    %64 = vector.shape_cast %63 : vector<16x16x4xf32> to vector<256x4xf32>
    %65 = arith.truncf %64 : vector<256x4xf32> to vector<256x4xbf16>
    %c0_72 = arith.constant 0 : index
    %c0_73 = arith.constant 0 : index
    %66 = vector.load %arg11[%c0_72, %c0_73] : memref<256x36xbf16, #tpu.memory_space<vmem>>, vector<256x4xbf16>
    tpu.vector_store %arg11[%c0_72, %c0_73], %65 {strides = array<i32>} : memref<256x36xbf16, #tpu.memory_space<vmem>>, vector<256x4xbf16>,
    %c0_74 = arith.constant 0 : index
    %c8_75 = arith.constant 8 : index
    %c0_76 = arith.constant 0 : index
    %67 = vector.load %arg9[%c0_74, %c8_75, %c0_76] : memref<18x32x4xf32, #tpu.memory_space<vmem>>, vector<16x16x4xf32>
    %68 = vector.shape_cast %67 : vector<16x16x4xf32> to vector<256x4xf32>
    %69 = arith.truncf %68 : vector<256x4xf32> to vector<256x4xbf16>
    %c0_77 = arith.constant 0 : index
    %c4 = arith.constant 4 : index
    %70 = vector.load %arg11[%c0_77, %c4] : memref<256x36xbf16, #tpu.memory_space<vmem>>, vector<256x4xbf16>
    tpu.vector_store %arg11[%c0_77, %c4], %69 {strides = array<i32>} : memref<256x36xbf16, #tpu.memory_space<vmem>>, vector<256x4xbf16>,
    %c0_78 = arith.constant 0 : index
    %c9 = arith.constant 9 : index
    %c0_79 = arith.constant 0 : index
    %71 = vector.load %arg9[%c0_78, %c9, %c0_79] : memref<18x32x4xf32, #tpu.memory_space<vmem>>, vector<16x16x4xf32>
    %72 = vector.shape_cast %71 : vector<16x16x4xf32> to vector<256x4xf32>
    %73 = arith.truncf %72 : vector<256x4xf32> to vector<256x4xbf16>
    %c0_80 = arith.constant 0 : index
    %c8_81 = arith.constant 8 : index
    %74 = vector.load %arg11[%c0_80, %c8_81] : memref<256x36xbf16, #tpu.memory_space<vmem>>, vector<256x4xbf16>
    tpu.vector_store %arg11[%c0_80, %c8_81], %73 {strides = array<i32>} : memref<256x36xbf16, #tpu.memory_space<vmem>>, vector<256x4xbf16>,
    %c1_82 = arith.constant 1 : index
    %c7_83 = arith.constant 7 : index
    %c0_84 = arith.constant 0 : index
    %75 = vector.load %arg9[%c1_82, %c7_83, %c0_84] : memref<18x32x4xf32, #tpu.memory_space<vmem>>, vector<16x16x4xf32>
    %76 = vector.shape_cast %75 : vector<16x16x4xf32> to vector<256x4xf32>
    %77 = arith.truncf %76 : vector<256x4xf32> to vector<256x4xbf16>
    %c0_85 = arith.constant 0 : index
    %c12 = arith.constant 12 : index
    %78 = vector.load %arg11[%c0_85, %c12] : memref<256x36xbf16, #tpu.memory_space<vmem>>, vector<256x4xbf16>
    tpu.vector_store %arg11[%c0_85, %c12], %77 {strides = array<i32>} : memref<256x36xbf16, #tpu.memory_space<vmem>>, vector<256x4xbf16>,
    %c1_86 = arith.constant 1 : index
    %c8_87 = arith.constant 8 : index
    %c0_88 = arith.constant 0 : index
    %79 = vector.load %arg9[%c1_86, %c8_87, %c0_88] : memref<18x32x4xf32, #tpu.memory_space<vmem>>, vector<16x16x4xf32>
    %80 = vector.shape_cast %79 : vector<16x16x4xf32> to vector<256x4xf32>
    %81 = arith.truncf %80 : vector<256x4xf32> to vector<256x4xbf16>
    %c0_89 = arith.constant 0 : index
    %c16_90 = arith.constant 16 : index
    %82 = vector.load %arg11[%c0_89, %c16_90] : memref<256x36xbf16, #tpu.memory_space<vmem>>, vector<256x4xbf16>
    tpu.vector_store %arg11[%c0_89, %c16_90], %81 {strides = array<i32>} : memref<256x36xbf16, #tpu.memory_space<vmem>>, vector<256x4xbf16>,
    %c1_91 = arith.constant 1 : index
    %c9_92 = arith.constant 9 : index
    %c0_93 = arith.constant 0 : index
    %83 = vector.load %arg9[%c1_91, %c9_92, %c0_93] : memref<18x32x4xf32, #tpu.memory_space<vmem>>, vector<16x16x4xf32>
    %84 = vector.shape_cast %83 : vector<16x16x4xf32> to vector<256x4xf32>
    %85 = arith.truncf %84 : vector<256x4xf32> to vector<256x4xbf16>
    %c0_94 = arith.constant 0 : index
    %c20 = arith.constant 20 : index
    %86 = vector.load %arg11[%c0_94, %c20] : memref<256x36xbf16, #tpu.memory_space<vmem>>, vector<256x4xbf16>
    tpu.vector_store %arg11[%c0_94, %c20], %85 {strides = array<i32>} : memref<256x36xbf16, #tpu.memory_space<vmem>>, vector<256x4xbf16>,
    %c2_95 = arith.constant 2 : index
    %c7_96 = arith.constant 7 : index
    %c0_97 = arith.constant 0 : index
    %87 = vector.load %arg9[%c2_95, %c7_96, %c0_97] : memref<18x32x4xf32, #tpu.memory_space<vmem>>, vector<16x16x4xf32>
    %88 = vector.shape_cast %87 : vector<16x16x4xf32> to vector<256x4xf32>
    %89 = arith.truncf %88 : vector<256x4xf32> to vector<256x4xbf16>
    %c0_98 = arith.constant 0 : index
    %c24_99 = arith.constant 24 : index
    %90 = vector.load %arg11[%c0_98, %c24_99] : memref<256x36xbf16, #tpu.memory_space<vmem>>, vector<256x4xbf16>
    tpu.vector_store %arg11[%c0_98, %c24_99], %89 {strides = array<i32>} : memref<256x36xbf16, #tpu.memory_space<vmem>>, vector<256x4xbf16>,
    %c2_100 = arith.constant 2 : index
    %c8_101 = arith.constant 8 : index
    %c0_102 = arith.constant 0 : index
    %91 = vector.load %arg9[%c2_100, %c8_101, %c0_102] : memref<18x32x4xf32, #tpu.memory_space<vmem>>, vector<16x16x4xf32>
    %92 = vector.shape_cast %91 : vector<16x16x4xf32> to vector<256x4xf32>
    %93 = arith.truncf %92 : vector<256x4xf32> to vector<256x4xbf16>
    %c0_103 = arith.constant 0 : index
    %c28 = arith.constant 28 : index
    %94 = vector.load %arg11[%c0_103, %c28] : memref<256x36xbf16, #tpu.memory_space<vmem>>, vector<256x4xbf16>
    tpu.vector_store %arg11[%c0_103, %c28], %93 {strides = array<i32>} : memref<256x36xbf16, #tpu.memory_space<vmem>>, vector<256x4xbf16>,
    %c2_104 = arith.constant 2 : index
    %c9_105 = arith.constant 9 : index
    %c0_106 = arith.constant 0 : index
    %95 = vector.load %arg9[%c2_104, %c9_105, %c0_106] : memref<18x32x4xf32, #tpu.memory_space<vmem>>, vector<16x16x4xf32>
    %96 = vector.shape_cast %95 : vector<16x16x4xf32> to vector<256x4xf32>
    %97 = arith.truncf %96 : vector<256x4xf32> to vector<256x4xbf16>
    %c0_107 = arith.constant 0 : index
    %c32_108 = arith.constant 32 : index
    %98 = vector.load %arg11[%c0_107, %c32_108] : memref<256x36xbf16, #tpu.memory_space<vmem>>, vector<256x4xbf16>
    tpu.vector_store %arg11[%c0_107, %c32_108], %97 {strides = array<i32>} : memref<256x36xbf16, #tpu.memory_space<vmem>>, vector<256x4xbf16>,
    %c0_109 = arith.constant 0 : index
    %c0_110 = arith.constant 0 : index
    %99 = vector.load %arg11[%c0_109, %c0_110] : memref<256x36xbf16, #tpu.memory_space<vmem>>, vector<256x36xbf16>
    %100 = arith.extf %99 : vector<256x36xbf16> to vector<256x36xf32>
    %c0_111 = arith.constant 0 : index
    %c0_112 = arith.constant 0 : index
    %101 = vector.load %arg5[%c0_111, %c0_112] : memref<36x4xbf16, #tpu.memory_space<vmem>>, vector<36x4xbf16>
    %102 = arith.extf %101 : vector<36x4xbf16> to vector<36x4xf32>
    %cst_113 = arith.constant dense<0.000000e+00> : vector<256x4xf32>
    %103 = tpu.matmul %100, %102, %cst_113 {dimension_numbers = #tpu.dot_dimension_numbers<[1], [0], [0], [1], [0, 0, 1, 1], [], []>} : vector<256x36xf32>, vector<36x4xf32>, vector<256x4xf32> -> vector<256x4xf32>
    %104 = tpu.transpose %103, [1, 0] : vector<256x4xf32> -> vector<4x256xf32>
    %c0_114 = arith.constant 0 : index
    %c0_115 = arith.constant 0 : index
    %105 = vector.load %arg6[%c0_114, %c0_115] : memref<4x1xf32, #tpu.memory_space<vmem>>, vector<4x1xf32>
    %106 = vector.broadcast %105 : vector<4x1xf32> to vector<4x256xf32>
    %107 = arith.mulf %104, %106 : vector<4x256xf32>
    %c0_116 = arith.constant 0 : index
    %c0_117 = arith.constant 0 : index
    %108 = vector.load %arg7[%c0_116, %c0_117] : memref<4x1xf32, #tpu.memory_space<vmem>>, vector<4x1xf32>
    %109 = vector.broadcast %108 : vector<4x1xf32> to vector<4x256xf32>
    %110 = arith.addf %107, %109 : vector<4x256xf32>
    %cst_118 = arith.constant 0.000000e+00 : f32
    %111 = vector.broadcast %cst_118 : f32 to vector<4x256xf32>
    %112 = arith.maximumf %110, %111 : vector<4x256xf32>
    %cst_119 = arith.constant dense<0xFF800000> : vector<256xf32>
    %113 = vector.multi_reduction <maximumf>, %112, %cst_119 [0] : vector<4x256xf32> to vector<256xf32>
    %114 = vector.shape_cast %113 : vector<256xf32> to vector<1x256xf32>
    %115 = vector.broadcast %114 : vector<1x256xf32> to vector<4x256xf32>
    %116 = arith.subf %112, %115 : vector<4x256xf32>
    %117 = math.exp %116 : vector<4x256xf32>
    %cst_120 = arith.constant dense<0.000000e+00> : vector<256xf32>
    %118 = vector.multi_reduction <add>, %117, %cst_120 [0] : vector<4x256xf32> to vector<256xf32>
    %119 = vector.shape_cast %118 : vector<256xf32> to vector<1x256xf32>
    %120 = vector.broadcast %119 : vector<1x256xf32> to vector<4x256xf32>
    %121 = arith.divf %117, %120 : vector<4x256xf32>
    %c0_121 = arith.constant 0 : index
    %c0_122 = arith.constant 0 : index
    %c0_123 = arith.constant 0 : index
    %122 = vector.load %arg8[%c0_121, %c0_122, %c0_123] : memref<1x4x256xf32, #tpu.memory_space<vmem>>, vector<1x4x256xf32>
    %123 = vector.shape_cast %122 : vector<1x4x256xf32> to vector<4x256xf32>
    %124 = vector.shape_cast %121 : vector<4x256xf32> to vector<1x4x256xf32>
    tpu.vector_store %arg8[%c0_121, %c0_122, %c0_123], %124 {strides = array<i32>} : memref<1x4x256xf32, #tpu.memory_space<vmem>>, vector<1x4x256xf32>,
    return
  }
  func.func @transform_0(%arg0: i32) -> (i32, i32, i32, i32) {
    %c0_i32 = arith.constant 0 : i32
    %c0_i32_0 = arith.constant 0 : i32
    %c0_i32_1 = arith.constant 0 : i32
    %c0_i32_2 = arith.constant 0 : i32
    return %arg0, %c0_i32, %c0_i32_0, %c0_i32_1 : i32, i32, i32, i32
  }
  func.func @transform_1(%arg0: i32) -> (i32, i32) {
    %c0_i32 = arith.constant 0 : i32
    %c0_i32_0 = arith.constant 0 : i32
    %c0_i32_1 = arith.constant 0 : i32
    return %c0_i32, %c0_i32_0 : i32, i32
  }
  func.func @transform_2(%arg0: i32) -> (i32, i32) {
    %c0_i32 = arith.constant 0 : i32
    %c0_i32_0 = arith.constant 0 : i32
    %c0_i32_1 = arith.constant 0 : i32
    return %c0_i32, %c0_i32_0 : i32, i32
  }
  func.func @transform_3(%arg0: i32) -> (i32, i32) {
    %c0_i32 = arith.constant 0 : i32
    %c0_i32_0 = arith.constant 0 : i32
    %c0_i32_1 = arith.constant 0 : i32
    return %c0_i32, %c0_i32_0 : i32, i32
  }
  func.func @transform_4(%arg0: i32) -> (i32, i32) {
    %c0_i32 = arith.constant 0 : i32
    %c0_i32_0 = arith.constant 0 : i32
    %c0_i32_1 = arith.constant 0 : i32
    return %c0_i32, %c0_i32_0 : i32, i32
  }
  func.func @transform_5(%arg0: i32) -> (i32, i32) {
    %c0_i32 = arith.constant 0 : i32
    %c0_i32_0 = arith.constant 0 : i32
    %c0_i32_1 = arith.constant 0 : i32
    return %c0_i32, %c0_i32_0 : i32, i32
  }
  func.func @transform_6(%arg0: i32) -> (i32, i32) {
    %c0_i32 = arith.constant 0 : i32
    %c0_i32_0 = arith.constant 0 : i32
    %c0_i32_1 = arith.constant 0 : i32
    return %c0_i32, %c0_i32_0 : i32, i32
  }
  func.func @transform_7(%arg0: i32) -> (i32, i32, i32) {
    %c0_i32 = arith.constant 0 : i32
    %c0_i32_0 = arith.constant 0 : i32
    %c0_i32_1 = arith.constant 0 : i32
    return %arg0, %c0_i32, %c0_i32_0 : i32, i32, i32
  }
}

</mosaic_0001>

<llo_original>
// kernel: tpu_custom_call.1
$region0: #{tpu_custom_call.1}
  #allocation0 [shape = 'u32[]', space=smem, size = 0x4, offset = 0x4, fixed_abs, tag = 'smem constant byte address 0x4 - core index']
  #allocation1 [shape = 'u32[72,128]{1,0:T(1,128)}', space=vmem, size = 0x9000, scoped, tag = 'internal scratch']
  #allocation2 [shape = 'f32[18,32,4]{2,1,0:T(8,128)}', space=vmem, size = 0x48000, scoped, tag = 'scratch operand']
  #allocation3 [shape = 'bf16[256,72]{1,0:T(8,128)(2,1)}', space=vmem, size = 0x10000, scoped, tag = 'scratch operand']
  #allocation4 [shape = 'bf16[256,36]{1,0:T(8,128)(2,1)}', space=vmem, size = 0x10000, scoped, tag = 'scratch operand']
  %s0 = inlined_call_operand.vmem [shape: bf16[2,18,18,8], index: 0, kind: input, shape index: {}]
  %s1 = inlined_call_operand.vmem [shape: bf16[72,4], index: 1, kind: input, shape index: {}]
  %s2 = inlined_call_operand.vmem [shape: f32[1,4], index: 2, kind: input, shape index: {}]
  %s3 = inlined_call_operand.vmem [shape: f32[1,4], index: 3, kind: input, shape index: {}]
  %s4 = inlined_call_operand.vmem [shape: bf16[36,4], index: 4, kind: input, shape index: {}]
  %s5 = inlined_call_operand.vmem [shape: f32[4,1], index: 5, kind: input, shape index: {}]
  %s6 = inlined_call_operand.vmem [shape: f32[4,1], index: 6, kind: input, shape index: {}]
  %s7 = inlined_call_operand.hbm [shape: f32[2,4,256], index: 7, kind: output, shape index: {}]
  %s8 = sld [smem:[#allocation0]]
  $region61: #{tpu_custom_call.1} parent=0
    _
  %s10 = ssub.s32 1, %s8
  %s11 = scalar_select 0, %s10, %s8
  $region1: #{tpu_custom_call.1} parent=0
    #allocation5 [shape = 'u8[8192]{0}', space=vmem, size = 0x2000, scoped, tag = 'output window, operand 0']
    #allocation6 [shape = 's32[2]{0}', space=sflag, size = 0x8, scoped, tag = 'scoped memory for tpu_custom_call.1']
    %12 = vsyncpa [#allocation6], 0
    %s13 = scalar_lea.sflag [#allocation6], 1
    %14 = vsyncpa %s13, 0
    loop: start=0, step=1, limit=4
    $region2: #{tpu_custom_call.1} parent=1 // loop_pre_header
      _
    $region3: #{tpu_custom_call.1} parent=1 // loop_header
      %s16 = sphi 0, %s20
      %p17 = scmp.ge.s32.totalorder %s16, 4
      %s26 = sphi 0, %s28
      %s29 = sphi 0, %s26
      %s30 = sphi 0, %s29
      %s46 = sphi 0, %s30
      %s50 = sphi 0, %s50
      %s52 = sphi 0, %s50
      %s53 = sphi 0, %s52
      %s67 = sphi 0, %s53
      %s71 = sphi 0, %s71
      %s73 = sphi 0, %s71
      %s74 = sphi 0, %s73
      %s88 = sphi 0, %s74
      %s92 = sphi 0, %s92
      %s94 = sphi 0, %s92
      %s95 = sphi 0, %s94
      %s109 = sphi 0, %s95
      %s113 = sphi 0, %s113
      %s115 = sphi 0, %s113
      %s116 = sphi 0, %s115
      %s130 = sphi 0, %s116
      %s134 = sphi 0, %s134
      %s136 = sphi 0, %s134
      %s137 = sphi 0, %s136
      %s151 = sphi 0, %s137
      %s155 = sphi 0, %s155
      %s157 = sphi 0, %s155
      %s158 = sphi 0, %s157
      %s172 = sphi 0, %s158
      %s178 = sphi 0, %s180
      %s181 = sphi 0, %s178
      %s182 = sphi 0, %s181
      %s198 = sphi 0, %s182
    $region4: #{tpu_custom_call.1} parent=1 // loop_header_branch
      %19 = sbr.rel (%p17) target = $region8
    $region5: #{tpu_custom_call.1} parent=1 // loop_body
      %s21 = ssub.s32 %s16, 1
      %s22 = ssub.s32 %s16, 2
      %s23 = sadd.s32 %s16, 1
      %s24 = ssub.s32 %s16, %s23
      %p25 = scmp.eq.s32.totalorder %s24, 0
      %s27 = sadd.s32 %s26, 1
      %s28 = scalar_select %p25, %s26, %s27
      %p31 = pneg %p25
      %p32 = scmp.eq.s32.totalorder %s16, 1
      %p33 = por %p31, %p32
      %p34 = scmp.ne.s32.totalorder %s26, %s29
      %p35 = scmp.eq.s32.totalorder %s16, 0
      %p36 = por %p34, %p35
      %p37 = scmp.ne.s32.totalorder %s26, %s29
      %p38 = scmp.eq.s32.totalorder %s21, 1
      %p39 = por %p37, %p38
      %p40 = scmp.ne.s32.totalorder %s29, %s30
      %p41 = scmp.eq.s32.totalorder %s21, 0
      %p42 = por %p40, %p41
      %p43 = scmp.ne.s32.totalorder %s29, %s30
      %p44 = scmp.eq.s32.totalorder %s22, 1
      %p45 = por %p43, %p44
      %p47 = scmp.ne.s32.totalorder %s30, %s46
      %p48 = scmp.eq.s32.totalorder %s22, 0
      %p49 = por %p47, %p48
      %s51 = sadd.s32 %s50, 1
      %p54 = scmp.eq.s32.totalorder %s16, 1
      %p55 = scmp.ne.s32.totalorder %s50, %s52
      %p56 = scmp.eq.s32.totalorder %s16, 0
      %p57 = por %p55, %p56
      %p58 = scmp.ne.s32.totalorder %s50, %s52
      %p59 = scmp.eq.s32.totalorder %s21, 1
      %p60 = por %p58, %p59
      %p61 = scmp.ne.s32.totalorder %s52, %s53
      %p62 = scmp.eq.s32.totalorder %s21, 0
      %p63 = por %p61, %p62
      %p64 = scmp.ne.s32.totalorder %s52, %s53
      %p65 = scmp.eq.s32.totalorder %s22, 1
      %p66 = por %p64, %p65
      %p68 = scmp.ne.s32.totalorder %s53, %s67
      %p69 = scmp.eq.s32.totalorder %s22, 0
      %p70 = por %p68, %p69
      %s72 = sadd.s32 %s71, 1
      %p75 = scmp.eq.s32.totalorder %s16, 1
      %p76 = scmp.ne.s32.totalorder %s71, %s73
      %p77 = scmp.eq.s32.totalorder %s16, 0
      %p78 = por %p76, %p77
      %p79 = scmp.ne.s32.totalorder %s71, %s73
      %p80 = scmp.eq.s32.totalorder %s21, 1
      %p81 = por %p79, %p80
      %p82 = scmp.ne.s32.totalorder %s73, %s74
      %p83 = scmp.eq.s32.totalorder %s21, 0
      %p84 = por %p82, %p83
      %p85 = scmp.ne.s32.totalorder %s73, %s74
      %p86 = scmp.eq.s32.totalorder %s22, 1
      %p87 = por %p85, %p86
      %p89 = scmp.ne.s32.totalorder %s74, %s88
      %p90 = scmp.eq.s32.totalorder %s22, 0
      %p91 = por %p89, %p90
      %s93 = sadd.s32 %s92, 1
      %p96 = scmp.eq.s32.totalorder %s16, 1
      %p97 = scmp.ne.s32.totalorder %s92, %s94
      %p98 = scmp.eq.s32.totalorder %s16, 0
      %p99 = por %p97, %p98
      %p100 = scmp.ne.s32.totalorder %s92, %s94
      %p101 = scmp.eq.s32.totalorder %s21, 1
      %p102 = por %p100, %p101
      %p103 = scmp.ne.s32.totalorder %s94, %s95
      %p104 = scmp.eq.s32.totalorder %s21, 0
      %p105 = por %p103, %p104
      %p106 = scmp.ne.s32.totalorder %s94, %s95
      %p107 = scmp.eq.s32.totalorder %s22, 1
      %p108 = por %p106, %p107
      %p110 = scmp.ne.s32.totalorder %s95, %s109
      %p111 = scmp.eq.s32.totalorder %s22, 0
      %p112 = por %p110, %p111
      %s114 = sadd.s32 %s113, 1
      %p117 = scmp.eq.s32.totalorder %s16, 1
      %p118 = scmp.ne.s32.totalorder %s113, %s115
      %p119 = scmp.eq.s32.totalorder %s16, 0
      %p120 = por %p118, %p119
      %p121 = scmp.ne.s32.totalorder %s113, %s115
      %p122 = scmp.eq.s32.totalorder %s21, 1
      %p123 = por %p121, %p122
      %p124 = scmp.ne.s32.totalorder %s115, %s116
      %p125 = scmp.eq.s32.totalorder %s21, 0
      %p126 = por %p124, %p125
      %p127 = scmp.ne.s32.totalorder %s115, %s116
      %p128 = scmp.eq.s32.totalorder %s22, 1
      %p129 = por %p127, %p128
      %p131 = scmp.ne.s32.totalorder %s116, %s130
      %p132 = scmp.eq.s32.totalorder %s22, 0
      %p133 = por %p131, %p132
      %s135 = sadd.s32 %s134, 1
      %p138 = scmp.eq.s32.totalorder %s16, 1
      %p139 = scmp.ne.s32.totalorder %s134, %s136
      %p140 = scmp.eq.s32.totalorder %s16, 0
      %p141 = por %p139, %p140
      %p142 = scmp.ne.s32.totalorder %s134, %s136
      %p143 = scmp.eq.s32.totalorder %s21, 1
      %p144 = por %p142, %p143
      %p145 = scmp.ne.s32.totalorder %s136, %s137
      %p146 = scmp.eq.s32.totalorder %s21, 0
      %p147 = por %p145, %p146
      %p148 = scmp.ne.s32.totalorder %s136, %s137
      %p149 = scmp.eq.s32.totalorder %s22, 1
      %p150 = por %p148, %p149
      %p152 = scmp.ne.s32.totalorder %s137, %s151
      %p153 = scmp.eq.s32.totalorder %s22, 0
      %p154 = por %p152, %p153
      %s156 = sadd.s32 %s155, 1
      %p159 = scmp.eq.s32.totalorder %s16, 1
      %p160 = scmp.ne.s32.totalorder %s155, %s157
      %p161 = scmp.eq.s32.totalorder %s16, 0
      %p162 = por %p160, %p161
      %p163 = scmp.ne.s32.totalorder %s155, %s157
      %p164 = scmp.eq.s32.totalorder %s21, 1
      %p165 = por %p163, %p164
      %p166 = scmp.ne.s32.totalorder %s157, %s158
      %p167 = scmp.eq.s32.totalorder %s21, 0
      %p168 = por %p166, %p167
      %p169 = scmp.ne.s32.totalorder %s157, %s158
      %p170 = scmp.eq.s32.totalorder %s22, 1
      %p171 = por %p169, %p170
      %p173 = scmp.ne.s32.totalorder %s158, %s172
      %p174 = scmp.eq.s32.totalorder %s22, 0
      %p175 = por %p173, %p174
      %s176 = ssub.s32 %s16, %s23
      %p177 = scmp.eq.s32.totalorder %s176, 0
      %s179 = sadd.s32 %s178, 1
      %s180 = scalar_select %p177, %s178, %s179
      %p183 = pneg %p177
      %p184 = scmp.eq.s32.totalorder %s16, 1
      %p185 = por %p183, %p184
      %p186 = scmp.ne.s32.totalorder %s178, %s181
      %p187 = scmp.eq.s32.totalorder %s16, 0
      %p188 = por %p186, %p187
      %p189 = scmp.ne.s32.totalorder %s178, %s181
      %p190 = scmp.eq.s32.totalorder %s21, 1
      %p191 = por %p189, %p190
      %p192 = scmp.ne.s32.totalorder %s181, %s182
      %p193 = scmp.eq.s32.totalorder %s21, 0
      %p194 = por %p192, %p193
      %p195 = scmp.ne.s32.totalorder %s181, %s182
      %p196 = scmp.eq.s32.totalorder %s22, 1
      %p197 = por %p195, %p196
      %p199 = scmp.ne.s32.totalorder %s182, %s198
      %p200 = scmp.eq.s32.totalorder %s22, 0
      %p201 = por %p199, %p200
      %p202 = scmp.le.s32.totalorder 1, %s16
      %p203 = scmp.lt.s32.totalorder %s16, 3
      %p204 = pnand %p202, %p203
      %p205 = pneg %p204
      // Predicated region
      $region9: #{tpu_custom_call.1} parent=5 // pred_check
        _
      $region10: #{tpu_custom_call.1} parent=5 // pred_check_branch
        %207 = sbr.rel (%p204) target = $region12
      $region11: #{tpu_custom_call.1} parent=5 // pred_region
        %s208 = ssub.s32 %s16, 1
        // Predicated region
        $region13: #{tpu_custom_call.1} parent=11 // pred_check
          %p209 = pneg %p63
        $region14: #{tpu_custom_call.1} parent=11 // pred_check_branch
          %211 = sbr.rel (%p209) target = $region16
        $region15: #{tpu_custom_call.1} parent=11 // pred_region
          _
        $region16: #{tpu_custom_call.1} parent=11 // pred_fallthru
          _
        // Predicated region
        $region17: #{tpu_custom_call.1} parent=11 // pred_check
          %p212 = pneg %p84
        $region18: #{tpu_custom_call.1} parent=11 // pred_check_branch
          %214 = sbr.rel (%p212) target = $region20
        $region19: #{tpu_custom_call.1} parent=11 // pred_region
          _
        $region20: #{tpu_custom_call.1} parent=11 // pred_fallthru
          _
        // Predicated region
        $region21: #{tpu_custom_call.1} parent=11 // pred_check
          %p215 = pneg %p105
        $region22: #{tpu_custom_call.1} parent=11 // pred_check_branch
          %217 = sbr.rel (%p215) target = $region24
        $region23: #{tpu_custom_call.1} parent=11 // pred_region
          _
        $region24: #{tpu_custom_call.1} parent=11 // pred_fallthru
          _
        // Predicated region
        $region25: #{tpu_custom_call.1} parent=11 // pred_check
          %p218 = pneg %p126
        $region26: #{tpu_custom_call.1} parent=11 // pred_check_branch
          %220 = sbr.rel (%p218) target = $region28
        $region27: #{tpu_custom_call.1} parent=11 // pred_region
          _
        $region28: #{tpu_custom_call.1} parent=11 // pred_fallthru
          _
        // Predicated region
        $region29: #{tpu_custom_call.1} parent=11 // pred_check
          %p221 = pneg %p147
        $region30: #{tpu_custom_call.1} parent=11 // pred_check_branch
          %223 = sbr.rel (%p221) target = $region32
        $region31: #{tpu_custom_call.1} parent=11 // pred_region
          _
        $region32: #{tpu_custom_call.1} parent=11 // pred_fallthru
          _
        // Predicated region
        $region33: #{tpu_custom_call.1} parent=11 // pred_check
          %p224 = pneg %p168
        $region34: #{tpu_custom_call.1} parent=11 // pred_check_branch
          %226 = sbr.rel (%p224) target = $region36
        $region35: #{tpu_custom_call.1} parent=11 // pred_region
          _
        $region36: #{tpu_custom_call.1} parent=11 // pred_fallthru
          _
      $region12: #{tpu_custom_call.1} parent=5 // pred_fallthru
        _
      %p227 = scmp.lt.s32.totalorder %s16, 2
      // Predicated region
      $region37: #{tpu_custom_call.1} parent=5 // pred_check
        %p228 = pneg %p227
      $region38: #{tpu_custom_call.1} parent=5 // pred_check_branch
        %230 = sbr.rel (%p228) target = $region40
      $region39: #{tpu_custom_call.1} parent=5 // pred_region
        // Predicated region
        $region41: #{tpu_custom_call.1} parent=39 // pred_check
          %p231 = pneg %p36
        $region42: #{tpu_custom_call.1} parent=39 // pred_check_branch
          %233 = sbr.rel (%p231) target = $region44
        $region43: #{tpu_custom_call.1} parent=39 // pred_region
          %p234 = scmp.lt.s32.totalorder %s16, 1
          %s235 = scalar_select %p234, %s16, 1
          %s236 = smul.addr %s235, 54
          %s237 = smul.addr %s236, 4
          %s238 = scalar_lea.vmem %s0, %s237
        $region44: #{tpu_custom_call.1} parent=39 // pred_fallthru
          _
      $region40: #{tpu_custom_call.1} parent=5 // pred_fallthru
        _
      %p239 = scmp.le.s32.totalorder 1, %s16
      %p240 = scmp.lt.s32.totalorder %s16, 3
      %p241 = pnand %p239, %p240
      %p242 = pneg %p241
      // Predicated region
      $region45: #{tpu_custom_call.1} parent=5 // pred_check
        _
      $region46: #{tpu_custom_call.1} parent=5 // pred_check_branch
        %244 = sbr.rel (%p241) target = $region48
      $region47: #{tpu_custom_call.1} parent=5 // pred_region
        %s245 = ssub.s32 %s16, 1
        %p246 = scmp.lt.s32.totalorder %s21, 1
        %s247 = scalar_select %p246, %s21, 1
        %s248 = smul.addr %s247, 54
        %s249 = smul.addr %s248, 4
        %s250 = scalar_lea.vmem %s0, %s249
        %p251 = pneg %p42
        %p252 = pneg %p39
        %p253 = pneg %p63
        %p254 = pneg %p60
        %p255 = pneg %p84
        %p256 = pneg %p81
        %p257 = pneg %p105
        %p258 = pneg %p102
        %p259 = pneg %p126
        %p260 = pneg %p123
        %p261 = pneg %p147
        %p262 = pneg %p144
        %p263 = pneg %p168
        %p264 = pneg %p165
        %p265 = pneg %p194
        %p266 = pneg %p191
        %s267 = sand.u32 %s181, 1
        %s268 = scalar_lea.sflag [#allocation6], %s267
        %s269 = sand.u32 %s181, 1
        %s270 = smul.addr %s269, 8
        %s271 = scalar_lea.vmem [#allocation5], %s270
        %p272 = scmp.lt.s32.totalorder %s21, 1
        %s273 = scalar_select %p272, %s21, 1
        %s274 = smul.addr %s273, 54
        %s275 = smul.addr %s274, 4
        %s276 = scalar_lea.vmem %s0, %s275
        %v277 = vld [vmem:[%s276] sm:$0xf]
        %v278 = vld [vmem:[%s276 + $0x4] sm:$0xf]
        %v279 = vld [vmem:[%s276 + $0xc] sm:$0xf]
        %v280 = vld [vmem:[%s276 + $0x10] sm:$0xf]
        %v281 = vld [vmem:[%s276 + $0x18] sm:$0xf]
        %v282 = vld [vmem:[%s276 + $0x1c] sm:$0xf]
        %v283 = vld [vmem:[%s276 + $0x24] sm:$0xf]
        %v284 = vld [vmem:[%s276 + $0x28] sm:$0xf]
        %v285 = vld [vmem:[%s276 + $0x30] sm:$0xf]
        %v286 = vld [vmem:[%s276 + $0x34] sm:$0xf]
        %v287 = vld [vmem:[%s276 + $0x3c] sm:$0xf]
        %v288 = vld [vmem:[%s276 + $0x40] sm:$0xf]
        %v289 = vld [vmem:[%s276 + $0x48] sm:$0xf]
        %v290 = vld [vmem:[%s276 + $0x4c] sm:$0xf]
        %v291 = vld [vmem:[%s276 + $0x54] sm:$0xf]
        %v292 = vld [vmem:[%s276 + $0x58] sm:$0xf]
        %v293 = vld [vmem:[%s276 + $0x60] sm:$0xf]
        %v294 = vld [vmem:[%s276 + $0x64] sm:$0xf]
        %v295 = vld [vmem:[%s276 + $0x6c] sm:$0xf]
        %v296 = vld [vmem:[%s276 + $0x70] sm:$0xf]
        %v297 = vld [vmem:[%s276 + $0x78] sm:$0xf]
        %v298 = vld [vmem:[%s276 + $0x7c] sm:$0xf]
        %v299 = vld [vmem:[%s276 + $0x84] sm:$0xf]
        %v300 = vld [vmem:[%s276 + $0x88] sm:$0xf]
        %v301 = vld [vmem:[%s276 + $0x90] sm:$0xf]
        %v302 = vld [vmem:[%s276 + $0x94] sm:$0xf]
        %v303 = vld [vmem:[%s276 + $0x9c] sm:$0xf]
        %v304 = vld [vmem:[%s276 + $0xa0] sm:$0xf]
        %v305 = vld [vmem:[%s276 + $0xa8] sm:$0xf]
        %v306 = vld [vmem:[%s276 + $0xac] sm:$0xf]
        %v307 = vld [vmem:[%s276 + $0xb4] sm:$0xf]
        %v308 = vld [vmem:[%s276 + $0xb8] sm:$0xf]
        %vm309 = vcmask 60416
        %310 = vst.msk [vmem:[#allocation3] sm:$0xf] %vm309, %v277
        %311 = vst.msk [vmem:[#allocation3 + $0x4] sm:$0xf] %vm309, %v278
        %312 = vst.msk [vmem:[#allocation3 + $0x8] sm:$0xf] %vm309, %v279
        %313 = vst.msk [vmem:[#allocation3 + $0xc] sm:$0xf] %vm309, %v280
        %314 = vst.msk [vmem:[#allocation3 + $0x10] sm:$0xf] %vm309, %v281
        %315 = vst.msk [vmem:[#allocation3 + $0x14] sm:$0xf] %vm309, %v282
        %316 = vst.msk [vmem:[#allocation3 + $0x18] sm:$0xf] %vm309, %v283
        %317 = vst.msk [vmem:[#allocation3 + $0x1c] sm:$0xf] %vm309, %v284
        %318 = vst.msk [vmem:[#allocation3 + $0x20] sm:$0xf] %vm309, %v285
        %319 = vst.msk [vmem:[#allocation3 + $0x24] sm:$0xf] %vm309, %v286
        %320 = vst.msk [vmem:[#allocation3 + $0x28] sm:$0xf] %vm309, %v287
        %321 = vst.msk [vmem:[#allocation3 + $0x2c] sm:$0xf] %vm309, %v288
        %322 = vst.msk [vmem:[#allocation3 + $0x30] sm:$0xf] %vm309, %v289
        %323 = vst.msk [vmem:[#allocation3 + $0x34] sm:$0xf] %vm309, %v290
        %324 = vst.msk [vmem:[#allocation3 + $0x38] sm:$0xf] %vm309, %v291
        %325 = vst.msk [vmem:[#allocation3 + $0x3c] sm:$0xf] %vm309, %v292
        %326 = vst.msk [vmem:[#allocation3 + $0x40] sm:$0xf] %vm309, %v293
        %327 = vst.msk [vmem:[#allocation3 + $0x44] sm:$0xf] %vm309, %v294
        %328 = vst.msk [vmem:[#allocation3 + $0x48] sm:$0xf] %vm309, %v295
        %329 = vst.msk [vmem:[#allocation3 + $0x4c] sm:$0xf] %vm309, %v296
        %330 = vst.msk [vmem:[#allocation3 + $0x50] sm:$0xf] %vm309, %v297
        %331 = vst.msk [vmem:[#allocation3 + $0x54] sm:$0xf] %vm309, %v298
        %332 = vst.msk [vmem:[#allocation3 + $0x58] sm:$0xf] %vm309, %v299
        %333 = vst.msk [vmem:[#allocation3 + $0x5c] sm:$0xf] %vm309, %v300
        %334 = vst.msk [vmem:[#allocation3 + $0x60] sm:$0xf] %vm309, %v301
        %335 = vst.msk [vmem:[#allocation3 + $0x64] sm:$0xf] %vm309, %v302
        %336 = vst.msk [vmem:[#allocation3 + $0x68] sm:$0xf] %vm309, %v303
        %337 = vst.msk [vmem:[#allocation3 + $0x6c] sm:$0xf] %vm309, %v304
        %338 = vst.msk [vmem:[#allocation3 + $0x70] sm:$0xf] %vm309, %v305
        %339 = vst.msk [vmem:[#allocation3 + $0x74] sm:$0xf] %vm309, %v306
        %340 = vst.msk [vmem:[#allocation3 + $0x78] sm:$0xf] %vm309, %v307
        %341 = vst.msk [vmem:[#allocation3 + $0x7c] sm:$0xf] %vm309, %v308
        %v342 = vld [vmem:[%s276] sm:$0xf]
        %v343 = vld [vmem:[%s276 + $0x4] sm:$0xf]
        %v344 = vld [vmem:[%s276 + $0x8] sm:$0x1]
        %v345 = vld [vmem:[%s276 + $0xc] sm:$0xf]
        %v346 = vld [vmem:[%s276 + $0x10] sm:$0xf]
        %v347 = vld [vmem:[%s276 + $0x14] sm:$0x1]
        %v348 = vld [vmem:[%s276 + $0x18] sm:$0xf]
        %v349 = vld [vmem:[%s276 + $0x1c] sm:$0xf]
        %v350 = vld [vmem:[%s276 + $0x20] sm:$0x1]
        %v351 = vld [vmem:[%s276 + $0x24] sm:$0xf]
        %v352 = vld [vmem:[%s276 + $0x28] sm:$0xf]
        %v353 = vld [vmem:[%s276 + $0x2c] sm:$0x1]
        %v354 = vld [vmem:[%s276 + $0x30] sm:$0xf]
        %v355 = vld [vmem:[%s276 + $0x34] sm:$0xf]
        %v356 = vld [vmem:[%s276 + $0x38] sm:$0x1]
        %v357 = vld [vmem:[%s276 + $0x3c] sm:$0xf]
        %v358 = vld [vmem:[%s276 + $0x40] sm:$0xf]
        %v359 = vld [vmem:[%s276 + $0x44] sm:$0x1]
        %v360 = vld [vmem:[%s276 + $0x48] sm:$0xf]
        %v361 = vld [vmem:[%s276 + $0x4c] sm:$0xf]
        %v362 = vld [vmem:[%s276 + $0x50] sm:$0x1]
        %v363 = vld [vmem:[%s276 + $0x54] sm:$0xf]
        %v364 = vld [vmem:[%s276 + $0x58] sm:$0xf]
        %v365 = vld [vmem:[%s276 + $0x5c] sm:$0x1]
        %v366 = vld [vmem:[%s276 + $0x60] sm:$0xf]
        %v367 = vld [vmem:[%s276 + $0x64] sm:$0xf]
        %v368 = vld [vmem:[%s276 + $0x68] sm:$0x1]
        %v369 = vld [vmem:[%s276 + $0x6c] sm:$0xf]
        %v370 = vld [vmem:[%s276 + $0x70] sm:$0xf]
        %v371 = vld [vmem:[%s276 + $0x74] sm:$0x1]
        %v372 = vld [vmem:[%s276 + $0x78] sm:$0xf]
        %v373 = vld [vmem:[%s276 + $0x7c] sm:$0xf]
        %v374 = vld [vmem:[%s276 + $0x80] sm:$0x1]
        %v375 = vld [vmem:[%s276 + $0x84] sm:$0xf]
        %v376 = vld [vmem:[%s276 + $0x88] sm:$0xf]
        %v377 = vld [vmem:[%s276 + $0x8c] sm:$0x1]
        %v378 = vld [vmem:[%s276 + $0x90] sm:$0xf]
        %v379 = vld [vmem:[%s276 + $0x94] sm:$0xf]
        %v380 = vld [vmem:[%s276 + $0x98] sm:$0x1]
        %v381 = vld [vmem:[%s276 + $0x9c] sm:$0xf]
        %v382 = vld [vmem:[%s276 + $0xa0] sm:$0xf]
        %v383 = vld [vmem:[%s276 + $0xa4] sm:$0x1]
        %v384 = vld [vmem:[%s276 + $0xa8] sm:$0xf]
        %v385 = vld [vmem:[%s276 + $0xac] sm:$0xf]
        %v386 = vld [vmem:[%s276 + $0xb0] sm:$0x1]
        %v387 = vld [vmem:[%s276 + $0xb4] sm:$0xf]
        %v388 = vld [vmem:[%s276 + $0xb8] sm:$0xf]
        %v389 = vld [vmem:[%s276 + $0xbc] sm:$0x1]
        %vm390 = vsmask.f32 3328
        %vm391 = vsmask.f32 7440
        %vm392 = vmor %vm390, %vm391
        %v394 = vshrl.u32 %v342, 16
        %v396 = vrot.slane %v394, 4
        %v397 = vshll.u32 %v342, 16
        %v399 = vrot.slane %v397, 5
        %v400 = vor.u32 %v396, %v399
        %v401 = vrot.slane %v400, 4
        %v403 = vshll.u32 %v343, 16
        %v405 = vrot.slane %v403, 5
        %v406 = vsel %vm392, %v401, %v405
        %v407 = vshrl.u32 %v343, 16
        %v409 = vrot.slane %v407, 4
        %v410 = vor.u32 %v409, %v405
        %v411 = vrot.slane %v410, 4
        %v413 = vshll.u32 %v344, 16
        %v415 = vrot.slane %v413, 5
        %v416 = vsel %vm392, %v411, %v415
        %v418 = vshrl.u32 %v345, 16
        %v420 = vrot.slane %v418, 4
        %v421 = vshll.u32 %v345, 16
        %v423 = vrot.slane %v421, 5
        %v424 = vor.u32 %v420, %v423
        %v425 = vrot.slane %v424, 4
        %v427 = vshll.u32 %v346, 16
        %v429 = vrot.slane %v427, 5
        %v430 = vsel %vm392, %v425, %v429
        %v431 = vshrl.u32 %v346, 16
        %v433 = vrot.slane %v431, 4
        %v434 = vor.u32 %v433, %v429
        %v435 = vrot.slane %v434, 4
        %v437 = vshll.u32 %v347, 16
        %v439 = vrot.slane %v437, 5
        %v440 = vsel %vm392, %v435, %v439
        %v442 = vshrl.u32 %v348, 16
        %v444 = vrot.slane %v442, 4
        %v445 = vshll.u32 %v348, 16
        %v447 = vrot.slane %v445, 5
        %v448 = vor.u32 %v444, %v447
        %v449 = vrot.slane %v448, 4
        %v451 = vshll.u32 %v349, 16
        %v453 = vrot.slane %v451, 5
        %v454 = vsel %vm392, %v449, %v453
        %v455 = vshrl.u32 %v349, 16
        %v457 = vrot.slane %v455, 4
        %v458 = vor.u32 %v457, %v453
        %v459 = vrot.slane %v458, 4
        %v461 = vshll.u32 %v350, 16
        %v463 = vrot.slane %v461, 5
        %v464 = vsel %vm392, %v459, %v463
        %v466 = vshrl.u32 %v351, 16
        %v468 = vrot.slane %v466, 4
        %v469 = vshll.u32 %v351, 16
        %v471 = vrot.slane %v469, 5
        %v472 = vor.u32 %v468, %v471
        %v473 = vrot.slane %v472, 4
        %v475 = vshll.u32 %v352, 16
        %v477 = vrot.slane %v475, 5
        %v478 = vsel %vm392, %v473, %v477
        %v479 = vshrl.u32 %v352, 16
        %v481 = vrot.slane %v479, 4
        %v482 = vor.u32 %v481, %v477
        %v483 = vrot.slane %v482, 4
        %v485 = vshll.u32 %v353, 16
        %v487 = vrot.slane %v485, 5
        %v488 = vsel %vm392, %v483, %v487
        %v490 = vshrl.u32 %v354, 16
        %v492 = vrot.slane %v490, 4
        %v493 = vshll.u32 %v354, 16
        %v495 = vrot.slane %v493, 5
        %v496 = vor.u32 %v492, %v495
        %v497 = vrot.slane %v496, 4
        %v499 = vshll.u32 %v355, 16
        %v501 = vrot.slane %v499, 5
        %v502 = vsel %vm392, %v497, %v501
        %v503 = vshrl.u32 %v355, 16
        %v505 = vrot.slane %v503, 4
        %v506 = vor.u32 %v505, %v501
        %v507 = vrot.slane %v506, 4
        %v509 = vshll.u32 %v356, 16
        %v511 = vrot.slane %v509, 5
        %v512 = vsel %vm392, %v507, %v511
        %v514 = vshrl.u32 %v357, 16
        %v516 = vrot.slane %v514, 4
        %v517 = vshll.u32 %v357, 16
        %v519 = vrot.slane %v517, 5
        %v520 = vor.u32 %v516, %v519
        %v521 = vrot.slane %v520, 4
        %v523 = vshll.u32 %v358, 16
        %v525 = vrot.slane %v523, 5
        %v526 = vsel %vm392, %v521, %v525
        %v527 = vshrl.u32 %v358, 16
        %v529 = vrot.slane %v527, 4
        %v530 = vor.u32 %v529, %v525
        %v531 = vrot.slane %v530, 4
        %v533 = vshll.u32 %v359, 16
        %v535 = vrot.slane %v533, 5
        %v536 = vsel %vm392, %v531, %v535
        %v538 = vshrl.u32 %v360, 16
        %v540 = vrot.slane %v538, 4
        %v541 = vshll.u32 %v360, 16
        %v543 = vrot.slane %v541, 5
        %v544 = vor.u32 %v540, %v543
        %v545 = vrot.slane %v544, 4
        %v547 = vshll.u32 %v361, 16
        %v549 = vrot.slane %v547, 5
        %v550 = vsel %vm392, %v545, %v549
        %v551 = vshrl.u32 %v361, 16
        %v553 = vrot.slane %v551, 4
        %v554 = vor.u32 %v553, %v549
        %v555 = vrot.slane %v554, 4
        %v557 = vshll.u32 %v362, 16
        %v559 = vrot.slane %v557, 5
        %v560 = vsel %vm392, %v555, %v559
        %v562 = vshrl.u32 %v363, 16
        %v564 = vrot.slane %v562, 4
        %v565 = vshll.u32 %v363, 16
        %v567 = vrot.slane %v565, 5
        %v568 = vor.u32 %v564, %v567
        %v569 = vrot.slane %v568, 4
        %v571 = vshll.u32 %v364, 16
        %v573 = vrot.slane %v571, 5
        %v574 = vsel %vm392, %v569, %v573
        %v575 = vshrl.u32 %v364, 16
        %v577 = vrot.slane %v575, 4
        %v578 = vor.u32 %v577, %v573
        %v579 = vrot.slane %v578, 4
        %v581 = vshll.u32 %v365, 16
        %v583 = vrot.slane %v581, 5
        %v584 = vsel %vm392, %v579, %v583
        %v586 = vshrl.u32 %v366, 16
        %v588 = vrot.slane %v586, 4
        %v589 = vshll.u32 %v366, 16
        %v591 = vrot.slane %v589, 5
        %v592 = vor.u32 %v588, %v591
        %v593 = vrot.slane %v592, 4
        %v595 = vshll.u32 %v367, 16
        %v597 = vrot.slane %v595, 5
        %v598 = vsel %vm392, %v593, %v597
        %v599 = vshrl.u32 %v367, 16
        %v601 = vrot.slane %v599, 4
        %v602 = vor.u32 %v601, %v597
        %v603 = vrot.slane %v602, 4
        %v605 = vshll.u32 %v368, 16
        %v607 = vrot.slane %v605, 5
        %v608 = vsel %vm392, %v603, %v607
        %v610 = vshrl.u32 %v369, 16
        %v612 = vrot.slane %v610, 4
        %v613 = vshll.u32 %v369, 16
        %v615 = vrot.slane %v613, 5
        %v616 = vor.u32 %v612, %v615
        %v617 = vrot.slane %v616, 4
        %v619 = vshll.u32 %v370, 16
        %v621 = vrot.slane %v619, 5
        %v622 = vsel %vm392, %v617, %v621
        %v623 = vshrl.u32 %v370, 16
        %v625 = vrot.slane %v623, 4
        %v626 = vor.u32 %v625, %v621
        %v627 = vrot.slane %v626, 4
        %v629 = vshll.u32 %v371, 16
        %v631 = vrot.slane %v629, 5
        %v632 = vsel %vm392, %v627, %v631
        %v634 = vshrl.u32 %v372, 16
        %v636 = vrot.slane %v634, 4
        %v637 = vshll.u32 %v372, 16
        %v639 = vrot.slane %v637, 5
        %v640 = vor.u32 %v636, %v639
        %v641 = vrot.slane %v640, 4
        %v643 = vshll.u32 %v373, 16
        %v645 = vrot.slane %v643, 5
        %v646 = vsel %vm392, %v641, %v645
        %v647 = vshrl.u32 %v373, 16
        %v649 = vrot.slane %v647, 4
        %v650 = vor.u32 %v649, %v645
        %v651 = vrot.slane %v650, 4
        %v653 = vshll.u32 %v374, 16
        %v655 = vrot.slane %v653, 5
        %v656 = vsel %vm392, %v651, %v655
        %v658 = vshrl.u32 %v375, 16
        %v660 = vrot.slane %v658, 4
        %v661 = vshll.u32 %v375, 16
        %v663 = vrot.slane %v661, 5
        %v664 = vor.u32 %v660, %v663
        %v665 = vrot.slane %v664, 4
        %v667 = vshll.u32 %v376, 16
        %v669 = vrot.slane %v667, 5
        %v670 = vsel %vm392, %v665, %v669
        %v671 = vshrl.u32 %v376, 16
        %v673 = vrot.slane %v671, 4
        %v674 = vor.u32 %v673, %v669
        %v675 = vrot.slane %v674, 4
        %v677 = vshll.u32 %v377, 16
        %v679 = vrot.slane %v677, 5
        %v680 = vsel %vm392, %v675, %v679
        %v682 = vshrl.u32 %v378, 16
        %v684 = vrot.slane %v682, 4
        %v685 = vshll.u32 %v378, 16
        %v687 = vrot.slane %v685, 5
        %v688 = vor.u32 %v684, %v687
        %v689 = vrot.slane %v688, 4
        %v691 = vshll.u32 %v379, 16
        %v693 = vrot.slane %v691, 5
        %v694 = vsel %vm392, %v689, %v693
        %v695 = vshrl.u32 %v379, 16
        %v697 = vrot.slane %v695, 4
        %v698 = vor.u32 %v697, %v693
        %v699 = vrot.slane %v698, 4
        %v701 = vshll.u32 %v380, 16
        %v703 = vrot.slane %v701, 5
        %v704 = vsel %vm392, %v699, %v703
        %v706 = vshrl.u32 %v381, 16
        %v708 = vrot.slane %v706, 4
        %v709 = vshll.u32 %v381, 16
        %v711 = vrot.slane %v709, 5
        %v712 = vor.u32 %v708, %v711
        %v713 = vrot.slane %v712, 4
        %v715 = vshll.u32 %v382, 16
        %v717 = vrot.slane %v715, 5
        %v718 = vsel %vm392, %v713, %v717
        %v719 = vshrl.u32 %v382, 16
        %v721 = vrot.slane %v719, 4
        %v722 = vor.u32 %v721, %v717
        %v723 = vrot.slane %v722, 4
        %v725 = vshll.u32 %v383, 16
        %v727 = vrot.slane %v725, 5
        %v728 = vsel %vm392, %v723, %v727
        %v730 = vshrl.u32 %v384, 16
        %v732 = vrot.slane %v730, 4
        %v733 = vshll.u32 %v384, 16
        %v735 = vrot.slane %v733, 5
        %v736 = vor.u32 %v732, %v735
        %v737 = vrot.slane %v736, 4
        %v739 = vshll.u32 %v385, 16
        %v741 = vrot.slane %v739, 5
        %v742 = vsel %vm392, %v737, %v741
        %v743 = vshrl.u32 %v385, 16
        %v745 = vrot.slane %v743, 4
        %v746 = vor.u32 %v745, %v741
        %v747 = vrot.slane %v746, 4
        %v749 = vshll.u32 %v386, 16
        %v751 = vrot.slane %v749, 5
        %v752 = vsel %vm392, %v747, %v751
        %v754 = vshrl.u32 %v387, 16
        %v756 = vrot.slane %v754, 4
        %v757 = vshll.u32 %v387, 16
        %v759 = vrot.slane %v757, 5
        %v760 = vor.u32 %v756, %v759
        %v761 = vrot.slane %v760, 4
        %v763 = vshll.u32 %v388, 16
        %v765 = vrot.slane %v763, 5
        %v766 = vsel %vm392, %v761, %v765
        %v767 = vshrl.u32 %v388, 16
        %v769 = vrot.slane %v767, 4
        %v770 = vor.u32 %v769, %v765
        %v771 = vrot.slane %v770, 4
        %v773 = vshll.u32 %v389, 16
        %v775 = vrot.slane %v773, 5
        %v776 = vsel %vm392, %v771, %v775
        %777 = vrot.lane.b32.xlu0 %v406, 8
        %v778 = vpop.permute.xlu0 %777
        %779 = vrot.lane.b32.xlu0 %v416, 8
        %v780 = vpop.permute.xlu0 %779
        %781 = vrot.lane.b32.xlu0 %v430, 8
        %v782 = vpop.permute.xlu0 %781
        %783 = vrot.lane.b32.xlu0 %v440, 8
        %v784 = vpop.permute.xlu0 %783
        %785 = vrot.lane.b32.xlu0 %v454, 8
        %v786 = vpop.permute.xlu0 %785
        %787 = vrot.lane.b32.xlu0 %v464, 8
        %v788 = vpop.permute.xlu0 %787
        %789 = vrot.lane.b32.xlu0 %v478, 8
        %v790 = vpop.permute.xlu0 %789
        %791 = vrot.lane.b32.xlu0 %v488, 8
        %v792 = vpop.permute.xlu0 %791
        %793 = vrot.lane.b32.xlu0 %v502, 8
        %v794 = vpop.permute.xlu0 %793
        %795 = vrot.lane.b32.xlu0 %v512, 8
        %v796 = vpop.permute.xlu0 %795
        %797 = vrot.lane.b32.xlu0 %v526, 8
        %v798 = vpop.permute.xlu0 %797
        %799 = vrot.lane.b32.xlu0 %v536, 8
        %v800 = vpop.permute.xlu0 %799
        %801 = vrot.lane.b32.xlu0 %v550, 8
        %v802 = vpop.permute.xlu0 %801
        %803 = vrot.lane.b32.xlu0 %v560, 8
        %v804 = vpop.permute.xlu0 %803
        %805 = vrot.lane.b32.xlu0 %v574, 8
        %v806 = vpop.permute.xlu0 %805
        %807 = vrot.lane.b32.xlu0 %v584, 8
        %v808 = vpop.permute.xlu0 %807
        %809 = vrot.lane.b32.xlu0 %v598, 8
        %v810 = vpop.permute.xlu0 %809
        %811 = vrot.lane.b32.xlu0 %v608, 8
        %v812 = vpop.permute.xlu0 %811
        %813 = vrot.lane.b32.xlu0 %v622, 8
        %v814 = vpop.permute.xlu0 %813
        %815 = vrot.lane.b32.xlu0 %v632, 8
        %v816 = vpop.permute.xlu0 %815
        %817 = vrot.lane.b32.xlu0 %v646, 8
        %v818 = vpop.permute.xlu0 %817
        %819 = vrot.lane.b32.xlu0 %v656, 8
        %v820 = vpop.permute.xlu0 %819
        %821 = vrot.lane.b32.xlu0 %v670, 8
        %v822 = vpop.permute.xlu0 %821
        %823 = vrot.lane.b32.xlu0 %v680, 8
        %v824 = vpop.permute.xlu0 %823
        %825 = vrot.lane.b32.xlu0 %v694, 8
        %v826 = vpop.permute.xlu0 %825
        %827 = vrot.lane.b32.xlu0 %v704, 8
        %v828 = vpop.permute.xlu0 %827
        %829 = vrot.lane.b32.xlu0 %v718, 8
        %v830 = vpop.permute.xlu0 %829
        %831 = vrot.lane.b32.xlu0 %v728, 8
        %v832 = vpop.permute.xlu0 %831
        %833 = vrot.lane.b32.xlu0 %v742, 8
        %v834 = vpop.permute.xlu0 %833
        %835 = vrot.lane.b32.xlu0 %v752, 8
        %v836 = vpop.permute.xlu0 %835
        %837 = vrot.lane.b32.xlu0 %v766, 8
        %v838 = vpop.permute.xlu0 %837
        %839 = vrot.lane.b32.xlu0 %v776, 8
        %v840 = vpop.permute.xlu0 %839
        %vm873 = vcmask 126016
        %874 = vst.msk [vmem:[#allocation3] sm:$0xf] %vm873, %v778
        %875 = vst.msk [vmem:[#allocation3 + $0x4] sm:$0xf] %vm873, %v780
        %876 = vst.msk [vmem:[#allocation3 + $0x8] sm:$0xf] %vm873, %v782
        %877 = vst.msk [vmem:[#allocation3 + $0xc] sm:$0xf] %vm873, %v784
        %878 = vst.msk [vmem:[#allocation3 + $0x10] sm:$0xf] %vm873, %v786
        %879 = vst.msk [vmem:[#allocation3 + $0x14] sm:$0xf] %vm873, %v788
        %880 = vst.msk [vmem:[#allocation3 + $0x18] sm:$0xf] %vm873, %v790
        %881 = vst.msk [vmem:[#allocation3 + $0x1c] sm:$0xf] %vm873, %v792
        %882 = vst.msk [vmem:[#allocation3 + $0x20] sm:$0xf] %vm873, %v794
        %883 = vst.msk [vmem:[#allocation3 + $0x24] sm:$0xf] %vm873, %v796
        %884 = vst.msk [vmem:[#allocation3 + $0x28] sm:$0xf] %vm873, %v798
        %885 = vst.msk [vmem:[#allocation3 + $0x2c] sm:$0xf] %vm873, %v800
        %886 = vst.msk [vmem:[#allocation3 + $0x30] sm:$0xf] %vm873, %v802
        %887 = vst.msk [vmem:[#allocation3 + $0x34] sm:$0xf] %vm873, %v804
        %888 = vst.msk [vmem:[#allocation3 + $0x38] sm:$0xf] %vm873, %v806
        %889 = vst.msk [vmem:[#allocation3 + $0x3c] sm:$0xf] %vm873, %v808
        %890 = vst.msk [vmem:[#allocation3 + $0x40] sm:$0xf] %vm873, %v810
        %891 = vst.msk [vmem:[#allocation3 + $0x44] sm:$0xf] %vm873, %v812
        %892 = vst.msk [vmem:[#allocation3 + $0x48] sm:$0xf] %vm873, %v814
        %893 = vst.msk [vmem:[#allocation3 + $0x4c] sm:$0xf] %vm873, %v816
        %894 = vst.msk [vmem:[#allocation3 + $0x50] sm:$0xf] %vm873, %v818
        %895 = vst.msk [vmem:[#allocation3 + $0x54] sm:$0xf] %vm873, %v820
        %896 = vst.msk [vmem:[#allocation3 + $0x58] sm:$0xf] %vm873, %v822
        %897 = vst.msk [vmem:[#allocation3 + $0x5c] sm:$0xf] %vm873, %v824
        %898 = vst.msk [vmem:[#allocation3 + $0x60] sm:$0xf] %vm873, %v826
        %899 = vst.msk [vmem:[#allocation3 + $0x64] sm:$0xf] %vm873, %v828
        %900 = vst.msk [vmem:[#allocation3 + $0x68] sm:$0xf] %vm873, %v830
        %901 = vst.msk [vmem:[#allocation3 + $0x6c] sm:$0xf] %vm873, %v832
        %902 = vst.msk [vmem:[#allocation3 + $0x70] sm:$0xf] %vm873, %v834
        %903 = vst.msk [vmem:[#allocation3 + $0x74] sm:$0xf] %vm873, %v836
        %904 = vst.msk [vmem:[#allocation3 + $0x78] sm:$0xf] %vm873, %v838
        %905 = vst.msk [vmem:[#allocation3 + $0x7c] sm:$0xf] %vm873, %v840
        %v906 = vld [vmem:[%s276] sm:$0xe]
        %v907 = vld [vmem:[%s276 + $0x4] sm:$0xf]
        %v908 = vld [vmem:[%s276 + $0x8] sm:$0x1]
        %v909 = vld [vmem:[%s276 + $0xc] sm:$0xe]
        %v910 = vld [vmem:[%s276 + $0x10] sm:$0xf]
        %v911 = vld [vmem:[%s276 + $0x14] sm:$0x1]
        %v912 = vld [vmem:[%s276 + $0x18] sm:$0xe]
        %v913 = vld [vmem:[%s276 + $0x1c] sm:$0xf]
        %v914 = vld [vmem:[%s276 + $0x20] sm:$0x1]
        %v915 = vld [vmem:[%s276 + $0x24] sm:$0xe]
        %v916 = vld [vmem:[%s276 + $0x28] sm:$0xf]
        %v917 = vld [vmem:[%s276 + $0x2c] sm:$0x1]
        %v918 = vld [vmem:[%s276 + $0x30] sm:$0xe]
        %v919 = vld [vmem:[%s276 + $0x34] sm:$0xf]
        %v920 = vld [vmem:[%s276 + $0x38] sm:$0x1]
        %v921 = vld [vmem:[%s276 + $0x3c] sm:$0xe]
        %v922 = vld [vmem:[%s276 + $0x40] sm:$0xf]
        %v923 = vld [vmem:[%s276 + $0x44] sm:$0x1]
        %v924 = vld [vmem:[%s276 + $0x48] sm:$0xe]
        %v925 = vld [vmem:[%s276 + $0x4c] sm:$0xf]
        %v926 = vld [vmem:[%s276 + $0x50] sm:$0x1]
        %v927 = vld [vmem:[%s276 + $0x54] sm:$0xe]
        %v928 = vld [vmem:[%s276 + $0x58] sm:$0xf]
        %v929 = vld [vmem:[%s276 + $0x5c] sm:$0x1]
        %v930 = vld [vmem:[%s276 + $0x60] sm:$0xe]
        %v931 = vld [vmem:[%s276 + $0x64] sm:$0xf]
        %v932 = vld [vmem:[%s276 + $0x68] sm:$0x1]
        %v933 = vld [vmem:[%s276 + $0x6c] sm:$0xe]
        %v934 = vld [vmem:[%s276 + $0x70] sm:$0xf]
        %v935 = vld [vmem:[%s276 + $0x74] sm:$0x1]
        %v936 = vld [vmem:[%s276 + $0x78] sm:$0xe]
        %v937 = vld [vmem:[%s276 + $0x7c] sm:$0xf]
        %v938 = vld [vmem:[%s276 + $0x80] sm:$0x1]
        %v939 = vld [vmem:[%s276 + $0x84] sm:$0xe]
        %v940 = vld [vmem:[%s276 + $0x88] sm:$0xf]
        %v941 = vld [vmem:[%s276 + $0x8c] sm:$0x1]
        %v942 = vld [vmem:[%s276 + $0x90] sm:$0xe]
        %v943 = vld [vmem:[%s276 + $0x94] sm:$0xf]
        %v944 = vld [vmem:[%s276 + $0x98] sm:$0x1]
        %v945 = vld [vmem:[%s276 + $0x9c] sm:$0xe]
        %v946 = vld [vmem:[%s276 + $0xa0] sm:$0xf]
        %v947 = vld [vmem:[%s276 + $0xa4] sm:$0x1]
        %v948 = vld [vmem:[%s276 + $0xa8] sm:$0xe]
        %v949 = vld [vmem:[%s276 + $0xac] sm:$0xf]
        %v950 = vld [vmem:[%s276 + $0xb0] sm:$0x1]
        %v951 = vld [vmem:[%s276 + $0xb4] sm:$0xe]
        %v952 = vld [vmem:[%s276 + $0xb8] sm:$0xf]
        %v953 = vld [vmem:[%s276 + $0xbc] sm:$0x1]
        %vm1002 = vcmask 1042432
        %vm1003 = vcmask 1046532
        %vm1004 = vmor %vm1002, %vm1003
        %v1005 = vrot.slane %v906, 5
        %v1006 = vrot.slane %v1005, 4
        %v1007 = vrot.slane %v907, 5
        %v1008 = vsel %vm1004, %v1006, %v1007
        %v1009 = vrot.slane %v1007, 4
        %v1010 = vrot.slane %v908, 5
        %v1011 = vsel %vm1004, %v1009, %v1010
        %v1012 = vrot.slane %v909, 5
        %v1013 = vrot.slane %v1012, 4
        %v1014 = vrot.slane %v910, 5
        %v1015 = vsel %vm1004, %v1013, %v1014
        %v1016 = vrot.slane %v1014, 4
        %v1017 = vrot.slane %v911, 5
        %v1018 = vsel %vm1004, %v1016, %v1017
        %v1019 = vrot.slane %v912, 5
        %v1020 = vrot.slane %v1019, 4
        %v1021 = vrot.slane %v913, 5
        %v1022 = vsel %vm1004, %v1020, %v1021
        %v1023 = vrot.slane %v1021, 4
        %v1024 = vrot.slane %v914, 5
        %v1025 = vsel %vm1004, %v1023, %v1024
        %v1026 = vrot.slane %v915, 5
        %v1027 = vrot.slane %v1026, 4
        %v1028 = vrot.slane %v916, 5
        %v1029 = vsel %vm1004, %v1027, %v1028
        %v1030 = vrot.slane %v1028, 4
        %v1031 = vrot.slane %v917, 5
        %v1032 = vsel %vm1004, %v1030, %v1031
        %v1033 = vrot.slane %v918, 5
        %v1034 = vrot.slane %v1033, 4
        %v1035 = vrot.slane %v919, 5
        %v1036 = vsel %vm1004, %v1034, %v1035
        %v1037 = vrot.slane %v1035, 4
        %v1038 = vrot.slane %v920, 5
        %v1039 = vsel %vm1004, %v1037, %v1038
        %v1040 = vrot.slane %v921, 5
        %v1041 = vrot.slane %v1040, 4
        %v1042 = vrot.slane %v922, 5
        %v1043 = vsel %vm1004, %v1041, %v1042
        %v1044 = vrot.slane %v1042, 4
        %v1045 = vrot.slane %v923, 5
        %v1046 = vsel %vm1004, %v1044, %v1045
        %v1047 = vrot.slane %v924, 5
        %v1048 = vrot.slane %v1047, 4
        %v1049 = vrot.slane %v925, 5
        %v1050 = vsel %vm1004, %v1048, %v1049
        %v1051 = vrot.slane %v1049, 4
        %v1052 = vrot.slane %v926, 5
        %v1053 = vsel %vm1004, %v1051, %v1052
        %v1054 = vrot.slane %v927, 5
        %v1055 = vrot.slane %v1054, 4
        %v1056 = vrot.slane %v928, 5
        %v1057 = vsel %vm1004, %v1055, %v1056
        %v1058 = vrot.slane %v1056, 4
        %v1059 = vrot.slane %v929, 5
        %v1060 = vsel %vm1004, %v1058, %v1059
        %v1061 = vrot.slane %v930, 5
        %v1062 = vrot.slane %v1061, 4
        %v1063 = vrot.slane %v931, 5
        %v1064 = vsel %vm1004, %v1062, %v1063
        %v1065 = vrot.slane %v1063, 4
        %v1066 = vrot.slane %v932, 5
        %v1067 = vsel %vm1004, %v1065, %v1066
        %v1068 = vrot.slane %v933, 5
        %v1069 = vrot.slane %v1068, 4
        %v1070 = vrot.slane %v934, 5
        %v1071 = vsel %vm1004, %v1069, %v1070
        %v1072 = vrot.slane %v1070, 4
        %v1073 = vrot.slane %v935, 5
        %v1074 = vsel %vm1004, %v1072, %v1073
        %v1075 = vrot.slane %v936, 5
        %v1076 = vrot.slane %v1075, 4
        %v1077 = vrot.slane %v937, 5
        %v1078 = vsel %vm1004, %v1076, %v1077
        %v1079 = vrot.slane %v1077, 4
        %v1080 = vrot.slane %v938, 5
        %v1081 = vsel %vm1004, %v1079, %v1080
        %v1082 = vrot.slane %v939, 5
        %v1083 = vrot.slane %v1082, 4
        %v1084 = vrot.slane %v940, 5
        %v1085 = vsel %vm1004, %v1083, %v1084
        %v1086 = vrot.slane %v1084, 4
        %v1087 = vrot.slane %v941, 5
        %v1088 = vsel %vm1004, %v1086, %v1087
        %v1089 = vrot.slane %v942, 5
        %v1090 = vrot.slane %v1089, 4
        %v1091 = vrot.slane %v943, 5
        %v1092 = vsel %vm1004, %v1090, %v1091
        %v1093 = vrot.slane %v1091, 4
        %v1094 = vrot.slane %v944, 5
        %v1095 = vsel %vm1004, %v1093, %v1094
        %v1096 = vrot.slane %v945, 5
        %v1097 = vrot.slane %v1096, 4
        %v1098 = vrot.slane %v946, 5
        %v1099 = vsel %vm1004, %v1097, %v1098
        %v1100 = vrot.slane %v1098, 4
        %v1101 = vrot.slane %v947, 5
        %v1102 = vsel %vm1004, %v1100, %v1101
        %v1103 = vrot.slane %v948, 5
        %v1104 = vrot.slane %v1103, 4
        %v1105 = vrot.slane %v949, 5
        %v1106 = vsel %vm1004, %v1104, %v1105
        %v1107 = vrot.slane %v1105, 4
        %v1108 = vrot.slane %v950, 5
        %v1109 = vsel %vm1004, %v1107, %v1108
        %v1110 = vrot.slane %v951, 5
        %v1111 = vrot.slane %v1110, 4
        %v1112 = vrot.slane %v952, 5
        %v1113 = vsel %vm1004, %v1111, %v1112
        %v1114 = vrot.slane %v1112, 4
        %v1115 = vrot.slane %v953, 5
        %v1116 = vsel %vm1004, %v1114, %v1115
        %1117 = vrot.lane.b32.xlu0 %v1008, 16
        %v1118 = vpop.permute.xlu0 %1117
        %1119 = vrot.lane.b32.xlu0 %v1011, 16
        %v1120 = vpop.permute.xlu0 %1119
        %1121 = vrot.lane.b32.xlu0 %v1015, 16
        %v1122 = vpop.permute.xlu0 %1121
        %1123 = vrot.lane.b32.xlu0 %v1018, 16
        %v1124 = vpop.permute.xlu0 %1123
        %1125 = vrot.lane.b32.xlu0 %v1022, 16
        %v1126 = vpop.permute.xlu0 %1125
        %1127 = vrot.lane.b32.xlu0 %v1025, 16
        %v1128 = vpop.permute.xlu0 %1127
        %1129 = vrot.lane.b32.xlu0 %v1029, 16
        %v1130 = vpop.permute.xlu0 %1129
        %1131 = vrot.lane.b32.xlu0 %v1032, 16
        %v1132 = vpop.permute.xlu0 %1131
        %1133 = vrot.lane.b32.xlu0 %v1036, 16
        %v1134 = vpop.permute.xlu0 %1133
        %1135 = vrot.lane.b32.xlu0 %v1039, 16
        %v1136 = vpop.permute.xlu0 %1135
        %1137 = vrot.lane.b32.xlu0 %v1043, 16
        %v1138 = vpop.permute.xlu0 %1137
        %1139 = vrot.lane.b32.xlu0 %v1046, 16
        %v1140 = vpop.permute.xlu0 %1139
        %1141 = vrot.lane.b32.xlu0 %v1050, 16
        %v1142 = vpop.permute.xlu0 %1141
        %1143 = vrot.lane.b32.xlu0 %v1053, 16
        %v1144 = vpop.permute.xlu0 %1143
        %1145 = vrot.lane.b32.xlu0 %v1057, 16
        %v1146 = vpop.permute.xlu0 %1145
        %1147 = vrot.lane.b32.xlu0 %v1060, 16
        %v1148 = vpop.permute.xlu0 %1147
        %1149 = vrot.lane.b32.xlu0 %v1064, 16
        %v1150 = vpop.permute.xlu0 %1149
        %1151 = vrot.lane.b32.xlu0 %v1067, 16
        %v1152 = vpop.permute.xlu0 %1151
        %1153 = vrot.lane.b32.xlu0 %v1071, 16
        %v1154 = vpop.permute.xlu0 %1153
        %1155 = vrot.lane.b32.xlu0 %v1074, 16
        %v1156 = vpop.permute.xlu0 %1155
        %1157 = vrot.lane.b32.xlu0 %v1078, 16
        %v1158 = vpop.permute.xlu0 %1157
        %1159 = vrot.lane.b32.xlu0 %v1081, 16
        %v1160 = vpop.permute.xlu0 %1159
        %1161 = vrot.lane.b32.xlu0 %v1085, 16
        %v1162 = vpop.permute.xlu0 %1161
        %1163 = vrot.lane.b32.xlu0 %v1088, 16
        %v1164 = vpop.permute.xlu0 %1163
        %1165 = vrot.lane.b32.xlu0 %v1092, 16
        %v1166 = vpop.permute.xlu0 %1165
        %1167 = vrot.lane.b32.xlu0 %v1095, 16
        %v1168 = vpop.permute.xlu0 %1167
        %1169 = vrot.lane.b32.xlu0 %v1099, 16
        %v1170 = vpop.permute.xlu0 %1169
        %1171 = vrot.lane.b32.xlu0 %v1102, 16
        %v1172 = vpop.permute.xlu0 %1171
        %1173 = vrot.lane.b32.xlu0 %v1106, 16
        %v1174 = vpop.permute.xlu0 %1173
        %1175 = vrot.lane.b32.xlu0 %v1109, 16
        %v1176 = vpop.permute.xlu0 %1175
        %1177 = vrot.lane.b32.xlu0 %v1113, 16
        %v1178 = vpop.permute.xlu0 %1177
        %1179 = vrot.lane.b32.xlu0 %v1116, 16
        %v1180 = vpop.permute.xlu0 %1179
        %vm1213 = vcmask 191616
        %1214 = vst.msk [vmem:[#allocation3] sm:$0xf] %vm1213, %v1118
        %1215 = vst.msk [vmem:[#allocation3 + $0x4] sm:$0xf] %vm1213, %v1120
        %1216 = vst.msk [vmem:[#allocation3 + $0x8] sm:$0xf] %vm1213, %v1122
        %1217 = vst.msk [vmem:[#allocation3 + $0xc] sm:$0xf] %vm1213, %v1124
        %1218 = vst.msk [vmem:[#allocation3 + $0x10] sm:$0xf] %vm1213, %v1126
        %1219 = vst.msk [vmem:[#allocation3 + $0x14] sm:$0xf] %vm1213, %v1128
        %1220 = vst.msk [vmem:[#allocation3 + $0x18] sm:$0xf] %vm1213, %v1130
        %1221 = vst.msk [vmem:[#allocation3 + $0x1c] sm:$0xf] %vm1213, %v1132
        %1222 = vst.msk [vmem:[#allocation3 + $0x20] sm:$0xf] %vm1213, %v1134
        %1223 = vst.msk [vmem:[#allocation3 + $0x24] sm:$0xf] %vm1213, %v1136
        %1224 = vst.msk [vmem:[#allocation3 + $0x28] sm:$0xf] %vm1213, %v1138
        %1225 = vst.msk [vmem:[#allocation3 + $0x2c] sm:$0xf] %vm1213, %v1140
        %1226 = vst.msk [vmem:[#allocation3 + $0x30] sm:$0xf] %vm1213, %v1142
        %1227 = vst.msk [vmem:[#allocation3 + $0x34] sm:$0xf] %vm1213, %v1144
        %1228 = vst.msk [vmem:[#allocation3 + $0x38] sm:$0xf] %vm1213, %v1146
        %1229 = vst.msk [vmem:[#allocation3 + $0x3c] sm:$0xf] %vm1213, %v1148
        %1230 = vst.msk [vmem:[#allocation3 + $0x40] sm:$0xf] %vm1213, %v1150
        %1231 = vst.msk [vmem:[#allocation3 + $0x44] sm:$0xf] %vm1213, %v1152
        %1232 = vst.msk [vmem:[#allocation3 + $0x48] sm:$0xf] %vm1213, %v1154
        %1233 = vst.msk [vmem:[#allocation3 + $0x4c] sm:$0xf] %vm1213, %v1156
        %1234 = vst.msk [vmem:[#allocation3 + $0x50] sm:$0xf] %vm1213, %v1158
        %1235 = vst.msk [vmem:[#allocation3 + $0x54] sm:$0xf] %vm1213, %v1160
        %1236 = vst.msk [vmem:[#allocation3 + $0x58] sm:$0xf] %vm1213, %v1162
        %1237 = vst.msk [vmem:[#allocation3 + $0x5c] sm:$0xf] %vm1213, %v1164
        %1238 = vst.msk [vmem:[#allocation3 + $0x60] sm:$0xf] %vm1213, %v1166
        %1239 = vst.msk [vmem:[#allocation3 + $0x64] sm:$0xf] %vm1213, %v1168
        %1240 = vst.msk [vmem:[#allocation3 + $0x68] sm:$0xf] %vm1213, %v1170
        %1241 = vst.msk [vmem:[#allocation3 + $0x6c] sm:$0xf] %vm1213, %v1172
        %1242 = vst.msk [vmem:[#allocation3 + $0x70] sm:$0xf] %vm1213, %v1174
        %1243 = vst.msk [vmem:[#allocation3 + $0x74] sm:$0xf] %vm1213, %v1176
        %1244 = vst.msk [vmem:[#allocation3 + $0x78] sm:$0xf] %vm1213, %v1178
        %1245 = vst.msk [vmem:[#allocation3 + $0x7c] sm:$0xf] %vm1213, %v1180
        %s1246 = scalar_lea.vmem %s276, 12
        %v1247 = vld [vmem:[%s1246] sm:$0xf]
        %v1248 = vld [vmem:[%s1246 + $0x4] sm:$0xf]
        %v1249 = vld [vmem:[%s1246 + $0xc] sm:$0xf]
        %v1250 = vld [vmem:[%s1246 + $0x10] sm:$0xf]
        %v1251 = vld [vmem:[%s1246 + $0x18] sm:$0xf]
        %v1252 = vld [vmem:[%s1246 + $0x1c] sm:$0xf]
        %v1253 = vld [vmem:[%s1246 + $0x24] sm:$0xf]
        %v1254 = vld [vmem:[%s1246 + $0x28] sm:$0xf]
        %v1255 = vld [vmem:[%s1246 + $0x30] sm:$0xf]
        %v1256 = vld [vmem:[%s1246 + $0x34] sm:$0xf]
        %v1257 = vld [vmem:[%s1246 + $0x3c] sm:$0xf]
        %v1258 = vld [vmem:[%s1246 + $0x40] sm:$0xf]
        %v1259 = vld [vmem:[%s1246 + $0x48] sm:$0xf]
        %v1260 = vld [vmem:[%s1246 + $0x4c] sm:$0xf]
        %v1261 = vld [vmem:[%s1246 + $0x54] sm:$0xf]
        %v1262 = vld [vmem:[%s1246 + $0x58] sm:$0xf]
        %v1263 = vld [vmem:[%s1246 + $0x60] sm:$0xf]
        %v1264 = vld [vmem:[%s1246 + $0x64] sm:$0xf]
        %v1265 = vld [vmem:[%s1246 + $0x6c] sm:$0xf]
        %v1266 = vld [vmem:[%s1246 + $0x70] sm:$0xf]
        %v1267 = vld [vmem:[%s1246 + $0x78] sm:$0xf]
        %v1268 = vld [vmem:[%s1246 + $0x7c] sm:$0xf]
        %v1269 = vld [vmem:[%s1246 + $0x84] sm:$0xf]
        %v1270 = vld [vmem:[%s1246 + $0x88] sm:$0xf]
        %v1271 = vld [vmem:[%s1246 + $0x90] sm:$0xf]
        %v1272 = vld [vmem:[%s1246 + $0x94] sm:$0xf]
        %v1273 = vld [vmem:[%s1246 + $0x9c] sm:$0xf]
        %v1274 = vld [vmem:[%s1246 + $0xa0] sm:$0xf]
        %v1275 = vld [vmem:[%s1246 + $0xa8] sm:$0xf]
        %v1276 = vld [vmem:[%s1246 + $0xac] sm:$0xf]
        %v1277 = vld [vmem:[%s1246 + $0xb4] sm:$0xf]
        %v1278 = vld [vmem:[%s1246 + $0xb8] sm:$0xf]
        %1311 = vrot.lane.b32.xlu0 %v1247, 24
        %v1312 = vpop.permute.xlu0 %1311
        %1313 = vrot.lane.b32.xlu0 %v1248, 24
        %v1314 = vpop.permute.xlu0 %1313
        %1315 = vrot.lane.b32.xlu0 %v1249, 24
        %v1316 = vpop.permute.xlu0 %1315
        %1317 = vrot.lane.b32.xlu0 %v1250, 24
        %v1318 = vpop.permute.xlu0 %1317
        %1319 = vrot.lane.b32.xlu0 %v1251, 24
        %v1320 = vpop.permute.xlu0 %1319
        %1321 = vrot.lane.b32.xlu0 %v1252, 24
        %v1322 = vpop.permute.xlu0 %1321
        %1323 = vrot.lane.b32.xlu0 %v1253, 24
        %v1324 = vpop.permute.xlu0 %1323
        %1325 = vrot.lane.b32.xlu0 %v1254, 24
        %v1326 = vpop.permute.xlu0 %1325
        %1327 = vrot.lane.b32.xlu0 %v1255, 24
        %v1328 = vpop.permute.xlu0 %1327
        %1329 = vrot.lane.b32.xlu0 %v1256, 24
        %v1330 = vpop.permute.xlu0 %1329
        %1331 = vrot.lane.b32.xlu0 %v1257, 24
        %v1332 = vpop.permute.xlu0 %1331
        %1333 = vrot.lane.b32.xlu0 %v1258, 24
        %v1334 = vpop.permute.xlu0 %1333
        %1335 = vrot.lane.b32.xlu0 %v1259, 24
        %v1336 = vpop.permute.xlu0 %1335
        %1337 = vrot.lane.b32.xlu0 %v1260, 24
        %v1338 = vpop.permute.xlu0 %1337
        %1339 = vrot.lane.b32.xlu0 %v1261, 24
        %v1340 = vpop.permute.xlu0 %1339
        %1341 = vrot.lane.b32.xlu0 %v1262, 24
        %v1342 = vpop.permute.xlu0 %1341
        %1343 = vrot.lane.b32.xlu0 %v1263, 24
        %v1344 = vpop.permute.xlu0 %1343
        %1345 = vrot.lane.b32.xlu0 %v1264, 24
        %v1346 = vpop.permute.xlu0 %1345
        %1347 = vrot.lane.b32.xlu0 %v1265, 24
        %v1348 = vpop.permute.xlu0 %1347
        %1349 = vrot.lane.b32.xlu0 %v1266, 24
        %v1350 = vpop.permute.xlu0 %1349
        %1351 = vrot.lane.b32.xlu0 %v1267, 24
        %v1352 = vpop.permute.xlu0 %1351
        %1353 = vrot.lane.b32.xlu0 %v1268, 24
        %v1354 = vpop.permute.xlu0 %1353
        %1355 = vrot.lane.b32.xlu0 %v1269, 24
        %v1356 = vpop.permute.xlu0 %1355
        %1357 = vrot.lane.b32.xlu0 %v1270, 24
        %v1358 = vpop.permute.xlu0 %1357
        %1359 = vrot.lane.b32.xlu0 %v1271, 24
        %v1360 = vpop.permute.xlu0 %1359
        %1361 = vrot.lane.b32.xlu0 %v1272, 24
        %v1362 = vpop.permute.xlu0 %1361
        %1363 = vrot.lane.b32.xlu0 %v1273, 24
        %v1364 = vpop.permute.xlu0 %1363
        %1365 = vrot.lane.b32.xlu0 %v1274, 24
        %v1366 = vpop.permute.xlu0 %1365
        %1367 = vrot.lane.b32.xlu0 %v1275, 24
        %v1368 = vpop.permute.xlu0 %1367
        %1369 = vrot.lane.b32.xlu0 %v1276, 24
        %v1370 = vpop.permute.xlu0 %1369
        %1371 = vrot.lane.b32.xlu0 %v1277, 24
        %v1372 = vpop.permute.xlu0 %1371
        %1373 = vrot.lane.b32.xlu0 %v1278, 24
        %v1374 = vpop.permute.xlu0 %1373
        %vm1407 = vcmask 257216
        %1408 = vst.msk [vmem:[#allocation3] sm:$0xf] %vm1407, %v1312
        %1409 = vst.msk [vmem:[#allocation3 + $0x4] sm:$0xf] %vm1407, %v1314
        %1410 = vst.msk [vmem:[#allocation3 + $0x8] sm:$0xf] %vm1407, %v1316
        %1411 = vst.msk [vmem:[#allocation3 + $0xc] sm:$0xf] %vm1407, %v1318
        %1412 = vst.msk [vmem:[#allocation3 + $0x10] sm:$0xf] %vm1407, %v1320
        %1413 = vst.msk [vmem:[#allocation3 + $0x14] sm:$0xf] %vm1407, %v1322
        %1414 = vst.msk [vmem:[#allocation3 + $0x18] sm:$0xf] %vm1407, %v1324
        %1415 = vst.msk [vmem:[#allocation3 + $0x1c] sm:$0xf] %vm1407, %v1326
        %1416 = vst.msk [vmem:[#allocation3 + $0x20] sm:$0xf] %vm1407, %v1328
        %1417 = vst.msk [vmem:[#allocation3 + $0x24] sm:$0xf] %vm1407, %v1330
        %1418 = vst.msk [vmem:[#allocation3 + $0x28] sm:$0xf] %vm1407, %v1332
        %1419 = vst.msk [vmem:[#allocation3 + $0x2c] sm:$0xf] %vm1407, %v1334
        %1420 = vst.msk [vmem:[#allocation3 + $0x30] sm:$0xf] %vm1407, %v1336
        %1421 = vst.msk [vmem:[#allocation3 + $0x34] sm:$0xf] %vm1407, %v1338
        %1422 = vst.msk [vmem:[#allocation3 + $0x38] sm:$0xf] %vm1407, %v1340
        %1423 = vst.msk [vmem:[#allocation3 + $0x3c] sm:$0xf] %vm1407, %v1342
        %1424 = vst.msk [vmem:[#allocation3 + $0x40] sm:$0xf] %vm1407, %v1344
        %1425 = vst.msk [vmem:[#allocation3 + $0x44] sm:$0xf] %vm1407, %v1346
        %1426 = vst.msk [vmem:[#allocation3 + $0x48] sm:$0xf] %vm1407, %v1348
        %1427 = vst.msk [vmem:[#allocation3 + $0x4c] sm:$0xf] %vm1407, %v1350
        %1428 = vst.msk [vmem:[#allocation3 + $0x50] sm:$0xf] %vm1407, %v1352
        %1429 = vst.msk [vmem:[#allocation3 + $0x54] sm:$0xf] %vm1407, %v1354
        %1430 = vst.msk [vmem:[#allocation3 + $0x58] sm:$0xf] %vm1407, %v1356
        %1431 = vst.msk [vmem:[#allocation3 + $0x5c] sm:$0xf] %vm1407, %v1358
        %1432 = vst.msk [vmem:[#allocation3 + $0x60] sm:$0xf] %vm1407, %v1360
        %1433 = vst.msk [vmem:[#allocation3 + $0x64] sm:$0xf] %vm1407, %v1362
        %1434 = vst.msk [vmem:[#allocation3 + $0x68] sm:$0xf] %vm1407, %v1364
        %1435 = vst.msk [vmem:[#allocation3 + $0x6c] sm:$0xf] %vm1407, %v1366
        %1436 = vst.msk [vmem:[#allocation3 + $0x70] sm:$0xf] %vm1407, %v1368
        %1437 = vst.msk [vmem:[#allocation3 + $0x74] sm:$0xf] %vm1407, %v1370
        %1438 = vst.msk [vmem:[#allocation3 + $0x78] sm:$0xf] %vm1407, %v1372
        %1439 = vst.msk [vmem:[#allocation3 + $0x7c] sm:$0xf] %vm1407, %v1374
        %v1440 = vld [vmem:[%s1246] sm:$0xf]
        %v1441 = vld [vmem:[%s1246 + $0x4] sm:$0xf]
        %v1442 = vld [vmem:[%s1246 + $0x8] sm:$0x1]
        %v1443 = vld [vmem:[%s1246 + $0xc] sm:$0xf]
        %v1444 = vld [vmem:[%s1246 + $0x10] sm:$0xf]
        %v1445 = vld [vmem:[%s1246 + $0x14] sm:$0x1]
        %v1446 = vld [vmem:[%s1246 + $0x18] sm:$0xf]
        %v1447 = vld [vmem:[%s1246 + $0x1c] sm:$0xf]
        %v1448 = vld [vmem:[%s1246 + $0x20] sm:$0x1]
        %v1449 = vld [vmem:[%s1246 + $0x24] sm:$0xf]
        %v1450 = vld [vmem:[%s1246 + $0x28] sm:$0xf]
        %v1451 = vld [vmem:[%s1246 + $0x2c] sm:$0x1]
        %v1452 = vld [vmem:[%s1246 + $0x30] sm:$0xf]
        %v1453 = vld [vmem:[%s1246 + $0x34] sm:$0xf]
        %v1454 = vld [vmem:[%s1246 + $0x38] sm:$0x1]
        %v1455 = vld [vmem:[%s1246 + $0x3c] sm:$0xf]
        %v1456 = vld [vmem:[%s1246 + $0x40] sm:$0xf]
        %v1457 = vld [vmem:[%s1246 + $0x44] sm:$0x1]
        %v1458 = vld [vmem:[%s1246 + $0x48] sm:$0xf]
        %v1459 = vld [vmem:[%s1246 + $0x4c] sm:$0xf]
        %v1460 = vld [vmem:[%s1246 + $0x50] sm:$0x1]
        %v1461 = vld [vmem:[%s1246 + $0x54] sm:$0xf]
        %v1462 = vld [vmem:[%s1246 + $0x58] sm:$0xf]
        %v1463 = vld [vmem:[%s1246 + $0x5c] sm:$0x1]
        %v1464 = vld [vmem:[%s1246 + $0x60] sm:$0xf]
        %v1465 = vld [vmem:[%s1246 + $0x64] sm:$0xf]
        %v1466 = vld [vmem:[%s1246 + $0x68] sm:$0x1]
        %v1467 = vld [vmem:[%s1246 + $0x6c] sm:$0xf]
        %v1468 = vld [vmem:[%s1246 + $0x70] sm:$0xf]
        %v1469 = vld [vmem:[%s1246 + $0x74] sm:$0x1]
        %v1470 = vld [vmem:[%s1246 + $0x78] sm:$0xf]
        %v1471 = vld [vmem:[%s1246 + $0x7c] sm:$0xf]
        %v1472 = vld [vmem:[%s1246 + $0x80] sm:$0x1]
        %v1473 = vld [vmem:[%s1246 + $0x84] sm:$0xf]
        %v1474 = vld [vmem:[%s1246 + $0x88] sm:$0xf]
        %v1475 = vld [vmem:[%s1246 + $0x8c] sm:$0x1]
        %v1476 = vld [vmem:[%s1246 + $0x90] sm:$0xf]
        %v1477 = vld [vmem:[%s1246 + $0x94] sm:$0xf]
        %v1478 = vld [vmem:[%s1246 + $0x98] sm:$0x1]
        %v1479 = vld [vmem:[%s1246 + $0x9c] sm:$0xf]
        %v1480 = vld [vmem:[%s1246 + $0xa0] sm:$0xf]
        %v1481 = vld [vmem:[%s1246 + $0xa4] sm:$0x1]
        %v1482 = vld [vmem:[%s1246 + $0xa8] sm:$0xf]
        %v1483 = vld [vmem:[%s1246 + $0xac] sm:$0xf]
        %v1484 = vld [vmem:[%s1246 + $0xb0] sm:$0x1]
        %v1485 = vld [vmem:[%s1246 + $0xb4] sm:$0xf]
        %v1486 = vld [vmem:[%s1246 + $0xb8] sm:$0xf]
        %v1487 = vld [vmem:[%s1246 + $0xbc] sm:$0x1]
        %v1489 = vshrl.u32 %v1440, 16
        %v1491 = vrot.slane %v1489, 4
        %v1492 = vshll.u32 %v1440, 16
        %v1494 = vrot.slane %v1492, 5
        %v1495 = vor.u32 %v1491, %v1494
        %v1496 = vrot.slane %v1495, 4
        %v1498 = vshll.u32 %v1441, 16
        %v1500 = vrot.slane %v1498, 5
        %v1501 = vsel %vm392, %v1496, %v1500
        %v1502 = vshrl.u32 %v1441, 16
        %v1504 = vrot.slane %v1502, 4
        %v1505 = vor.u32 %v1504, %v1500
        %v1506 = vrot.slane %v1505, 4
        %v1508 = vshll.u32 %v1442, 16
        %v1510 = vrot.slane %v1508, 5
        %v1511 = vsel %vm392, %v1506, %v1510
        %v1513 = vshrl.u32 %v1443, 16
        %v1515 = vrot.slane %v1513, 4
        %v1516 = vshll.u32 %v1443, 16
        %v1518 = vrot.slane %v1516, 5
        %v1519 = vor.u32 %v1515, %v1518
        %v1520 = vrot.slane %v1519, 4
        %v1522 = vshll.u32 %v1444, 16
        %v1524 = vrot.slane %v1522, 5
        %v1525 = vsel %vm392, %v1520, %v1524
        %v1526 = vshrl.u32 %v1444, 16
        %v1528 = vrot.slane %v1526, 4
        %v1529 = vor.u32 %v1528, %v1524
        %v1530 = vrot.slane %v1529, 4
        %v1532 = vshll.u32 %v1445, 16
        %v1534 = vrot.slane %v1532, 5
        %v1535 = vsel %vm392, %v1530, %v1534
        %v1537 = vshrl.u32 %v1446, 16
        %v1539 = vrot.slane %v1537, 4
        %v1540 = vshll.u32 %v1446, 16
        %v1542 = vrot.slane %v1540, 5
        %v1543 = vor.u32 %v1539, %v1542
        %v1544 = vrot.slane %v1543, 4
        %v1546 = vshll.u32 %v1447, 16
        %v1548 = vrot.slane %v1546, 5
        %v1549 = vsel %vm392, %v1544, %v1548
        %v1550 = vshrl.u32 %v1447, 16
        %v1552 = vrot.slane %v1550, 4
        %v1553 = vor.u32 %v1552, %v1548
        %v1554 = vrot.slane %v1553, 4
        %v1556 = vshll.u32 %v1448, 16
        %v1558 = vrot.slane %v1556, 5
        %v1559 = vsel %vm392, %v1554, %v1558
        %v1561 = vshrl.u32 %v1449, 16
        %v1563 = vrot.slane %v1561, 4
        %v1564 = vshll.u32 %v1449, 16
        %v1566 = vrot.slane %v1564, 5
        %v1567 = vor.u32 %v1563, %v1566
        %v1568 = vrot.slane %v1567, 4
        %v1570 = vshll.u32 %v1450, 16
        %v1572 = vrot.slane %v1570, 5
        %v1573 = vsel %vm392, %v1568, %v1572
        %v1574 = vshrl.u32 %v1450, 16
        %v1576 = vrot.slane %v1574, 4
        %v1577 = vor.u32 %v1576, %v1572
        %v1578 = vrot.slane %v1577, 4
        %v1580 = vshll.u32 %v1451, 16
        %v1582 = vrot.slane %v1580, 5
        %v1583 = vsel %vm392, %v1578, %v1582
        %v1585 = vshrl.u32 %v1452, 16
        %v1587 = vrot.slane %v1585, 4
        %v1588 = vshll.u32 %v1452, 16
        %v1590 = vrot.slane %v1588, 5
        %v1591 = vor.u32 %v1587, %v1590
        %v1592 = vrot.slane %v1591, 4
        %v1594 = vshll.u32 %v1453, 16
        %v1596 = vrot.slane %v1594, 5
        %v1597 = vsel %vm392, %v1592, %v1596
        %v1598 = vshrl.u32 %v1453, 16
        %v1600 = vrot.slane %v1598, 4
        %v1601 = vor.u32 %v1600, %v1596
        %v1602 = vrot.slane %v1601, 4
        %v1604 = vshll.u32 %v1454, 16
        %v1606 = vrot.slane %v1604, 5
        %v1607 = vsel %vm392, %v1602, %v1606
        %v1609 = vshrl.u32 %v1455, 16
        %v1611 = vrot.slane %v1609, 4
        %v1612 = vshll.u32 %v1455, 16
        %v1614 = vrot.slane %v1612, 5
        %v1615 = vor.u32 %v1611, %v1614
        %v1616 = vrot.slane %v1615, 4
        %v1618 = vshll.u32 %v1456, 16
        %v1620 = vrot.slane %v1618, 5
        %v1621 = vsel %vm392, %v1616, %v1620
        %v1622 = vshrl.u32 %v1456, 16
        %v1624 = vrot.slane %v1622, 4
        %v1625 = vor.u32 %v1624, %v1620
        %v1626 = vrot.slane %v1625, 4
        %v1628 = vshll.u32 %v1457, 16
        %v1630 = vrot.slane %v1628, 5
        %v1631 = vsel %vm392, %v1626, %v1630
        %v1633 = vshrl.u32 %v1458, 16
        %v1635 = vrot.slane %v1633, 4
        %v1636 = vshll.u32 %v1458, 16
        %v1638 = vrot.slane %v1636, 5
        %v1639 = vor.u32 %v1635, %v1638
        %v1640 = vrot.slane %v1639, 4
        %v1642 = vshll.u32 %v1459, 16
        %v1644 = vrot.slane %v1642, 5
        %v1645 = vsel %vm392, %v1640, %v1644
        %v1646 = vshrl.u32 %v1459, 16
        %v1648 = vrot.slane %v1646, 4
        %v1649 = vor.u32 %v1648, %v1644
        %v1650 = vrot.slane %v1649, 4
        %v1652 = vshll.u32 %v1460, 16
        %v1654 = vrot.slane %v1652, 5
        %v1655 = vsel %vm392, %v1650, %v1654
        %v1657 = vshrl.u32 %v1461, 16
        %v1659 = vrot.slane %v1657, 4
        %v1660 = vshll.u32 %v1461, 16
        %v1662 = vrot.slane %v1660, 5
        %v1663 = vor.u32 %v1659, %v1662
        %v1664 = vrot.slane %v1663, 4
        %v1666 = vshll.u32 %v1462, 16
        %v1668 = vrot.slane %v1666, 5
        %v1669 = vsel %vm392, %v1664, %v1668
        %v1670 = vshrl.u32 %v1462, 16
        %v1672 = vrot.slane %v1670, 4
        %v1673 = vor.u32 %v1672, %v1668
        %v1674 = vrot.slane %v1673, 4
        %v1676 = vshll.u32 %v1463, 16
        %v1678 = vrot.slane %v1676, 5
        %v1679 = vsel %vm392, %v1674, %v1678
        %v1681 = vshrl.u32 %v1464, 16
        %v1683 = vrot.slane %v1681, 4
        %v1684 = vshll.u32 %v1464, 16
        %v1686 = vrot.slane %v1684, 5
        %v1687 = vor.u32 %v1683, %v1686
        %v1688 = vrot.slane %v1687, 4
        %v1690 = vshll.u32 %v1465, 16
        %v1692 = vrot.slane %v1690, 5
        %v1693 = vsel %vm392, %v1688, %v1692
        %v1694 = vshrl.u32 %v1465, 16
        %v1696 = vrot.slane %v1694, 4
        %v1697 = vor.u32 %v1696, %v1692
        %v1698 = vrot.slane %v1697, 4
        %v1700 = vshll.u32 %v1466, 16
        %v1702 = vrot.slane %v1700, 5
        %v1703 = vsel %vm392, %v1698, %v1702
        %v1705 = vshrl.u32 %v1467, 16
        %v1707 = vrot.slane %v1705, 4
        %v1708 = vshll.u32 %v1467, 16
        %v1710 = vrot.slane %v1708, 5
        %v1711 = vor.u32 %v1707, %v1710
        %v1712 = vrot.slane %v1711, 4
        %v1714 = vshll.u32 %v1468, 16
        %v1716 = vrot.slane %v1714, 5
        %v1717 = vsel %vm392, %v1712, %v1716
        %v1718 = vshrl.u32 %v1468, 16
        %v1720 = vrot.slane %v1718, 4
        %v1721 = vor.u32 %v1720, %v1716
        %v1722 = vrot.slane %v1721, 4
        %v1724 = vshll.u32 %v1469, 16
        %v1726 = vrot.slane %v1724, 5
        %v1727 = vsel %vm392, %v1722, %v1726
        %v1729 = vshrl.u32 %v1470, 16
        %v1731 = vrot.slane %v1729, 4
        %v1732 = vshll.u32 %v1470, 16
        %v1734 = vrot.slane %v1732, 5
        %v1735 = vor.u32 %v1731, %v1734
        %v1736 = vrot.slane %v1735, 4
        %v1738 = vshll.u32 %v1471, 16
        %v1740 = vrot.slane %v1738, 5
        %v1741 = vsel %vm392, %v1736, %v1740
        %v1742 = vshrl.u32 %v1471, 16
        %v1744 = vrot.slane %v1742, 4
        %v1745 = vor.u32 %v1744, %v1740
        %v1746 = vrot.slane %v1745, 4
        %v1748 = vshll.u32 %v1472, 16
        %v1750 = vrot.slane %v1748, 5
        %v1751 = vsel %vm392, %v1746, %v1750
        %v1753 = vshrl.u32 %v1473, 16
        %v1755 = vrot.slane %v1753, 4
        %v1756 = vshll.u32 %v1473, 16
        %v1758 = vrot.slane %v1756, 5
        %v1759 = vor.u32 %v1755, %v1758
        %v1760 = vrot.slane %v1759, 4
        %v1762 = vshll.u32 %v1474, 16
        %v1764 = vrot.slane %v1762, 5
        %v1765 = vsel %vm392, %v1760, %v1764
        %v1766 = vshrl.u32 %v1474, 16
        %v1768 = vrot.slane %v1766, 4
        %v1769 = vor.u32 %v1768, %v1764
        %v1770 = vrot.slane %v1769, 4
        %v1772 = vshll.u32 %v1475, 16
        %v1774 = vrot.slane %v1772, 5
        %v1775 = vsel %vm392, %v1770, %v1774
        %v1777 = vshrl.u32 %v1476, 16
        %v1779 = vrot.slane %v1777, 4
        %v1780 = vshll.u32 %v1476, 16
        %v1782 = vrot.slane %v1780, 5
        %v1783 = vor.u32 %v1779, %v1782
        %v1784 = vrot.slane %v1783, 4
        %v1786 = vshll.u32 %v1477, 16
        %v1788 = vrot.slane %v1786, 5
        %v1789 = vsel %vm392, %v1784, %v1788
        %v1790 = vshrl.u32 %v1477, 16
        %v1792 = vrot.slane %v1790, 4
        %v1793 = vor.u32 %v1792, %v1788
        %v1794 = vrot.slane %v1793, 4
        %v1796 = vshll.u32 %v1478, 16
        %v1798 = vrot.slane %v1796, 5
        %v1799 = vsel %vm392, %v1794, %v1798
        %v1801 = vshrl.u32 %v1479, 16
        %v1803 = vrot.slane %v1801, 4
        %v1804 = vshll.u32 %v1479, 16
        %v1806 = vrot.slane %v1804, 5
        %v1807 = vor.u32 %v1803, %v1806
        %v1808 = vrot.slane %v1807, 4
        %v1810 = vshll.u32 %v1480, 16
        %v1812 = vrot.slane %v1810, 5
        %v1813 = vsel %vm392, %v1808, %v1812
        %v1814 = vshrl.u32 %v1480, 16
        %v1816 = vrot.slane %v1814, 4
        %v1817 = vor.u32 %v1816, %v1812
        %v1818 = vrot.slane %v1817, 4
        %v1820 = vshll.u32 %v1481, 16
        %v1822 = vrot.slane %v1820, 5
        %v1823 = vsel %vm392, %v1818, %v1822
        %v1825 = vshrl.u32 %v1482, 16
        %v1827 = vrot.slane %v1825, 4
        %v1828 = vshll.u32 %v1482, 16
        %v1830 = vrot.slane %v1828, 5
        %v1831 = vor.u32 %v1827, %v1830
        %v1832 = vrot.slane %v1831, 4
        %v1834 = vshll.u32 %v1483, 16
        %v1836 = vrot.slane %v1834, 5
        %v1837 = vsel %vm392, %v1832, %v1836
        %v1838 = vshrl.u32 %v1483, 16
        %v1840 = vrot.slane %v1838, 4
        %v1841 = vor.u32 %v1840, %v1836
        %v1842 = vrot.slane %v1841, 4
        %v1844 = vshll.u32 %v1484, 16
        %v1846 = vrot.slane %v1844, 5
        %v1847 = vsel %vm392, %v1842, %v1846
        %v1849 = vshrl.u32 %v1485, 16
        %v1851 = vrot.slane %v1849, 4
        %v1852 = vshll.u32 %v1485, 16
        %v1854 = vrot.slane %v1852, 5
        %v1855 = vor.u32 %v1851, %v1854
        %v1856 = vrot.slane %v1855, 4
        %v1858 = vshll.u32 %v1486, 16
        %v1860 = vrot.slane %v1858, 5
        %v1861 = vsel %vm392, %v1856, %v1860
        %v1862 = vshrl.u32 %v1486, 16
        %v1864 = vrot.slane %v1862, 4
        %v1865 = vor.u32 %v1864, %v1860
        %v1866 = vrot.slane %v1865, 4
        %v1868 = vshll.u32 %v1487, 16
        %v1870 = vrot.slane %v1868, 5
        %v1871 = vsel %vm392, %v1866, %v1870
        %1872 = vrot.lane.b32.xlu0 %v1501, 32
        %v1873 = vpop.permute.xlu0 %1872
        %1874 = vrot.lane.b32.xlu0 %v1511, 32
        %v1875 = vpop.permute.xlu0 %1874
        %1876 = vrot.lane.b32.xlu0 %v1525, 32
        %v1877 = vpop.permute.xlu0 %1876
        %1878 = vrot.lane.b32.xlu0 %v1535, 32
        %v1879 = vpop.permute.xlu0 %1878
        %1880 = vrot.lane.b32.xlu0 %v1549, 32
        %v1881 = vpop.permute.xlu0 %1880
        %1882 = vrot.lane.b32.xlu0 %v1559, 32
        %v1883 = vpop.permute.xlu0 %1882
        %1884 = vrot.lane.b32.xlu0 %v1573, 32
        %v1885 = vpop.permute.xlu0 %1884
        %1886 = vrot.lane.b32.xlu0 %v1583, 32
        %v1887 = vpop.permute.xlu0 %1886
        %1888 = vrot.lane.b32.xlu0 %v1597, 32
        %v1889 = vpop.permute.xlu0 %1888
        %1890 = vrot.lane.b32.xlu0 %v1607, 32
        %v1891 = vpop.permute.xlu0 %1890
        %1892 = vrot.lane.b32.xlu0 %v1621, 32
        %v1893 = vpop.permute.xlu0 %1892
        %1894 = vrot.lane.b32.xlu0 %v1631, 32
        %v1895 = vpop.permute.xlu0 %1894
        %1896 = vrot.lane.b32.xlu0 %v1645, 32
        %v1897 = vpop.permute.xlu0 %1896
        %1898 = vrot.lane.b32.xlu0 %v1655, 32
        %v1899 = vpop.permute.xlu0 %1898
        %1900 = vrot.lane.b32.xlu0 %v1669, 32
        %v1901 = vpop.permute.xlu0 %1900
        %1902 = vrot.lane.b32.xlu0 %v1679, 32
        %v1903 = vpop.permute.xlu0 %1902
        %1904 = vrot.lane.b32.xlu0 %v1693, 32
        %v1905 = vpop.permute.xlu0 %1904
        %1906 = vrot.lane.b32.xlu0 %v1703, 32
        %v1907 = vpop.permute.xlu0 %1906
        %1908 = vrot.lane.b32.xlu0 %v1717, 32
        %v1909 = vpop.permute.xlu0 %1908
        %1910 = vrot.lane.b32.xlu0 %v1727, 32
        %v1911 = vpop.permute.xlu0 %1910
        %1912 = vrot.lane.b32.xlu0 %v1741, 32
        %v1913 = vpop.permute.xlu0 %1912
        %1914 = vrot.lane.b32.xlu0 %v1751, 32
        %v1915 = vpop.permute.xlu0 %1914
        %1916 = vrot.lane.b32.xlu0 %v1765, 32
        %v1917 = vpop.permute.xlu0 %1916
        %1918 = vrot.lane.b32.xlu0 %v1775, 32
        %v1919 = vpop.permute.xlu0 %1918
        %1920 = vrot.lane.b32.xlu0 %v1789, 32
        %v1921 = vpop.permute.xlu0 %1920
        %1922 = vrot.lane.b32.xlu0 %v1799, 32
        %v1923 = vpop.permute.xlu0 %1922
        %1924 = vrot.lane.b32.xlu0 %v1813, 32
        %v1925 = vpop.permute.xlu0 %1924
        %1926 = vrot.lane.b32.xlu0 %v1823, 32
        %v1927 = vpop.permute.xlu0 %1926
        %1928 = vrot.lane.b32.xlu0 %v1837, 32
        %v1929 = vpop.permute.xlu0 %1928
        %1930 = vrot.lane.b32.xlu0 %v1847, 32
        %v1931 = vpop.permute.xlu0 %1930
        %1932 = vrot.lane.b32.xlu0 %v1861, 32
        %v1933 = vpop.permute.xlu0 %1932
        %1934 = vrot.lane.b32.xlu0 %v1871, 32
        %v1935 = vpop.permute.xlu0 %1934
        %vm1968 = vcmask 322816
        %1969 = vst.msk [vmem:[#allocation3] sm:$0xf] %vm1968, %v1873
        %1970 = vst.msk [vmem:[#allocation3 + $0x4] sm:$0xf] %vm1968, %v1875
        %1971 = vst.msk [vmem:[#allocation3 + $0x8] sm:$0xf] %vm1968, %v1877
        %1972 = vst.msk [vmem:[#allocation3 + $0xc] sm:$0xf] %vm1968, %v1879
        %1973 = vst.msk [vmem:[#allocation3 + $0x10] sm:$0xf] %vm1968, %v1881
        %1974 = vst.msk [vmem:[#allocation3 + $0x14] sm:$0xf] %vm1968, %v1883
        %1975 = vst.msk [vmem:[#allocation3 + $0x18] sm:$0xf] %vm1968, %v1885
        %1976 = vst.msk [vmem:[#allocation3 + $0x1c] sm:$0xf] %vm1968, %v1887
        %1977 = vst.msk [vmem:[#allocation3 + $0x20] sm:$0xf] %vm1968, %v1889
        %1978 = vst.msk [vmem:[#allocation3 + $0x24] sm:$0xf] %vm1968, %v1891
        %1979 = vst.msk [vmem:[#allocation3 + $0x28] sm:$0xf] %vm1968, %v1893
        %1980 = vst.msk [vmem:[#allocation3 + $0x2c] sm:$0xf] %vm1968, %v1895
        %1981 = vst.msk [vmem:[#allocation3 + $0x30] sm:$0xf] %vm1968, %v1897
        %1982 = vst.msk [vmem:[#allocation3 + $0x34] sm:$0xf] %vm1968, %v1899
        %1983 = vst.msk [vmem:[#allocation3 + $0x38] sm:$0xf] %vm1968, %v1901
        %1984 = vst.msk [vmem:[#allocation3 + $0x3c] sm:$0xf] %vm1968, %v1903
        %1985 = vst.msk [vmem:[#allocation3 + $0x40] sm:$0xf] %vm1968, %v1905
        %1986 = vst.msk [vmem:[#allocation3 + $0x44] sm:$0xf] %vm1968, %v1907
        %1987 = vst.msk [vmem:[#allocation3 + $0x48] sm:$0xf] %vm1968, %v1909
        %1988 = vst.msk [vmem:[#allocation3 + $0x4c] sm:$0xf] %vm1968, %v1911
        %1989 = vst.msk [vmem:[#allocation3 + $0x50] sm:$0xf] %vm1968, %v1913
        %1990 = vst.msk [vmem:[#allocation3 + $0x54] sm:$0xf] %vm1968, %v1915
        %1991 = vst.msk [vmem:[#allocation3 + $0x58] sm:$0xf] %vm1968, %v1917
        %1992 = vst.msk [vmem:[#allocation3 + $0x5c] sm:$0xf] %vm1968, %v1919
        %1993 = vst.msk [vmem:[#allocation3 + $0x60] sm:$0xf] %vm1968, %v1921
        %1994 = vst.msk [vmem:[#allocation3 + $0x64] sm:$0xf] %vm1968, %v1923
        %1995 = vst.msk [vmem:[#allocation3 + $0x68] sm:$0xf] %vm1968, %v1925
        %1996 = vst.msk [vmem:[#allocation3 + $0x6c] sm:$0xf] %vm1968, %v1927
        %1997 = vst.msk [vmem:[#allocation3 + $0x70] sm:$0xf] %vm1968, %v1929
        %1998 = vst.msk [vmem:[#allocation3 + $0x74] sm:$0xf] %vm1968, %v1931
        %1999 = vst.msk [vmem:[#allocation3 + $0x78] sm:$0xf] %vm1968, %v1933
        %2000 = vst.msk [vmem:[#allocation3 + $0x7c] sm:$0xf] %vm1968, %v1935
        %v2001 = vld [vmem:[%s1246] sm:$0xe]
        %v2002 = vld [vmem:[%s1246 + $0x4] sm:$0xf]
        %v2003 = vld [vmem:[%s1246 + $0x8] sm:$0x1]
        %v2004 = vld [vmem:[%s1246 + $0xc] sm:$0xe]
        %v2005 = vld [vmem:[%s1246 + $0x10] sm:$0xf]
        %v2006 = vld [vmem:[%s1246 + $0x14] sm:$0x1]
        %v2007 = vld [vmem:[%s1246 + $0x18] sm:$0xe]
        %v2008 = vld [vmem:[%s1246 + $0x1c] sm:$0xf]
        %v2009 = vld [vmem:[%s1246 + $0x20] sm:$0x1]
        %v2010 = vld [vmem:[%s1246 + $0x24] sm:$0xe]
        %v2011 = vld [vmem:[%s1246 + $0x28] sm:$0xf]
        %v2012 = vld [vmem:[%s1246 + $0x2c] sm:$0x1]
        %v2013 = vld [vmem:[%s1246 + $0x30] sm:$0xe]
        %v2014 = vld [vmem:[%s1246 + $0x34] sm:$0xf]
        %v2015 = vld [vmem:[%s1246 + $0x38] sm:$0x1]
        %v2016 = vld [vmem:[%s1246 + $0x3c] sm:$0xe]
        %v2017 = vld [vmem:[%s1246 + $0x40] sm:$0xf]
        %v2018 = vld [vmem:[%s1246 + $0x44] sm:$0x1]
        %v2019 = vld [vmem:[%s1246 + $0x48] sm:$0xe]
        %v2020 = vld [vmem:[%s1246 + $0x4c] sm:$0xf]
        %v2021 = vld [vmem:[%s1246 + $0x50] sm:$0x1]
        %v2022 = vld [vmem:[%s1246 + $0x54] sm:$0xe]
        %v2023 = vld [vmem:[%s1246 + $0x58] sm:$0xf]
        %v2024 = vld [vmem:[%s1246 + $0x5c] sm:$0x1]
        %v2025 = vld [vmem:[%s1246 + $0x60] sm:$0xe]
        %v2026 = vld [vmem:[%s1246 + $0x64] sm:$0xf]
        %v2027 = vld [vmem:[%s1246 + $0x68] sm:$0x1]
        %v2028 = vld [vmem:[%s1246 + $0x6c] sm:$0xe]
        %v2029 = vld [vmem:[%s1246 + $0x70] sm:$0xf]
        %v2030 = vld [vmem:[%s1246 + $0x74] sm:$0x1]
        %v2031 = vld [vmem:[%s1246 + $0x78] sm:$0xe]
        %v2032 = vld [vmem:[%s1246 + $0x7c] sm:$0xf]
        %v2033 = vld [vmem:[%s1246 + $0x80] sm:$0x1]
        %v2034 = vld [vmem:[%s1246 + $0x84] sm:$0xe]
        %v2035 = vld [vmem:[%s1246 + $0x88] sm:$0xf]
        %v2036 = vld [vmem:[%s1246 + $0x8c] sm:$0x1]
        %v2037 = vld [vmem:[%s1246 + $0x90] sm:$0xe]
        %v2038 = vld [vmem:[%s1246 + $0x94] sm:$0xf]
        %v2039 = vld [vmem:[%s1246 + $0x98] sm:$0x1]
        %v2040 = vld [vmem:[%s1246 + $0x9c] sm:$0xe]
        %v2041 = vld [vmem:[%s1246 + $0xa0] sm:$0xf]
        %v2042 = vld [vmem:[%s1246 + $0xa4] sm:$0x1]
        %v2043 = vld [vmem:[%s1246 + $0xa8] sm:$0xe]
        %v2044 = vld [vmem:[%s1246 + $0xac] sm:$0xf]
        %v2045 = vld [vmem:[%s1246 + $0xb0] sm:$0x1]
        %v2046 = vld [vmem:[%s1246 + $0xb4] sm:$0xe]
        %v2047 = vld [vmem:[%s1246 + $0xb8] sm:$0xf]
        %v2048 = vld [vmem:[%s1246 + $0xbc] sm:$0x1]
        %v2097 = vrot.slane %v2001, 5
        %v2098 = vrot.slane %v2097, 4
        %v2099 = vrot.slane %v2002, 5
        %v2100 = vsel %vm1004, %v2098, %v2099
        %v2101 = vrot.slane %v2099, 4
        %v2102 = vrot.slane %v2003, 5
        %v2103 = vsel %vm1004, %v2101, %v2102
        %v2104 = vrot.slane %v2004, 5
        %v2105 = vrot.slane %v2104, 4
        %v2106 = vrot.slane %v2005, 5
        %v2107 = vsel %vm1004, %v2105, %v2106
        %v2108 = vrot.slane %v2106, 4
        %v2109 = vrot.slane %v2006, 5
        %v2110 = vsel %vm1004, %v2108, %v2109
        %v2111 = vrot.slane %v2007, 5
        %v2112 = vrot.slane %v2111, 4
        %v2113 = vrot.slane %v2008, 5
        %v2114 = vsel %vm1004, %v2112, %v2113
        %v2115 = vrot.slane %v2113, 4
        %v2116 = vrot.slane %v2009, 5
        %v2117 = vsel %vm1004, %v2115, %v2116
        %v2118 = vrot.slane %v2010, 5
        %v2119 = vrot.slane %v2118, 4
        %v2120 = vrot.slane %v2011, 5
        %v2121 = vsel %vm1004, %v2119, %v2120
        %v2122 = vrot.slane %v2120, 4
        %v2123 = vrot.slane %v2012, 5
        %v2124 = vsel %vm1004, %v2122, %v2123
        %v2125 = vrot.slane %v2013, 5
        %v2126 = vrot.slane %v2125, 4
        %v2127 = vrot.slane %v2014, 5
        %v2128 = vsel %vm1004, %v2126, %v2127
        %v2129 = vrot.slane %v2127, 4
        %v2130 = vrot.slane %v2015, 5
        %v2131 = vsel %vm1004, %v2129, %v2130
        %v2132 = vrot.slane %v2016, 5
        %v2133 = vrot.slane %v2132, 4
        %v2134 = vrot.slane %v2017, 5
        %v2135 = vsel %vm1004, %v2133, %v2134
        %v2136 = vrot.slane %v2134, 4
        %v2137 = vrot.slane %v2018, 5
        %v2138 = vsel %vm1004, %v2136, %v2137
        %v2139 = vrot.slane %v2019, 5
        %v2140 = vrot.slane %v2139, 4
        %v2141 = vrot.slane %v2020, 5
        %v2142 = vsel %vm1004, %v2140, %v2141
        %v2143 = vrot.slane %v2141, 4
        %v2144 = vrot.slane %v2021, 5
        %v2145 = vsel %vm1004, %v2143, %v2144
        %v2146 = vrot.slane %v2022, 5
        %v2147 = vrot.slane %v2146, 4
        %v2148 = vrot.slane %v2023, 5
        %v2149 = vsel %vm1004, %v2147, %v2148
        %v2150 = vrot.slane %v2148, 4
        %v2151 = vrot.slane %v2024, 5
        %v2152 = vsel %vm1004, %v2150, %v2151
        %v2153 = vrot.slane %v2025, 5
        %v2154 = vrot.slane %v2153, 4
        %v2155 = vrot.slane %v2026, 5
        %v2156 = vsel %vm1004, %v2154, %v2155
        %v2157 = vrot.slane %v2155, 4
        %v2158 = vrot.slane %v2027, 5
        %v2159 = vsel %vm1004, %v2157, %v2158
        %v2160 = vrot.slane %v2028, 5
        %v2161 = vrot.slane %v2160, 4
        %v2162 = vrot.slane %v2029, 5
        %v2163 = vsel %vm1004, %v2161, %v2162
        %v2164 = vrot.slane %v2162, 4
        %v2165 = vrot.slane %v2030, 5
        %v2166 = vsel %vm1004, %v2164, %v2165
        %v2167 = vrot.slane %v2031, 5
        %v2168 = vrot.slane %v2167, 4
        %v2169 = vrot.slane %v2032, 5
        %v2170 = vsel %vm1004, %v2168, %v2169
        %v2171 = vrot.slane %v2169, 4
        %v2172 = vrot.slane %v2033, 5
        %v2173 = vsel %vm1004, %v2171, %v2172
        %v2174 = vrot.slane %v2034, 5
        %v2175 = vrot.slane %v2174, 4
        %v2176 = vrot.slane %v2035, 5
        %v2177 = vsel %vm1004, %v2175, %v2176
        %v2178 = vrot.slane %v2176, 4
        %v2179 = vrot.slane %v2036, 5
        %v2180 = vsel %vm1004, %v2178, %v2179
        %v2181 = vrot.slane %v2037, 5
        %v2182 = vrot.slane %v2181, 4
        %v2183 = vrot.slane %v2038, 5
        %v2184 = vsel %vm1004, %v2182, %v2183
        %v2185 = vrot.slane %v2183, 4
        %v2186 = vrot.slane %v2039, 5
        %v2187 = vsel %vm1004, %v2185, %v2186
        %v2188 = vrot.slane %v2040, 5
        %v2189 = vrot.slane %v2188, 4
        %v2190 = vrot.slane %v2041, 5
        %v2191 = vsel %vm1004, %v2189, %v2190
        %v2192 = vrot.slane %v2190, 4
        %v2193 = vrot.slane %v2042, 5
        %v2194 = vsel %vm1004, %v2192, %v2193
        %v2195 = vrot.slane %v2043, 5
        %v2196 = vrot.slane %v2195, 4
        %v2197 = vrot.slane %v2044, 5
        %v2198 = vsel %vm1004, %v2196, %v2197
        %v2199 = vrot.slane %v2197, 4
        %v2200 = vrot.slane %v2045, 5
        %v2201 = vsel %vm1004, %v2199, %v2200
        %v2202 = vrot.slane %v2046, 5
        %v2203 = vrot.slane %v2202, 4
        %v2204 = vrot.slane %v2047, 5
        %v2205 = vsel %vm1004, %v2203, %v2204
        %v2206 = vrot.slane %v2204, 4
        %v2207 = vrot.slane %v2048, 5
        %v2208 = vsel %vm1004, %v2206, %v2207
        %2209 = vrot.lane.b32.xlu0 %v2100, 40
        %v2210 = vpop.permute.xlu0 %2209
        %2211 = vrot.lane.b32.xlu0 %v2103, 40
        %v2212 = vpop.permute.xlu0 %2211
        %2213 = vrot.lane.b32.xlu0 %v2107, 40
        %v2214 = vpop.permute.xlu0 %2213
        %2215 = vrot.lane.b32.xlu0 %v2110, 40
        %v2216 = vpop.permute.xlu0 %2215
        %2217 = vrot.lane.b32.xlu0 %v2114, 40
        %v2218 = vpop.permute.xlu0 %2217
        %2219 = vrot.lane.b32.xlu0 %v2117, 40
        %v2220 = vpop.permute.xlu0 %2219
        %2221 = vrot.lane.b32.xlu0 %v2121, 40
        %v2222 = vpop.permute.xlu0 %2221
        %2223 = vrot.lane.b32.xlu0 %v2124, 40
        %v2224 = vpop.permute.xlu0 %2223
        %2225 = vrot.lane.b32.xlu0 %v2128, 40
        %v2226 = vpop.permute.xlu0 %2225
        %2227 = vrot.lane.b32.xlu0 %v2131, 40
        %v2228 = vpop.permute.xlu0 %2227
        %2229 = vrot.lane.b32.xlu0 %v2135, 40
        %v2230 = vpop.permute.xlu0 %2229
        %2231 = vrot.lane.b32.xlu0 %v2138, 40
        %v2232 = vpop.permute.xlu0 %2231
        %2233 = vrot.lane.b32.xlu0 %v2142, 40
        %v2234 = vpop.permute.xlu0 %2233
        %2235 = vrot.lane.b32.xlu0 %v2145, 40
        %v2236 = vpop.permute.xlu0 %2235
        %2237 = vrot.lane.b32.xlu0 %v2149, 40
        %v2238 = vpop.permute.xlu0 %2237
        %2239 = vrot.lane.b32.xlu0 %v2152, 40
        %v2240 = vpop.permute.xlu0 %2239
        %2241 = vrot.lane.b32.xlu0 %v2156, 40
        %v2242 = vpop.permute.xlu0 %2241
        %2243 = vrot.lane.b32.xlu0 %v2159, 40
        %v2244 = vpop.permute.xlu0 %2243
        %2245 = vrot.lane.b32.xlu0 %v2163, 40
        %v2246 = vpop.permute.xlu0 %2245
        %2247 = vrot.lane.b32.xlu0 %v2166, 40
        %v2248 = vpop.permute.xlu0 %2247
        %2249 = vrot.lane.b32.xlu0 %v2170, 40
        %v2250 = vpop.permute.xlu0 %2249
        %2251 = vrot.lane.b32.xlu0 %v2173, 40
        %v2252 = vpop.permute.xlu0 %2251
        %2253 = vrot.lane.b32.xlu0 %v2177, 40
        %v2254 = vpop.permute.xlu0 %2253
        %2255 = vrot.lane.b32.xlu0 %v2180, 40
        %v2256 = vpop.permute.xlu0 %2255
        %2257 = vrot.lane.b32.xlu0 %v2184, 40
        %v2258 = vpop.permute.xlu0 %2257
        %2259 = vrot.lane.b32.xlu0 %v2187, 40
        %v2260 = vpop.permute.xlu0 %2259
        %2261 = vrot.lane.b32.xlu0 %v2191, 40
        %v2262 = vpop.permute.xlu0 %2261
        %2263 = vrot.lane.b32.xlu0 %v2194, 40
        %v2264 = vpop.permute.xlu0 %2263
        %2265 = vrot.lane.b32.xlu0 %v2198, 40
        %v2266 = vpop.permute.xlu0 %2265
        %2267 = vrot.lane.b32.xlu0 %v2201, 40
        %v2268 = vpop.permute.xlu0 %2267
        %2269 = vrot.lane.b32.xlu0 %v2205, 40
        %v2270 = vpop.permute.xlu0 %2269
        %2271 = vrot.lane.b32.xlu0 %v2208, 40
        %v2272 = vpop.permute.xlu0 %2271
        %vm2305 = vcmask 388416
        %2306 = vst.msk [vmem:[#allocation3] sm:$0xf] %vm2305, %v2210
        %2307 = vst.msk [vmem:[#allocation3 + $0x4] sm:$0xf] %vm2305, %v2212
        %2308 = vst.msk [vmem:[#allocation3 + $0x8] sm:$0xf] %vm2305, %v2214
        %2309 = vst.msk [vmem:[#allocation3 + $0xc] sm:$0xf] %vm2305, %v2216
        %2310 = vst.msk [vmem:[#allocation3 + $0x10] sm:$0xf] %vm2305, %v2218
        %2311 = vst.msk [vmem:[#allocation3 + $0x14] sm:$0xf] %vm2305, %v2220
        %2312 = vst.msk [vmem:[#allocation3 + $0x18] sm:$0xf] %vm2305, %v2222
        %2313 = vst.msk [vmem:[#allocation3 + $0x1c] sm:$0xf] %vm2305, %v2224
        %2314 = vst.msk [vmem:[#allocation3 + $0x20] sm:$0xf] %vm2305, %v2226
        %2315 = vst.msk [vmem:[#allocation3 + $0x24] sm:$0xf] %vm2305, %v2228
        %2316 = vst.msk [vmem:[#allocation3 + $0x28] sm:$0xf] %vm2305, %v2230
        %2317 = vst.msk [vmem:[#allocation3 + $0x2c] sm:$0xf] %vm2305, %v2232
        %2318 = vst.msk [vmem:[#allocation3 + $0x30] sm:$0xf] %vm2305, %v2234
        %2319 = vst.msk [vmem:[#allocation3 + $0x34] sm:$0xf] %vm2305, %v2236
        %2320 = vst.msk [vmem:[#allocation3 + $0x38] sm:$0xf] %vm2305, %v2238
        %2321 = vst.msk [vmem:[#allocation3 + $0x3c] sm:$0xf] %vm2305, %v2240
        %2322 = vst.msk [vmem:[#allocation3 + $0x40] sm:$0xf] %vm2305, %v2242
        %2323 = vst.msk [vmem:[#allocation3 + $0x44] sm:$0xf] %vm2305, %v2244
        %2324 = vst.msk [vmem:[#allocation3 + $0x48] sm:$0xf] %vm2305, %v2246
        %2325 = vst.msk [vmem:[#allocation3 + $0x4c] sm:$0xf] %vm2305, %v2248
        %2326 = vst.msk [vmem:[#allocation3 + $0x50] sm:$0xf] %vm2305, %v2250
        %2327 = vst.msk [vmem:[#allocation3 + $0x54] sm:$0xf] %vm2305, %v2252
        %2328 = vst.msk [vmem:[#allocation3 + $0x58] sm:$0xf] %vm2305, %v2254
        %2329 = vst.msk [vmem:[#allocation3 + $0x5c] sm:$0xf] %vm2305, %v2256
        %2330 = vst.msk [vmem:[#allocation3 + $0x60] sm:$0xf] %vm2305, %v2258
        %2331 = vst.msk [vmem:[#allocation3 + $0x64] sm:$0xf] %vm2305, %v2260
        %2332 = vst.msk [vmem:[#allocation3 + $0x68] sm:$0xf] %vm2305, %v2262
        %2333 = vst.msk [vmem:[#allocation3 + $0x6c] sm:$0xf] %vm2305, %v2264
        %2334 = vst.msk [vmem:[#allocation3 + $0x70] sm:$0xf] %vm2305, %v2266
        %2335 = vst.msk [vmem:[#allocation3 + $0x74] sm:$0xf] %vm2305, %v2268
        %2336 = vst.msk [vmem:[#allocation3 + $0x78] sm:$0xf] %vm2305, %v2270
        %2337 = vst.msk [vmem:[#allocation3 + $0x7c] sm:$0xf] %vm2305, %v2272
        %s2338 = scalar_lea.vmem %s276, 24
        %v2339 = vld [vmem:[%s2338] sm:$0xf]
        %v2340 = vld [vmem:[%s2338 + $0x4] sm:$0xf]
        %v2341 = vld [vmem:[%s2338 + $0xc] sm:$0xf]
        %v2342 = vld [vmem:[%s2338 + $0x10] sm:$0xf]
        %v2343 = vld [vmem:[%s2338 + $0x18] sm:$0xf]
        %v2344 = vld [vmem:[%s2338 + $0x1c] sm:$0xf]
        %v2345 = vld [vmem:[%s2338 + $0x24] sm:$0xf]
        %v2346 = vld [vmem:[%s2338 + $0x28] sm:$0xf]
        %v2347 = vld [vmem:[%s2338 + $0x30] sm:$0xf]
        %v2348 = vld [vmem:[%s2338 + $0x34] sm:$0xf]
        %v2349 = vld [vmem:[%s2338 + $0x3c] sm:$0xf]
        %v2350 = vld [vmem:[%s2338 + $0x40] sm:$0xf]
        %v2351 = vld [vmem:[%s2338 + $0x48] sm:$0xf]
        %v2352 = vld [vmem:[%s2338 + $0x4c] sm:$0xf]
        %v2353 = vld [vmem:[%s2338 + $0x54] sm:$0xf]
        %v2354 = vld [vmem:[%s2338 + $0x58] sm:$0xf]
        %v2355 = vld [vmem:[%s2338 + $0x60] sm:$0xf]
        %v2356 = vld [vmem:[%s2338 + $0x64] sm:$0xf]
        %v2357 = vld [vmem:[%s2338 + $0x6c] sm:$0xf]
        %v2358 = vld [vmem:[%s2338 + $0x70] sm:$0xf]
        %v2359 = vld [vmem:[%s2338 + $0x78] sm:$0xf]
        %v2360 = vld [vmem:[%s2338 + $0x7c] sm:$0xf]
        %v2361 = vld [vmem:[%s2338 + $0x84] sm:$0xf]
        %v2362 = vld [vmem:[%s2338 + $0x88] sm:$0xf]
        %v2363 = vld [vmem:[%s2338 + $0x90] sm:$0xf]
        %v2364 = vld [vmem:[%s2338 + $0x94] sm:$0xf]
        %v2365 = vld [vmem:[%s2338 + $0x9c] sm:$0xf]
        %v2366 = vld [vmem:[%s2338 + $0xa0] sm:$0xf]
        %v2367 = vld [vmem:[%s2338 + $0xa8] sm:$0xf]
        %v2368 = vld [vmem:[%s2338 + $0xac] sm:$0xf]
        %v2369 = vld [vmem:[%s2338 + $0xb4] sm:$0xf]
        %v2370 = vld [vmem:[%s2338 + $0xb8] sm:$0xf]
        %2403 = vrot.lane.b32.xlu0 %v2339, 48
        %v2404 = vpop.permute.xlu0 %2403
        %2405 = vrot.lane.b32.xlu0 %v2340, 48
        %v2406 = vpop.permute.xlu0 %2405
        %2407 = vrot.lane.b32.xlu0 %v2341, 48
        %v2408 = vpop.permute.xlu0 %2407
        %2409 = vrot.lane.b32.xlu0 %v2342, 48
        %v2410 = vpop.permute.xlu0 %2409
        %2411 = vrot.lane.b32.xlu0 %v2343, 48
        %v2412 = vpop.permute.xlu0 %2411
        %2413 = vrot.lane.b32.xlu0 %v2344, 48
        %v2414 = vpop.permute.xlu0 %2413
        %2415 = vrot.lane.b32.xlu0 %v2345, 48
        %v2416 = vpop.permute.xlu0 %2415
        %2417 = vrot.lane.b32.xlu0 %v2346, 48
        %v2418 = vpop.permute.xlu0 %2417
        %2419 = vrot.lane.b32.xlu0 %v2347, 48
        %v2420 = vpop.permute.xlu0 %2419
        %2421 = vrot.lane.b32.xlu0 %v2348, 48
        %v2422 = vpop.permute.xlu0 %2421
        %2423 = vrot.lane.b32.xlu0 %v2349, 48
        %v2424 = vpop.permute.xlu0 %2423
        %2425 = vrot.lane.b32.xlu0 %v2350, 48
        %v2426 = vpop.permute.xlu0 %2425
        %2427 = vrot.lane.b32.xlu0 %v2351, 48
        %v2428 = vpop.permute.xlu0 %2427
        %2429 = vrot.lane.b32.xlu0 %v2352, 48
        %v2430 = vpop.permute.xlu0 %2429
        %2431 = vrot.lane.b32.xlu0 %v2353, 48
        %v2432 = vpop.permute.xlu0 %2431
        %2433 = vrot.lane.b32.xlu0 %v2354, 48
        %v2434 = vpop.permute.xlu0 %2433
        %2435 = vrot.lane.b32.xlu0 %v2355, 48
        %v2436 = vpop.permute.xlu0 %2435
        %2437 = vrot.lane.b32.xlu0 %v2356, 48
        %v2438 = vpop.permute.xlu0 %2437
        %2439 = vrot.lane.b32.xlu0 %v2357, 48
        %v2440 = vpop.permute.xlu0 %2439
        %2441 = vrot.lane.b32.xlu0 %v2358, 48
        %v2442 = vpop.permute.xlu0 %2441
        %2443 = vrot.lane.b32.xlu0 %v2359, 48
        %v2444 = vpop.permute.xlu0 %2443
        %2445 = vrot.lane.b32.xlu0 %v2360, 48
        %v2446 = vpop.permute.xlu0 %2445
        %2447 = vrot.lane.b32.xlu0 %v2361, 48
        %v2448 = vpop.permute.xlu0 %2447
        %2449 = vrot.lane.b32.xlu0 %v2362, 48
        %v2450 = vpop.permute.xlu0 %2449
        %2451 = vrot.lane.b32.xlu0 %v2363, 48
        %v2452 = vpop.permute.xlu0 %2451
        %2453 = vrot.lane.b32.xlu0 %v2364, 48
        %v2454 = vpop.permute.xlu0 %2453
        %2455 = vrot.lane.b32.xlu0 %v2365, 48
        %v2456 = vpop.permute.xlu0 %2455
        %2457 = vrot.lane.b32.xlu0 %v2366, 48
        %v2458 = vpop.permute.xlu0 %2457
        %2459 = vrot.lane.b32.xlu0 %v2367, 48
        %v2460 = vpop.permute.xlu0 %2459
        %2461 = vrot.lane.b32.xlu0 %v2368, 48
        %v2462 = vpop.permute.xlu0 %2461
        %2463 = vrot.lane.b32.xlu0 %v2369, 48
        %v2464 = vpop.permute.xlu0 %2463
        %2465 = vrot.lane.b32.xlu0 %v2370, 48
        %v2466 = vpop.permute.xlu0 %2465
        %vm2499 = vcmask 454016
        %2500 = vst.msk [vmem:[#allocation3] sm:$0xf] %vm2499, %v2404
        %2501 = vst.msk [vmem:[#allocation3 + $0x4] sm:$0xf] %vm2499, %v2406
        %2502 = vst.msk [vmem:[#allocation3 + $0x8] sm:$0xf] %vm2499, %v2408
        %2503 = vst.msk [vmem:[#allocation3 + $0xc] sm:$0xf] %vm2499, %v2410
        %2504 = vst.msk [vmem:[#allocation3 + $0x10] sm:$0xf] %vm2499, %v2412
        %2505 = vst.msk [vmem:[#allocation3 + $0x14] sm:$0xf] %vm2499, %v2414
        %2506 = vst.msk [vmem:[#allocation3 + $0x18] sm:$0xf] %vm2499, %v2416
        %2507 = vst.msk [vmem:[#allocation3 + $0x1c] sm:$0xf] %vm2499, %v2418
        %2508 = vst.msk [vmem:[#allocation3 + $0x20] sm:$0xf] %vm2499, %v2420
        %2509 = vst.msk [vmem:[#allocation3 + $0x24] sm:$0xf] %vm2499, %v2422
        %2510 = vst.msk [vmem:[#allocation3 + $0x28] sm:$0xf] %vm2499, %v2424
        %2511 = vst.msk [vmem:[#allocation3 + $0x2c] sm:$0xf] %vm2499, %v2426
        %2512 = vst.msk [vmem:[#allocation3 + $0x30] sm:$0xf] %vm2499, %v2428
        %2513 = vst.msk [vmem:[#allocation3 + $0x34] sm:$0xf] %vm2499, %v2430
        %2514 = vst.msk [vmem:[#allocation3 + $0x38] sm:$0xf] %vm2499, %v2432
        %2515 = vst.msk [vmem:[#allocation3 + $0x3c] sm:$0xf] %vm2499, %v2434
        %2516 = vst.msk [vmem:[#allocation3 + $0x40] sm:$0xf] %vm2499, %v2436
        %2517 = vst.msk [vmem:[#allocation3 + $0x44] sm:$0xf] %vm2499, %v2438
        %2518 = vst.msk [vmem:[#allocation3 + $0x48] sm:$0xf] %vm2499, %v2440
        %2519 = vst.msk [vmem:[#allocation3 + $0x4c] sm:$0xf] %vm2499, %v2442
        %2520 = vst.msk [vmem:[#allocation3 + $0x50] sm:$0xf] %vm2499, %v2444
        %2521 = vst.msk [vmem:[#allocation3 + $0x54] sm:$0xf] %vm2499, %v2446
        %2522 = vst.msk [vmem:[#allocation3 + $0x58] sm:$0xf] %vm2499, %v2448
        %2523 = vst.msk [vmem:[#allocation3 + $0x5c] sm:$0xf] %vm2499, %v2450
        %2524 = vst.msk [vmem:[#allocation3 + $0x60] sm:$0xf] %vm2499, %v2452
        %2525 = vst.msk [vmem:[#allocation3 + $0x64] sm:$0xf] %vm2499, %v2454
        %2526 = vst.msk [vmem:[#allocation3 + $0x68] sm:$0xf] %vm2499, %v2456
        %2527 = vst.msk [vmem:[#allocation3 + $0x6c] sm:$0xf] %vm2499, %v2458
        %2528 = vst.msk [vmem:[#allocation3 + $0x70] sm:$0xf] %vm2499, %v2460
        %2529 = vst.msk [vmem:[#allocation3 + $0x74] sm:$0xf] %vm2499, %v2462
        %2530 = vst.msk [vmem:[#allocation3 + $0x78] sm:$0xf] %vm2499, %v2464
        %2531 = vst.msk [vmem:[#allocation3 + $0x7c] sm:$0xf] %vm2499, %v2466
        %v2532 = vld [vmem:[%s2338] sm:$0xf]
        %v2533 = vld [vmem:[%s2338 + $0x4] sm:$0xf]
        %v2534 = vld [vmem:[%s2338 + $0x8] sm:$0x1]
        %v2535 = vld [vmem:[%s2338 + $0xc] sm:$0xf]
        %v2536 = vld [vmem:[%s2338 + $0x10] sm:$0xf]
        %v2537 = vld [vmem:[%s2338 + $0x14] sm:$0x1]
        %v2538 = vld [vmem:[%s2338 + $0x18] sm:$0xf]
        %v2539 = vld [vmem:[%s2338 + $0x1c] sm:$0xf]
        %v2540 = vld [vmem:[%s2338 + $0x20] sm:$0x1]
        %v2541 = vld [vmem:[%s2338 + $0x24] sm:$0xf]
        %v2542 = vld [vmem:[%s2338 + $0x28] sm:$0xf]
        %v2543 = vld [vmem:[%s2338 + $0x2c] sm:$0x1]
        %v2544 = vld [vmem:[%s2338 + $0x30] sm:$0xf]
        %v2545 = vld [vmem:[%s2338 + $0x34] sm:$0xf]
        %v2546 = vld [vmem:[%s2338 + $0x38] sm:$0x1]
        %v2547 = vld [vmem:[%s2338 + $0x3c] sm:$0xf]
        %v2548 = vld [vmem:[%s2338 + $0x40] sm:$0xf]
        %v2549 = vld [vmem:[%s2338 + $0x44] sm:$0x1]
        %v2550 = vld [vmem:[%s2338 + $0x48] sm:$0xf]
        %v2551 = vld [vmem:[%s2338 + $0x4c] sm:$0xf]
        %v2552 = vld [vmem:[%s2338 + $0x50] sm:$0x1]
        %v2553 = vld [vmem:[%s2338 + $0x54] sm:$0xf]
        %v2554 = vld [vmem:[%s2338 + $0x58] sm:$0xf]
        %v2555 = vld [vmem:[%s2338 + $0x5c] sm:$0x1]
        %v2556 = vld [vmem:[%s2338 + $0x60] sm:$0xf]
        %v2557 = vld [vmem:[%s2338 + $0x64] sm:$0xf]
        %v2558 = vld [vmem:[%s2338 + $0x68] sm:$0x1]
        %v2559 = vld [vmem:[%s2338 + $0x6c] sm:$0xf]
        %v2560 = vld [vmem:[%s2338 + $0x70] sm:$0xf]
        %v2561 = vld [vmem:[%s2338 + $0x74] sm:$0x1]
        %v2562 = vld [vmem:[%s2338 + $0x78] sm:$0xf]
        %v2563 = vld [vmem:[%s2338 + $0x7c] sm:$0xf]
        %v2564 = vld [vmem:[%s2338 + $0x80] sm:$0x1]
        %v2565 = vld [vmem:[%s2338 + $0x84] sm:$0xf]
        %v2566 = vld [vmem:[%s2338 + $0x88] sm:$0xf]
        %v2567 = vld [vmem:[%s2338 + $0x8c] sm:$0x1]
        %v2568 = vld [vmem:[%s2338 + $0x90] sm:$0xf]
        %v2569 = vld [vmem:[%s2338 + $0x94] sm:$0xf]
        %v2570 = vld [vmem:[%s2338 + $0x98] sm:$0x1]
        %v2571 = vld [vmem:[%s2338 + $0x9c] sm:$0xf]
        %v2572 = vld [vmem:[%s2338 + $0xa0] sm:$0xf]
        %v2573 = vld [vmem:[%s2338 + $0xa4] sm:$0x1]
        %v2574 = vld [vmem:[%s2338 + $0xa8] sm:$0xf]
        %v2575 = vld [vmem:[%s2338 + $0xac] sm:$0xf]
        %v2576 = vld [vmem:[%s2338 + $0xb0] sm:$0x1]
        %v2577 = vld [vmem:[%s2338 + $0xb4] sm:$0xf]
        %v2578 = vld [vmem:[%s2338 + $0xb8] sm:$0xf]
        %v2579 = vld [vmem:[%s2338 + $0xbc] sm:$0x1]
        %v2581 = vshrl.u32 %v2532, 16
        %v2583 = vrot.slane %v2581, 4
        %v2584 = vshll.u32 %v2532, 16
        %v2586 = vrot.slane %v2584, 5
        %v2587 = vor.u32 %v2583, %v2586
        %v2588 = vrot.slane %v2587, 4
        %v2590 = vshll.u32 %v2533, 16
        %v2592 = vrot.slane %v2590, 5
        %v2593 = vsel %vm392, %v2588, %v2592
        %v2594 = vshrl.u32 %v2533, 16
        %v2596 = vrot.slane %v2594, 4
        %v2597 = vor.u32 %v2596, %v2592
        %v2598 = vrot.slane %v2597, 4
        %v2600 = vshll.u32 %v2534, 16
        %v2602 = vrot.slane %v2600, 5
        %v2603 = vsel %vm392, %v2598, %v2602
        %v2605 = vshrl.u32 %v2535, 16
        %v2607 = vrot.slane %v2605, 4
        %v2608 = vshll.u32 %v2535, 16
        %v2610 = vrot.slane %v2608, 5
        %v2611 = vor.u32 %v2607, %v2610
        %v2612 = vrot.slane %v2611, 4
        %v2614 = vshll.u32 %v2536, 16
        %v2616 = vrot.slane %v2614, 5
        %v2617 = vsel %vm392, %v2612, %v2616
        %v2618 = vshrl.u32 %v2536, 16
        %v2620 = vrot.slane %v2618, 4
        %v2621 = vor.u32 %v2620, %v2616
        %v2622 = vrot.slane %v2621, 4
        %v2624 = vshll.u32 %v2537, 16
        %v2626 = vrot.slane %v2624, 5
        %v2627 = vsel %vm392, %v2622, %v2626
        %v2629 = vshrl.u32 %v2538, 16
        %v2631 = vrot.slane %v2629, 4
        %v2632 = vshll.u32 %v2538, 16
        %v2634 = vrot.slane %v2632, 5
        %v2635 = vor.u32 %v2631, %v2634
        %v2636 = vrot.slane %v2635, 4
        %v2638 = vshll.u32 %v2539, 16
        %v2640 = vrot.slane %v2638, 5
        %v2641 = vsel %vm392, %v2636, %v2640
        %v2642 = vshrl.u32 %v2539, 16
        %v2644 = vrot.slane %v2642, 4
        %v2645 = vor.u32 %v2644, %v2640
        %v2646 = vrot.slane %v2645, 4
        %v2648 = vshll.u32 %v2540, 16
        %v2650 = vrot.slane %v2648, 5
        %v2651 = vsel %vm392, %v2646, %v2650
        %v2653 = vshrl.u32 %v2541, 16
        %v2655 = vrot.slane %v2653, 4
        %v2656 = vshll.u32 %v2541, 16
        %v2658 = vrot.slane %v2656, 5
        %v2659 = vor.u32 %v2655, %v2658
        %v2660 = vrot.slane %v2659, 4
        %v2662 = vshll.u32 %v2542, 16
        %v2664 = vrot.slane %v2662, 5
        %v2665 = vsel %vm392, %v2660, %v2664
        %v2666 = vshrl.u32 %v2542, 16
        %v2668 = vrot.slane %v2666, 4
        %v2669 = vor.u32 %v2668, %v2664
        %v2670 = vrot.slane %v2669, 4
        %v2672 = vshll.u32 %v2543, 16
        %v2674 = vrot.slane %v2672, 5
        %v2675 = vsel %vm392, %v2670, %v2674
        %v2677 = vshrl.u32 %v2544, 16
        %v2679 = vrot.slane %v2677, 4
        %v2680 = vshll.u32 %v2544, 16
        %v2682 = vrot.slane %v2680, 5
        %v2683 = vor.u32 %v2679, %v2682
        %v2684 = vrot.slane %v2683, 4
        %v2686 = vshll.u32 %v2545, 16
        %v2688 = vrot.slane %v2686, 5
        %v2689 = vsel %vm392, %v2684, %v2688
        %v2690 = vshrl.u32 %v2545, 16
        %v2692 = vrot.slane %v2690, 4
        %v2693 = vor.u32 %v2692, %v2688
        %v2694 = vrot.slane %v2693, 4
        %v2696 = vshll.u32 %v2546, 16
        %v2698 = vrot.slane %v2696, 5
        %v2699 = vsel %vm392, %v2694, %v2698
        %v2701 = vshrl.u32 %v2547, 16
        %v2703 = vrot.slane %v2701, 4
        %v2704 = vshll.u32 %v2547, 16
        %v2706 = vrot.slane %v2704, 5
        %v2707 = vor.u32 %v2703, %v2706
        %v2708 = vrot.slane %v2707, 4
        %v2710 = vshll.u32 %v2548, 16
        %v2712 = vrot.slane %v2710, 5
        %v2713 = vsel %vm392, %v2708, %v2712
        %v2714 = vshrl.u32 %v2548, 16
        %v2716 = vrot.slane %v2714, 4
        %v2717 = vor.u32 %v2716, %v2712
        %v2718 = vrot.slane %v2717, 4
        %v2720 = vshll.u32 %v2549, 16
        %v2722 = vrot.slane %v2720, 5
        %v2723 = vsel %vm392, %v2718, %v2722
        %v2725 = vshrl.u32 %v2550, 16
        %v2727 = vrot.slane %v2725, 4
        %v2728 = vshll.u32 %v2550, 16
        %v2730 = vrot.slane %v2728, 5
        %v2731 = vor.u32 %v2727, %v2730
        %v2732 = vrot.slane %v2731, 4
        %v2734 = vshll.u32 %v2551, 16
        %v2736 = vrot.slane %v2734, 5
        %v2737 = vsel %vm392, %v2732, %v2736
        %v2738 = vshrl.u32 %v2551, 16
        %v2740 = vrot.slane %v2738, 4
        %v2741 = vor.u32 %v2740, %v2736
        %v2742 = vrot.slane %v2741, 4
        %v2744 = vshll.u32 %v2552, 16
        %v2746 = vrot.slane %v2744, 5
        %v2747 = vsel %vm392, %v2742, %v2746
        %v2749 = vshrl.u32 %v2553, 16
        %v2751 = vrot.slane %v2749, 4
        %v2752 = vshll.u32 %v2553, 16
        %v2754 = vrot.slane %v2752, 5
        %v2755 = vor.u32 %v2751, %v2754
        %v2756 = vrot.slane %v2755, 4
        %v2758 = vshll.u32 %v2554, 16
        %v2760 = vrot.slane %v2758, 5
        %v2761 = vsel %vm392, %v2756, %v2760
        %v2762 = vshrl.u32 %v2554, 16
        %v2764 = vrot.slane %v2762, 4
        %v2765 = vor.u32 %v2764, %v2760
        %v2766 = vrot.slane %v2765, 4
        %v2768 = vshll.u32 %v2555, 16
        %v2770 = vrot.slane %v2768, 5
        %v2771 = vsel %vm392, %v2766, %v2770
        %v2773 = vshrl.u32 %v2556, 16
        %v2775 = vrot.slane %v2773, 4
        %v2776 = vshll.u32 %v2556, 16
        %v2778 = vrot.slane %v2776, 5
        %v2779 = vor.u32 %v2775, %v2778
        %v2780 = vrot.slane %v2779, 4
        %v2782 = vshll.u32 %v2557, 16
        %v2784 = vrot.slane %v2782, 5
        %v2785 = vsel %vm392, %v2780, %v2784
        %v2786 = vshrl.u32 %v2557, 16
        %v2788 = vrot.slane %v2786, 4
        %v2789 = vor.u32 %v2788, %v2784
        %v2790 = vrot.slane %v2789, 4
        %v2792 = vshll.u32 %v2558, 16
        %v2794 = vrot.slane %v2792, 5
        %v2795 = vsel %vm392, %v2790, %v2794
        %v2797 = vshrl.u32 %v2559, 16
        %v2799 = vrot.slane %v2797, 4
        %v2800 = vshll.u32 %v2559, 16
        %v2802 = vrot.slane %v2800, 5
        %v2803 = vor.u32 %v2799, %v2802
        %v2804 = vrot.slane %v2803, 4
        %v2806 = vshll.u32 %v2560, 16
        %v2808 = vrot.slane %v2806, 5
        %v2809 = vsel %vm392, %v2804, %v2808
        %v2810 = vshrl.u32 %v2560, 16
        %v2812 = vrot.slane %v2810, 4
        %v2813 = vor.u32 %v2812, %v2808
        %v2814 = vrot.slane %v2813, 4
        %v2816 = vshll.u32 %v2561, 16
        %v2818 = vrot.slane %v2816, 5
        %v2819 = vsel %vm392, %v2814, %v2818
        %v2821 = vshrl.u32 %v2562, 16
        %v2823 = vrot.slane %v2821, 4
        %v2824 = vshll.u32 %v2562, 16
        %v2826 = vrot.slane %v2824, 5
        %v2827 = vor.u32 %v2823, %v2826
        %v2828 = vrot.slane %v2827, 4
        %v2830 = vshll.u32 %v2563, 16
        %v2832 = vrot.slane %v2830, 5
        %v2833 = vsel %vm392, %v2828, %v2832
        %v2834 = vshrl.u32 %v2563, 16
        %v2836 = vrot.slane %v2834, 4
        %v2837 = vor.u32 %v2836, %v2832
        %v2838 = vrot.slane %v2837, 4
        %v2840 = vshll.u32 %v2564, 16
        %v2842 = vrot.slane %v2840, 5
        %v2843 = vsel %vm392, %v2838, %v2842
        %v2845 = vshrl.u32 %v2565, 16
        %v2847 = vrot.slane %v2845, 4
        %v2848 = vshll.u32 %v2565, 16
        %v2850 = vrot.slane %v2848, 5
        %v2851 = vor.u32 %v2847, %v2850
        %v2852 = vrot.slane %v2851, 4
        %v2854 = vshll.u32 %v2566, 16
        %v2856 = vrot.slane %v2854, 5
        %v2857 = vsel %vm392, %v2852, %v2856
        %v2858 = vshrl.u32 %v2566, 16
        %v2860 = vrot.slane %v2858, 4
        %v2861 = vor.u32 %v2860, %v2856
        %v2862 = vrot.slane %v2861, 4
        %v2864 = vshll.u32 %v2567, 16
        %v2866 = vrot.slane %v2864, 5
        %v2867 = vsel %vm392, %v2862, %v2866
        %v2869 = vshrl.u32 %v2568, 16
        %v2871 = vrot.slane %v2869, 4
        %v2872 = vshll.u32 %v2568, 16
        %v2874 = vrot.slane %v2872, 5
        %v2875 = vor.u32 %v2871, %v2874
        %v2876 = vrot.slane %v2875, 4
        %v2878 = vshll.u32 %v2569, 16
        %v2880 = vrot.slane %v2878, 5
        %v2881 = vsel %vm392, %v2876, %v2880
        %v2882 = vshrl.u32 %v2569, 16
        %v2884 = vrot.slane %v2882, 4
        %v2885 = vor.u32 %v2884, %v2880
        %v2886 = vrot.slane %v2885, 4
        %v2888 = vshll.u32 %v2570, 16
        %v2890 = vrot.slane %v2888, 5
        %v2891 = vsel %vm392, %v2886, %v2890
        %v2893 = vshrl.u32 %v2571, 16
        %v2895 = vrot.slane %v2893, 4
        %v2896 = vshll.u32 %v2571, 16
        %v2898 = vrot.slane %v2896, 5
        %v2899 = vor.u32 %v2895, %v2898
        %v2900 = vrot.slane %v2899, 4
        %v2902 = vshll.u32 %v2572, 16
        %v2904 = vrot.slane %v2902, 5
        %v2905 = vsel %vm392, %v2900, %v2904
        %v2906 = vshrl.u32 %v2572, 16
        %v2908 = vrot.slane %v2906, 4
        %v2909 = vor.u32 %v2908, %v2904
        %v2910 = vrot.slane %v2909, 4
        %v2912 = vshll.u32 %v2573, 16
        %v2914 = vrot.slane %v2912, 5
        %v2915 = vsel %vm392, %v2910, %v2914
        %v2917 = vshrl.u32 %v2574, 16
        %v2919 = vrot.slane %v2917, 4
        %v2920 = vshll.u32 %v2574, 16
        %v2922 = vrot.slane %v2920, 5
        %v2923 = vor.u32 %v2919, %v2922
        %v2924 = vrot.slane %v2923, 4
        %v2926 = vshll.u32 %v2575, 16
        %v2928 = vrot.slane %v2926, 5
        %v2929 = vsel %vm392, %v2924, %v2928
        %v2930 = vshrl.u32 %v2575, 16
        %v2932 = vrot.slane %v2930, 4
        %v2933 = vor.u32 %v2932, %v2928
        %v2934 = vrot.slane %v2933, 4
        %v2936 = vshll.u32 %v2576, 16
        %v2938 = vrot.slane %v2936, 5
        %v2939 = vsel %vm392, %v2934, %v2938
        %v2941 = vshrl.u32 %v2577, 16
        %v2943 = vrot.slane %v2941, 4
        %v2944 = vshll.u32 %v2577, 16
        %v2946 = vrot.slane %v2944, 5
        %v2947 = vor.u32 %v2943, %v2946
        %v2948 = vrot.slane %v2947, 4
        %v2950 = vshll.u32 %v2578, 16
        %v2952 = vrot.slane %v2950, 5
        %v2953 = vsel %vm392, %v2948, %v2952
        %v2954 = vshrl.u32 %v2578, 16
        %v2956 = vrot.slane %v2954, 4
        %v2957 = vor.u32 %v2956, %v2952
        %v2958 = vrot.slane %v2957, 4
        %v2960 = vshll.u32 %v2579, 16
        %v2962 = vrot.slane %v2960, 5
        %v2963 = vsel %vm392, %v2958, %v2962
        %2964 = vrot.lane.b32.xlu0 %v2593, 56
        %v2965 = vpop.permute.xlu0 %2964
        %2966 = vrot.lane.b32.xlu0 %v2603, 56
        %v2967 = vpop.permute.xlu0 %2966
        %2968 = vrot.lane.b32.xlu0 %v2617, 56
        %v2969 = vpop.permute.xlu0 %2968
        %2970 = vrot.lane.b32.xlu0 %v2627, 56
        %v2971 = vpop.permute.xlu0 %2970
        %2972 = vrot.lane.b32.xlu0 %v2641, 56
        %v2973 = vpop.permute.xlu0 %2972
        %2974 = vrot.lane.b32.xlu0 %v2651, 56
        %v2975 = vpop.permute.xlu0 %2974
        %2976 = vrot.lane.b32.xlu0 %v2665, 56
        %v2977 = vpop.permute.xlu0 %2976
        %2978 = vrot.lane.b32.xlu0 %v2675, 56
        %v2979 = vpop.permute.xlu0 %2978
        %2980 = vrot.lane.b32.xlu0 %v2689, 56
        %v2981 = vpop.permute.xlu0 %2980
        %2982 = vrot.lane.b32.xlu0 %v2699, 56
        %v2983 = vpop.permute.xlu0 %2982
        %2984 = vrot.lane.b32.xlu0 %v2713, 56
        %v2985 = vpop.permute.xlu0 %2984
        %2986 = vrot.lane.b32.xlu0 %v2723, 56
        %v2987 = vpop.permute.xlu0 %2986
        %2988 = vrot.lane.b32.xlu0 %v2737, 56
        %v2989 = vpop.permute.xlu0 %2988
        %2990 = vrot.lane.b32.xlu0 %v2747, 56
        %v2991 = vpop.permute.xlu0 %2990
        %2992 = vrot.lane.b32.xlu0 %v2761, 56
        %v2993 = vpop.permute.xlu0 %2992
        %2994 = vrot.lane.b32.xlu0 %v2771, 56
        %v2995 = vpop.permute.xlu0 %2994
        %2996 = vrot.lane.b32.xlu0 %v2785, 56
        %v2997 = vpop.permute.xlu0 %2996
        %2998 = vrot.lane.b32.xlu0 %v2795, 56
        %v2999 = vpop.permute.xlu0 %2998
        %3000 = vrot.lane.b32.xlu0 %v2809, 56
        %v3001 = vpop.permute.xlu0 %3000
        %3002 = vrot.lane.b32.xlu0 %v2819, 56
        %v3003 = vpop.permute.xlu0 %3002
        %3004 = vrot.lane.b32.xlu0 %v2833, 56
        %v3005 = vpop.permute.xlu0 %3004
        %3006 = vrot.lane.b32.xlu0 %v2843, 56
        %v3007 = vpop.permute.xlu0 %3006
        %3008 = vrot.lane.b32.xlu0 %v2857, 56
        %v3009 = vpop.permute.xlu0 %3008
        %3010 = vrot.lane.b32.xlu0 %v2867, 56
        %v3011 = vpop.permute.xlu0 %3010
        %3012 = vrot.lane.b32.xlu0 %v2881, 56
        %v3013 = vpop.permute.xlu0 %3012
        %3014 = vrot.lane.b32.xlu0 %v2891, 56
        %v3015 = vpop.permute.xlu0 %3014
        %3016 = vrot.lane.b32.xlu0 %v2905, 56
        %v3017 = vpop.permute.xlu0 %3016
        %3018 = vrot.lane.b32.xlu0 %v2915, 56
        %v3019 = vpop.permute.xlu0 %3018
        %3020 = vrot.lane.b32.xlu0 %v2929, 56
        %v3021 = vpop.permute.xlu0 %3020
        %3022 = vrot.lane.b32.xlu0 %v2939, 56
        %v3023 = vpop.permute.xlu0 %3022
        %3024 = vrot.lane.b32.xlu0 %v2953, 56
        %v3025 = vpop.permute.xlu0 %3024
        %3026 = vrot.lane.b32.xlu0 %v2963, 56
        %v3027 = vpop.permute.xlu0 %3026
        %vm3060 = vcmask 519616
        %3061 = vst.msk [vmem:[#allocation3] sm:$0xf] %vm3060, %v2965
        %3062 = vst.msk [vmem:[#allocation3 + $0x4] sm:$0xf] %vm3060, %v2967
        %3063 = vst.msk [vmem:[#allocation3 + $0x8] sm:$0xf] %vm3060, %v2969
        %3064 = vst.msk [vmem:[#allocation3 + $0xc] sm:$0xf] %vm3060, %v2971
        %3065 = vst.msk [vmem:[#allocation3 + $0x10] sm:$0xf] %vm3060, %v2973
        %3066 = vst.msk [vmem:[#allocation3 + $0x14] sm:$0xf] %vm3060, %v2975
        %3067 = vst.msk [vmem:[#allocation3 + $0x18] sm:$0xf] %vm3060, %v2977
        %3068 = vst.msk [vmem:[#allocation3 + $0x1c] sm:$0xf] %vm3060, %v2979
        %3069 = vst.msk [vmem:[#allocation3 + $0x20] sm:$0xf] %vm3060, %v2981
        %3070 = vst.msk [vmem:[#allocation3 + $0x24] sm:$0xf] %vm3060, %v2983
        %3071 = vst.msk [vmem:[#allocation3 + $0x28] sm:$0xf] %vm3060, %v2985
        %3072 = vst.msk [vmem:[#allocation3 + $0x2c] sm:$0xf] %vm3060, %v2987
        %3073 = vst.msk [vmem:[#allocation3 + $0x30] sm:$0xf] %vm3060, %v2989
        %3074 = vst.msk [vmem:[#allocation3 + $0x34] sm:$0xf] %vm3060, %v2991
        %3075 = vst.msk [vmem:[#allocation3 + $0x38] sm:$0xf] %vm3060, %v2993
        %3076 = vst.msk [vmem:[#allocation3 + $0x3c] sm:$0xf] %vm3060, %v2995
        %3077 = vst.msk [vmem:[#allocation3 + $0x40] sm:$0xf] %vm3060, %v2997
        %3078 = vst.msk [vmem:[#allocation3 + $0x44] sm:$0xf] %vm3060, %v2999
        %3079 = vst.msk [vmem:[#allocation3 + $0x48] sm:$0xf] %vm3060, %v3001
        %3080 = vst.msk [vmem:[#allocation3 + $0x4c] sm:$0xf] %vm3060, %v3003
        %3081 = vst.msk [vmem:[#allocation3 + $0x50] sm:$0xf] %vm3060, %v3005
        %3082 = vst.msk [vmem:[#allocation3 + $0x54] sm:$0xf] %vm3060, %v3007
        %3083 = vst.msk [vmem:[#allocation3 + $0x58] sm:$0xf] %vm3060, %v3009
        %3084 = vst.msk [vmem:[#allocation3 + $0x5c] sm:$0xf] %vm3060, %v3011
        %3085 = vst.msk [vmem:[#allocation3 + $0x60] sm:$0xf] %vm3060, %v3013
        %3086 = vst.msk [vmem:[#allocation3 + $0x64] sm:$0xf] %vm3060, %v3015
        %3087 = vst.msk [vmem:[#allocation3 + $0x68] sm:$0xf] %vm3060, %v3017
        %3088 = vst.msk [vmem:[#allocation3 + $0x6c] sm:$0xf] %vm3060, %v3019
        %3089 = vst.msk [vmem:[#allocation3 + $0x70] sm:$0xf] %vm3060, %v3021
        %3090 = vst.msk [vmem:[#allocation3 + $0x74] sm:$0xf] %vm3060, %v3023
        %3091 = vst.msk [vmem:[#allocation3 + $0x78] sm:$0xf] %vm3060, %v3025
        %3092 = vst.msk [vmem:[#allocation3 + $0x7c] sm:$0xf] %vm3060, %v3027
        %v3093 = vld [vmem:[%s2338] sm:$0xe]
        %v3094 = vld [vmem:[%s2338 + $0x4] sm:$0xf]
        %v3095 = vld [vmem:[%s2338 + $0x8] sm:$0x1]
        %v3096 = vld [vmem:[%s2338 + $0xc] sm:$0xe]
        %v3097 = vld [vmem:[%s2338 + $0x10] sm:$0xf]
        %v3098 = vld [vmem:[%s2338 + $0x14] sm:$0x1]
        %v3099 = vld [vmem:[%s2338 + $0x18] sm:$0xe]
        %v3100 = vld [vmem:[%s2338 + $0x1c] sm:$0xf]
        %v3101 = vld [vmem:[%s2338 + $0x20] sm:$0x1]
        %v3102 = vld [vmem:[%s2338 + $0x24] sm:$0xe]
        %v3103 = vld [vmem:[%s2338 + $0x28] sm:$0xf]
        %v3104 = vld [vmem:[%s2338 + $0x2c] sm:$0x1]
        %v3105 = vld [vmem:[%s2338 + $0x30] sm:$0xe]
        %v3106 = vld [vmem:[%s2338 + $0x34] sm:$0xf]
        %v3107 = vld [vmem:[%s2338 + $0x38] sm:$0x1]
        %v3108 = vld [vmem:[%s2338 + $0x3c] sm:$0xe]
        %v3109 = vld [vmem:[%s2338 + $0x40] sm:$0xf]
        %v3110 = vld [vmem:[%s2338 + $0x44] sm:$0x1]
        %v3111 = vld [vmem:[%s2338 + $0x48] sm:$0xe]
        %v3112 = vld [vmem:[%s2338 + $0x4c] sm:$0xf]
        %v3113 = vld [vmem:[%s2338 + $0x50] sm:$0x1]
        %v3114 = vld [vmem:[%s2338 + $0x54] sm:$0xe]
        %v3115 = vld [vmem:[%s2338 + $0x58] sm:$0xf]
        %v3116 = vld [vmem:[%s2338 + $0x5c] sm:$0x1]
        %v3117 = vld [vmem:[%s2338 + $0x60] sm:$0xe]
        %v3118 = vld [vmem:[%s2338 + $0x64] sm:$0xf]
        %v3119 = vld [vmem:[%s2338 + $0x68] sm:$0x1]
        %v3120 = vld [vmem:[%s2338 + $0x6c] sm:$0xe]
        %v3121 = vld [vmem:[%s2338 + $0x70] sm:$0xf]
        %v3122 = vld [vmem:[%s2338 + $0x74] sm:$0x1]
        %v3123 = vld [vmem:[%s2338 + $0x78] sm:$0xe]
        %v3124 = vld [vmem:[%s2338 + $0x7c] sm:$0xf]
        %v3125 = vld [vmem:[%s2338 + $0x80] sm:$0x1]
        %v3126 = vld [vmem:[%s2338 + $0x84] sm:$0xe]
        %v3127 = vld [vmem:[%s2338 + $0x88] sm:$0xf]
        %v3128 = vld [vmem:[%s2338 + $0x8c] sm:$0x1]
        %v3129 = vld [vmem:[%s2338 + $0x90] sm:$0xe]
        %v3130 = vld [vmem:[%s2338 + $0x94] sm:$0xf]
        %v3131 = vld [vmem:[%s2338 + $0x98] sm:$0x1]
        %v3132 = vld [vmem:[%s2338 + $0x9c] sm:$0xe]
        %v3133 = vld [vmem:[%s2338 + $0xa0] sm:$0xf]
        %v3134 = vld [vmem:[%s2338 + $0xa4] sm:$0x1]
        %v3135 = vld [vmem:[%s2338 + $0xa8] sm:$0xe]
        %v3136 = vld [vmem:[%s2338 + $0xac] sm:$0xf]
        %v3137 = vld [vmem:[%s2338 + $0xb0] sm:$0x1]
        %v3138 = vld [vmem:[%s2338 + $0xb4] sm:$0xe]
        %v3139 = vld [vmem:[%s2338 + $0xb8] sm:$0xf]
        %v3140 = vld [vmem:[%s2338 + $0xbc] sm:$0x1]
        %v3189 = vrot.slane %v3093, 5
        %v3190 = vrot.slane %v3189, 4
        %v3191 = vrot.slane %v3094, 5
        %v3192 = vsel %vm1004, %v3190, %v3191
        %v3193 = vrot.slane %v3191, 4
        %v3194 = vrot.slane %v3095, 5
        %v3195 = vsel %vm1004, %v3193, %v3194
        %v3196 = vrot.slane %v3096, 5
        %v3197 = vrot.slane %v3196, 4
        %v3198 = vrot.slane %v3097, 5
        %v3199 = vsel %vm1004, %v3197, %v3198
        %v3200 = vrot.slane %v3198, 4
        %v3201 = vrot.slane %v3098, 5
        %v3202 = vsel %vm1004, %v3200, %v3201
        %v3203 = vrot.slane %v3099, 5
        %v3204 = vrot.slane %v3203, 4
        %v3205 = vrot.slane %v3100, 5
        %v3206 = vsel %vm1004, %v3204, %v3205
        %v3207 = vrot.slane %v3205, 4
        %v3208 = vrot.slane %v3101, 5
        %v3209 = vsel %vm1004, %v3207, %v3208
        %v3210 = vrot.slane %v3102, 5
        %v3211 = vrot.slane %v3210, 4
        %v3212 = vrot.slane %v3103, 5
        %v3213 = vsel %vm1004, %v3211, %v3212
        %v3214 = vrot.slane %v3212, 4
        %v3215 = vrot.slane %v3104, 5
        %v3216 = vsel %vm1004, %v3214, %v3215
        %v3217 = vrot.slane %v3105, 5
        %v3218 = vrot.slane %v3217, 4
        %v3219 = vrot.slane %v3106, 5
        %v3220 = vsel %vm1004, %v3218, %v3219
        %v3221 = vrot.slane %v3219, 4
        %v3222 = vrot.slane %v3107, 5
        %v3223 = vsel %vm1004, %v3221, %v3222
        %v3224 = vrot.slane %v3108, 5
        %v3225 = vrot.slane %v3224, 4
        %v3226 = vrot.slane %v3109, 5
        %v3227 = vsel %vm1004, %v3225, %v3226
        %v3228 = vrot.slane %v3226, 4
        %v3229 = vrot.slane %v3110, 5
        %v3230 = vsel %vm1004, %v3228, %v3229
        %v3231 = vrot.slane %v3111, 5
        %v3232 = vrot.slane %v3231, 4
        %v3233 = vrot.slane %v3112, 5
        %v3234 = vsel %vm1004, %v3232, %v3233
        %v3235 = vrot.slane %v3233, 4
        %v3236 = vrot.slane %v3113, 5
        %v3237 = vsel %vm1004, %v3235, %v3236
        %v3238 = vrot.slane %v3114, 5
        %v3239 = vrot.slane %v3238, 4
        %v3240 = vrot.slane %v3115, 5
        %v3241 = vsel %vm1004, %v3239, %v3240
        %v3242 = vrot.slane %v3240, 4
        %v3243 = vrot.slane %v3116, 5
        %v3244 = vsel %vm1004, %v3242, %v3243
        %v3245 = vrot.slane %v3117, 5
        %v3246 = vrot.slane %v3245, 4
        %v3247 = vrot.slane %v3118, 5
        %v3248 = vsel %vm1004, %v3246, %v3247
        %v3249 = vrot.slane %v3247, 4
        %v3250 = vrot.slane %v3119, 5
        %v3251 = vsel %vm1004, %v3249, %v3250
        %v3252 = vrot.slane %v3120, 5
        %v3253 = vrot.slane %v3252, 4
        %v3254 = vrot.slane %v3121, 5
        %v3255 = vsel %vm1004, %v3253, %v3254
        %v3256 = vrot.slane %v3254, 4
        %v3257 = vrot.slane %v3122, 5
        %v3258 = vsel %vm1004, %v3256, %v3257
        %v3259 = vrot.slane %v3123, 5
        %v3260 = vrot.slane %v3259, 4
        %v3261 = vrot.slane %v3124, 5
        %v3262 = vsel %vm1004, %v3260, %v3261
        %v3263 = vrot.slane %v3261, 4
        %v3264 = vrot.slane %v3125, 5
        %v3265 = vsel %vm1004, %v3263, %v3264
        %v3266 = vrot.slane %v3126, 5
        %v3267 = vrot.slane %v3266, 4
        %v3268 = vrot.slane %v3127, 5
        %v3269 = vsel %vm1004, %v3267, %v3268
        %v3270 = vrot.slane %v3268, 4
        %v3271 = vrot.slane %v3128, 5
        %v3272 = vsel %vm1004, %v3270, %v3271
        %v3273 = vrot.slane %v3129, 5
        %v3274 = vrot.slane %v3273, 4
        %v3275 = vrot.slane %v3130, 5
        %v3276 = vsel %vm1004, %v3274, %v3275
        %v3277 = vrot.slane %v3275, 4
        %v3278 = vrot.slane %v3131, 5
        %v3279 = vsel %vm1004, %v3277, %v3278
        %v3280 = vrot.slane %v3132, 5
        %v3281 = vrot.slane %v3280, 4
        %v3282 = vrot.slane %v3133, 5
        %v3283 = vsel %vm1004, %v3281, %v3282
        %v3284 = vrot.slane %v3282, 4
        %v3285 = vrot.slane %v3134, 5
        %v3286 = vsel %vm1004, %v3284, %v3285
        %v3287 = vrot.slane %v3135, 5
        %v3288 = vrot.slane %v3287, 4
        %v3289 = vrot.slane %v3136, 5
        %v3290 = vsel %vm1004, %v3288, %v3289
        %v3291 = vrot.slane %v3289, 4
        %v3292 = vrot.slane %v3137, 5
        %v3293 = vsel %vm1004, %v3291, %v3292
        %v3294 = vrot.slane %v3138, 5
        %v3295 = vrot.slane %v3294, 4
        %v3296 = vrot.slane %v3139, 5
        %v3297 = vsel %vm1004, %v3295, %v3296
        %v3298 = vrot.slane %v3296, 4
        %v3299 = vrot.slane %v3140, 5
        %v3300 = vsel %vm1004, %v3298, %v3299
        %3301 = vrot.lane.b32.xlu0 %v3192, 64
        %v3302 = vpop.permute.xlu0 %3301
        %3303 = vrot.lane.b32.xlu0 %v3195, 64
        %v3304 = vpop.permute.xlu0 %3303
        %3305 = vrot.lane.b32.xlu0 %v3199, 64
        %v3306 = vpop.permute.xlu0 %3305
        %3307 = vrot.lane.b32.xlu0 %v3202, 64
        %v3308 = vpop.permute.xlu0 %3307
        %3309 = vrot.lane.b32.xlu0 %v3206, 64
        %v3310 = vpop.permute.xlu0 %3309
        %3311 = vrot.lane.b32.xlu0 %v3209, 64
        %v3312 = vpop.permute.xlu0 %3311
        %3313 = vrot.lane.b32.xlu0 %v3213, 64
        %v3314 = vpop.permute.xlu0 %3313
        %3315 = vrot.lane.b32.xlu0 %v3216, 64
        %v3316 = vpop.permute.xlu0 %3315
        %3317 = vrot.lane.b32.xlu0 %v3220, 64
        %v3318 = vpop.permute.xlu0 %3317
        %3319 = vrot.lane.b32.xlu0 %v3223, 64
        %v3320 = vpop.permute.xlu0 %3319
        %3321 = vrot.lane.b32.xlu0 %v3227, 64
        %v3322 = vpop.permute.xlu0 %3321
        %3323 = vrot.lane.b32.xlu0 %v3230, 64
        %v3324 = vpop.permute.xlu0 %3323
        %3325 = vrot.lane.b32.xlu0 %v3234, 64
        %v3326 = vpop.permute.xlu0 %3325
        %3327 = vrot.lane.b32.xlu0 %v3237, 64
        %v3328 = vpop.permute.xlu0 %3327
        %3329 = vrot.lane.b32.xlu0 %v3241, 64
        %v3330 = vpop.permute.xlu0 %3329
        %3331 = vrot.lane.b32.xlu0 %v3244, 64
        %v3332 = vpop.permute.xlu0 %3331
        %3333 = vrot.lane.b32.xlu0 %v3248, 64
        %v3334 = vpop.permute.xlu0 %3333
        %3335 = vrot.lane.b32.xlu0 %v3251, 64
        %v3336 = vpop.permute.xlu0 %3335
        %3337 = vrot.lane.b32.xlu0 %v3255, 64
        %v3338 = vpop.permute.xlu0 %3337
        %3339 = vrot.lane.b32.xlu0 %v3258, 64
        %v3340 = vpop.permute.xlu0 %3339
        %3341 = vrot.lane.b32.xlu0 %v3262, 64
        %v3342 = vpop.permute.xlu0 %3341
        %3343 = vrot.lane.b32.xlu0 %v3265, 64
        %v3344 = vpop.permute.xlu0 %3343
        %3345 = vrot.lane.b32.xlu0 %v3269, 64
        %v3346 = vpop.permute.xlu0 %3345
        %3347 = vrot.lane.b32.xlu0 %v3272, 64
        %v3348 = vpop.permute.xlu0 %3347
        %3349 = vrot.lane.b32.xlu0 %v3276, 64
        %v3350 = vpop.permute.xlu0 %3349
        %3351 = vrot.lane.b32.xlu0 %v3279, 64
        %v3352 = vpop.permute.xlu0 %3351
        %3353 = vrot.lane.b32.xlu0 %v3283, 64
        %v3354 = vpop.permute.xlu0 %3353
        %3355 = vrot.lane.b32.xlu0 %v3286, 64
        %v3356 = vpop.permute.xlu0 %3355
        %3357 = vrot.lane.b32.xlu0 %v3290, 64
        %v3358 = vpop.permute.xlu0 %3357
        %3359 = vrot.lane.b32.xlu0 %v3293, 64
        %v3360 = vpop.permute.xlu0 %3359
        %3361 = vrot.lane.b32.xlu0 %v3297, 64
        %v3362 = vpop.permute.xlu0 %3361
        %3363 = vrot.lane.b32.xlu0 %v3300, 64
        %v3364 = vpop.permute.xlu0 %3363
        %vm3397 = vcmask 585216
        %3398 = vst.msk [vmem:[#allocation3] sm:$0xf] %vm3397, %v3302
        %3399 = vst.msk [vmem:[#allocation3 + $0x4] sm:$0xf] %vm3397, %v3304
        %3400 = vst.msk [vmem:[#allocation3 + $0x8] sm:$0xf] %vm3397, %v3306
        %3401 = vst.msk [vmem:[#allocation3 + $0xc] sm:$0xf] %vm3397, %v3308
        %3402 = vst.msk [vmem:[#allocation3 + $0x10] sm:$0xf] %vm3397, %v3310
        %3403 = vst.msk [vmem:[#allocation3 + $0x14] sm:$0xf] %vm3397, %v3312
        %3404 = vst.msk [vmem:[#allocation3 + $0x18] sm:$0xf] %vm3397, %v3314
        %3405 = vst.msk [vmem:[#allocation3 + $0x1c] sm:$0xf] %vm3397, %v3316
        %3406 = vst.msk [vmem:[#allocation3 + $0x20] sm:$0xf] %vm3397, %v3318
        %3407 = vst.msk [vmem:[#allocation3 + $0x24] sm:$0xf] %vm3397, %v3320
        %3408 = vst.msk [vmem:[#allocation3 + $0x28] sm:$0xf] %vm3397, %v3322
        %3409 = vst.msk [vmem:[#allocation3 + $0x2c] sm:$0xf] %vm3397, %v3324
        %3410 = vst.msk [vmem:[#allocation3 + $0x30] sm:$0xf] %vm3397, %v3326
        %3411 = vst.msk [vmem:[#allocation3 + $0x34] sm:$0xf] %vm3397, %v3328
        %3412 = vst.msk [vmem:[#allocation3 + $0x38] sm:$0xf] %vm3397, %v3330
        %3413 = vst.msk [vmem:[#allocation3 + $0x3c] sm:$0xf] %vm3397, %v3332
        %3414 = vst.msk [vmem:[#allocation3 + $0x40] sm:$0xf] %vm3397, %v3334
        %3415 = vst.msk [vmem:[#allocation3 + $0x44] sm:$0xf] %vm3397, %v3336
        %3416 = vst.msk [vmem:[#allocation3 + $0x48] sm:$0xf] %vm3397, %v3338
        %3417 = vst.msk [vmem:[#allocation3 + $0x4c] sm:$0xf] %vm3397, %v3340
        %3418 = vst.msk [vmem:[#allocation3 + $0x50] sm:$0xf] %vm3397, %v3342
        %3419 = vst.msk [vmem:[#allocation3 + $0x54] sm:$0xf] %vm3397, %v3344
        %3420 = vst.msk [vmem:[#allocation3 + $0x58] sm:$0xf] %vm3397, %v3346
        %3421 = vst.msk [vmem:[#allocation3 + $0x5c] sm:$0xf] %vm3397, %v3348
        %3422 = vst.msk [vmem:[#allocation3 + $0x60] sm:$0xf] %vm3397, %v3350
        %3423 = vst.msk [vmem:[#allocation3 + $0x64] sm:$0xf] %vm3397, %v3352
        %3424 = vst.msk [vmem:[#allocation3 + $0x68] sm:$0xf] %vm3397, %v3354
        %3425 = vst.msk [vmem:[#allocation3 + $0x6c] sm:$0xf] %vm3397, %v3356
        %3426 = vst.msk [vmem:[#allocation3 + $0x70] sm:$0xf] %vm3397, %v3358
        %3427 = vst.msk [vmem:[#allocation3 + $0x74] sm:$0xf] %vm3397, %v3360
        %3428 = vst.msk [vmem:[#allocation3 + $0x78] sm:$0xf] %vm3397, %v3362
        %3429 = vst.msk [vmem:[#allocation3 + $0x7c] sm:$0xf] %vm3397, %v3364
        %v3430 = vld [vmem:[#allocation3] sm:$0xf]
        %v3431 = vld [vmem:[#allocation3 + $0x4] sm:$0xf]
        %v3432 = vld [vmem:[#allocation3 + $0x8] sm:$0xf]
        %v3433 = vld [vmem:[#allocation3 + $0xc] sm:$0xf]
        %v3434 = vld [vmem:[#allocation3 + $0x10] sm:$0xf]
        %v3435 = vld [vmem:[#allocation3 + $0x14] sm:$0xf]
        %v3436 = vld [vmem:[#allocation3 + $0x18] sm:$0xf]
        %v3437 = vld [vmem:[#allocation3 + $0x1c] sm:$0xf]
        %v3438 = vld [vmem:[#allocation3 + $0x20] sm:$0xf]
        %v3439 = vld [vmem:[#allocation3 + $0x24] sm:$0xf]
        %v3440 = vld [vmem:[#allocation3 + $0x28] sm:$0xf]
        %v3441 = vld [vmem:[#allocation3 + $0x2c] sm:$0xf]
        %v3442 = vld [vmem:[#allocation3 + $0x30] sm:$0xf]
        %v3443 = vld [vmem:[#allocation3 + $0x34] sm:$0xf]
        %v3444 = vld [vmem:[#allocation3 + $0x38] sm:$0xf]
        %v3445 = vld [vmem:[#allocation3 + $0x3c] sm:$0xf]
        %v3446 = vld [vmem:[#allocation3 + $0x40] sm:$0xf]
        %v3447 = vld [vmem:[#allocation3 + $0x44] sm:$0xf]
        %v3448 = vld [vmem:[#allocation3 + $0x48] sm:$0xf]
        %v3449 = vld [vmem:[#allocation3 + $0x4c] sm:$0xf]
        %v3450 = vld [vmem:[#allocation3 + $0x50] sm:$0xf]
        %v3451 = vld [vmem:[#allocation3 + $0x54] sm:$0xf]
        %v3452 = vld [vmem:[#allocation3 + $0x58] sm:$0xf]
        %v3453 = vld [vmem:[#allocation3 + $0x5c] sm:$0xf]
        %v3454 = vld [vmem:[#allocation3 + $0x60] sm:$0xf]
        %v3455 = vld [vmem:[#allocation3 + $0x64] sm:$0xf]
        %v3456 = vld [vmem:[#allocation3 + $0x68] sm:$0xf]
        %v3457 = vld [vmem:[#allocation3 + $0x6c] sm:$0xf]
        %v3458 = vld [vmem:[#allocation3 + $0x70] sm:$0xf]
        %v3459 = vld [vmem:[#allocation3 + $0x74] sm:$0xf]
        %v3460 = vld [vmem:[#allocation3 + $0x78] sm:$0xf]
        %v3461 = vld [vmem:[#allocation3 + $0x7c] sm:$0xf]
        %v3462 = vunpack.c.l.bf16 %v3430
        %v3463 = vunpack.c.l.bf16 %v3431
        %v3464 = vunpack.c.l.bf16 %v3432
        %v3465 = vunpack.c.l.bf16 %v3433
        %v3466 = vunpack.c.l.bf16 %v3434
        %v3467 = vunpack.c.l.bf16 %v3435
        %v3468 = vunpack.c.l.bf16 %v3436
        %v3469 = vunpack.c.l.bf16 %v3437
        %v3470 = vunpack.c.l.bf16 %v3438
        %v3471 = vunpack.c.l.bf16 %v3439
        %v3472 = vunpack.c.l.bf16 %v3440
        %v3473 = vunpack.c.l.bf16 %v3441
        %v3474 = vunpack.c.l.bf16 %v3442
        %v3475 = vunpack.c.l.bf16 %v3443
        %v3476 = vunpack.c.l.bf16 %v3444
        %v3477 = vunpack.c.l.bf16 %v3445
        %v3478 = vunpack.c.l.bf16 %v3446
        %v3479 = vunpack.c.l.bf16 %v3447
        %v3480 = vunpack.c.l.bf16 %v3448
        %v3481 = vunpack.c.l.bf16 %v3449
        %v3482 = vunpack.c.l.bf16 %v3450
        %v3483 = vunpack.c.l.bf16 %v3451
        %v3484 = vunpack.c.l.bf16 %v3452
        %v3485 = vunpack.c.l.bf16 %v3453
        %v3486 = vunpack.c.l.bf16 %v3454
        %v3487 = vunpack.c.l.bf16 %v3455
        %v3488 = vunpack.c.l.bf16 %v3456
        %v3489 = vunpack.c.l.bf16 %v3457
        %v3490 = vunpack.c.l.bf16 %v3458
        %v3491 = vunpack.c.l.bf16 %v3459
        %v3492 = vunpack.c.l.bf16 %v3460
        %v3493 = vunpack.c.l.bf16 %v3461
        %v3494 = vld [vmem:[%s1] sm:$0xf]
        %v3495 = vld [vmem:[%s1 + $0x4] sm:$0xf]
        %v3496 = vld [vmem:[%s1 + $0x8] sm:$0xf]
        %v3497 = vld [vmem:[%s1 + $0xc] sm:$0xf]
        %v3498 = vld [vmem:[%s1 + $0x10] sm:$0xf]
        %v3499 = vld [vmem:[%s1 + $0x14] sm:$0xf]
        %v3500 = vld [vmem:[%s1 + $0x18] sm:$0xf]
        %v3501 = vld [vmem:[%s1 + $0x1c] sm:$0xf]
        %v3502 = vld [vmem:[%s1 + $0x20] sm:$0xf]
        %v3503 = vunpack.c.l.bf16 %v3494
        %v3504 = vunpack.c.l.bf16 %v3495
        %v3505 = vunpack.c.l.bf16 %v3496
        %v3506 = vunpack.c.l.bf16 %v3497
        %v3507 = vunpack.c.l.bf16 %v3498
        %v3508 = vunpack.c.l.bf16 %v3499
        %v3509 = vunpack.c.l.bf16 %v3500
        %v3510 = vunpack.c.l.bf16 %v3501
        %v3511 = vunpack.c.l.bf16 %v3502
        %vm3512 = vcmask 588800
        %v3514 = vsel %vm3512, %v3462, 0
        %v3517 = vsel %vm3512, %v3463, 0
        %v3520 = vsel %vm3512, %v3464, 0
        %v3523 = vsel %vm3512, %v3465, 0
        %v3526 = vsel %vm3512, %v3466, 0
        %v3529 = vsel %vm3512, %v3467, 0
        %v3532 = vsel %vm3512, %v3468, 0
        %v3535 = vsel %vm3512, %v3469, 0
        %v3538 = vsel %vm3512, %v3470, 0
        %v3541 = vsel %vm3512, %v3471, 0
        %v3544 = vsel %vm3512, %v3472, 0
        %v3547 = vsel %vm3512, %v3473, 0
        %v3550 = vsel %vm3512, %v3474, 0
        %v3553 = vsel %vm3512, %v3475, 0
        %v3556 = vsel %vm3512, %v3476, 0
        %v3559 = vsel %vm3512, %v3477, 0
        %v3562 = vsel %vm3512, %v3478, 0
        %v3565 = vsel %vm3512, %v3479, 0
        %v3568 = vsel %vm3512, %v3480, 0
        %v3571 = vsel %vm3512, %v3481, 0
        %v3574 = vsel %vm3512, %v3482, 0
        %v3577 = vsel %vm3512, %v3483, 0
        %v3580 = vsel %vm3512, %v3484, 0
        %v3583 = vsel %vm3512, %v3485, 0
        %v3586 = vsel %vm3512, %v3486, 0
        %v3589 = vsel %vm3512, %v3487, 0
        %v3592 = vsel %vm3512, %v3488, 0
        %v3595 = vsel %vm3512, %v3489, 0
        %v3598 = vsel %vm3512, %v3490, 0
        %v3601 = vsel %vm3512, %v3491, 0
        %v3604 = vsel %vm3512, %v3492, 0
        %v3607 = vsel %vm3512, %v3493, 0
        %3609 = vmatpush.msra.mxu0 0.0
        %3610 = vmatpush.msra.mxu0 0.0
        %3611 = vmatpush.msra.mxu0 0.0
        %3612 = vmatpush.msra.mxu0 0.0
        %3613 = vmatpush.msra.mxu0 0.0
        %3614 = vmatpush.msra.mxu0 0.0
        %3615 = vmatpush.msra.mxu0 0.0
        %3616 = vmatpush.msra.mxu0 %v3511
        %3617 = vmatpush.msra.mxu0 %v3510
        %3618 = vmatpush.msra.mxu0 %v3509
        %3619 = vmatpush.msra.mxu0 %v3508
        %3620 = vmatpush.msra.mxu0 %v3507
        %3621 = vmatpush.msra.mxu0 %v3506
        %3622 = vmatpush.msra.mxu0 %v3505
        %3623 = vmatpush.msra.mxu0 %v3504
        %3624 = vmatpush.msra.mxu0 %v3503
        %3625 = vmatmul.f32.gmra.mxu0 %v3514
        %v3626 = vpop.f32.mrf.mxu0
        %v3627 = vadd.f32 0.0, %v3626
        %3628 = vmatmul.f32.gmra.mxu0 %v3517
        %v3629 = vpop.f32.mrf.mxu0
        %v3630 = vadd.f32 0.0, %v3629
        %3631 = vmatmul.f32.gmra.mxu0 %v3520
        %v3632 = vpop.f32.mrf.mxu0
        %v3633 = vadd.f32 0.0, %v3632
        %3634 = vmatmul.f32.gmra.mxu0 %v3523
        %v3635 = vpop.f32.mrf.mxu0
        %v3636 = vadd.f32 0.0, %v3635
        %3637 = vmatmul.f32.gmra.mxu0 %v3526
        %v3638 = vpop.f32.mrf.mxu0
        %v3639 = vadd.f32 0.0, %v3638
        %3640 = vmatmul.f32.gmra.mxu0 %v3529
        %v3641 = vpop.f32.mrf.mxu0
        %v3642 = vadd.f32 0.0, %v3641
        %3643 = vmatmul.f32.gmra.mxu0 %v3532
        %v3644 = vpop.f32.mrf.mxu0
        %v3645 = vadd.f32 0.0, %v3644
        %3646 = vmatmul.f32.gmra.mxu0 %v3535
        %v3647 = vpop.f32.mrf.mxu0
        %v3648 = vadd.f32 0.0, %v3647
        %3649 = vmatmul.f32.gmra.mxu0 %v3538
        %v3650 = vpop.f32.mrf.mxu0
        %v3651 = vadd.f32 0.0, %v3650
        %3652 = vmatmul.f32.gmra.mxu0 %v3541
        %v3653 = vpop.f32.mrf.mxu0
        %v3654 = vadd.f32 0.0, %v3653
        %3655 = vmatmul.f32.gmra.mxu0 %v3544
        %v3656 = vpop.f32.mrf.mxu0
        %v3657 = vadd.f32 0.0, %v3656
        %3658 = vmatmul.f32.gmra.mxu0 %v3547
        %v3659 = vpop.f32.mrf.mxu0
        %v3660 = vadd.f32 0.0, %v3659
        %3661 = vmatmul.f32.gmra.mxu0 %v3550
        %v3662 = vpop.f32.mrf.mxu0
        %v3663 = vadd.f32 0.0, %v3662
        %3664 = vmatmul.f32.gmra.mxu0 %v3553
        %v3665 = vpop.f32.mrf.mxu0
        %v3666 = vadd.f32 0.0, %v3665
        %3667 = vmatmul.f32.gmra.mxu0 %v3556
        %v3668 = vpop.f32.mrf.mxu0
        %v3669 = vadd.f32 0.0, %v3668
        %3670 = vmatmul.f32.gmra.mxu0 %v3559
        %v3671 = vpop.f32.mrf.mxu0
        %v3672 = vadd.f32 0.0, %v3671
        %3673 = vmatmul.f32.gmra.mxu0 %v3562
        %v3674 = vpop.f32.mrf.mxu0
        %v3675 = vadd.f32 0.0, %v3674
        %3676 = vmatmul.f32.gmra.mxu0 %v3565
        %v3677 = vpop.f32.mrf.mxu0
        %v3678 = vadd.f32 0.0, %v3677
        %3679 = vmatmul.f32.gmra.mxu0 %v3568
        %v3680 = vpop.f32.mrf.mxu0
        %v3681 = vadd.f32 0.0, %v3680
        %3682 = vmatmul.f32.gmra.mxu0 %v3571
        %v3683 = vpop.f32.mrf.mxu0
        %v3684 = vadd.f32 0.0, %v3683
        %3685 = vmatmul.f32.gmra.mxu0 %v3574
        %v3686 = vpop.f32.mrf.mxu0
        %v3687 = vadd.f32 0.0, %v3686
        %3688 = vmatmul.f32.gmra.mxu0 %v3577
        %v3689 = vpop.f32.mrf.mxu0
        %v3690 = vadd.f32 0.0, %v3689
        %3691 = vmatmul.f32.gmra.mxu0 %v3580
        %v3692 = vpop.f32.mrf.mxu0
        %v3693 = vadd.f32 0.0, %v3692
        %3694 = vmatmul.f32.gmra.mxu0 %v3583
        %v3695 = vpop.f32.mrf.mxu0
        %v3696 = vadd.f32 0.0, %v3695
        %3697 = vmatmul.f32.gmra.mxu0 %v3586
        %v3698 = vpop.f32.mrf.mxu0
        %v3699 = vadd.f32 0.0, %v3698
        %3700 = vmatmul.f32.gmra.mxu0 %v3589
        %v3701 = vpop.f32.mrf.mxu0
        %v3702 = vadd.f32 0.0, %v3701
        %3703 = vmatmul.f32.gmra.mxu0 %v3592
        %v3704 = vpop.f32.mrf.mxu0
        %v3705 = vadd.f32 0.0, %v3704
        %3706 = vmatmul.f32.gmra.mxu0 %v3595
        %v3707 = vpop.f32.mrf.mxu0
        %v3708 = vadd.f32 0.0, %v3707
        %3709 = vmatmul.f32.gmra.mxu0 %v3598
        %v3710 = vpop.f32.mrf.mxu0
        %v3711 = vadd.f32 0.0, %v3710
        %3712 = vmatmul.f32.gmra.mxu0 %v3601
        %v3713 = vpop.f32.mrf.mxu0
        %v3714 = vadd.f32 0.0, %v3713
        %3715 = vmatmul.f32.gmra.mxu0 %v3604
        %v3716 = vpop.f32.mrf.mxu0
        %v3717 = vadd.f32 0.0, %v3716
        %3718 = vmatmul.f32.gmra.mxu0 %v3607
        %v3719 = vpop.f32.mrf.mxu0
        %v3720 = vadd.f32 0.0, %v3719
        %3721 = vdwg.mxu0
        %v3722 = vld [vmem:[%s2] sm:$0x1]
        %v3724 = vperm.slane %v3722, 0
        %v3726 = vmul.f32 %v3627, %v3724
        %v3727 = vmul.f32 %v3630, %v3724
        %v3728 = vmul.f32 %v3633, %v3724
        %v3729 = vmul.f32 %v3636, %v3724
        %v3730 = vmul.f32 %v3639, %v3724
        %v3731 = vmul.f32 %v3642, %v3724
        %v3732 = vmul.f32 %v3645, %v3724
        %v3733 = vmul.f32 %v3648, %v3724
        %v3734 = vmul.f32 %v3651, %v3724
        %v3735 = vmul.f32 %v3654, %v3724
        %v3736 = vmul.f32 %v3657, %v3724
        %v3737 = vmul.f32 %v3660, %v3724
        %v3738 = vmul.f32 %v3663, %v3724
        %v3739 = vmul.f32 %v3666, %v3724
        %v3740 = vmul.f32 %v3669, %v3724
        %v3741 = vmul.f32 %v3672, %v3724
        %v3742 = vmul.f32 %v3675, %v3724
        %v3743 = vmul.f32 %v3678, %v3724
        %v3744 = vmul.f32 %v3681, %v3724
        %v3745 = vmul.f32 %v3684, %v3724
        %v3746 = vmul.f32 %v3687, %v3724
        %v3747 = vmul.f32 %v3690, %v3724
        %v3748 = vmul.f32 %v3693, %v3724
        %v3749 = vmul.f32 %v3696, %v3724
        %v3750 = vmul.f32 %v3699, %v3724
        %v3751 = vmul.f32 %v3702, %v3724
        %v3752 = vmul.f32 %v3705, %v3724
        %v3753 = vmul.f32 %v3708, %v3724
        %v3754 = vmul.f32 %v3711, %v3724
        %v3755 = vmul.f32 %v3714, %v3724
        %v3756 = vmul.f32 %v3717, %v3724
        %v3757 = vmul.f32 %v3720, %v3724
        %v3758 = vld [vmem:[%s3] sm:$0x1]
        %v3760 = vperm.slane %v3758, 0
        %v3762 = vadd.f32 %v3726, %v3760
        %v3763 = vadd.f32 %v3727, %v3760
        %v3764 = vadd.f32 %v3728, %v3760
        %v3765 = vadd.f32 %v3729, %v3760
        %v3766 = vadd.f32 %v3730, %v3760
        %v3767 = vadd.f32 %v3731, %v3760
        %v3768 = vadd.f32 %v3732, %v3760
        %v3769 = vadd.f32 %v3733, %v3760
        %v3770 = vadd.f32 %v3734, %v3760
        %v3771 = vadd.f32 %v3735, %v3760
        %v3772 = vadd.f32 %v3736, %v3760
        %v3773 = vadd.f32 %v3737, %v3760
        %v3774 = vadd.f32 %v3738, %v3760
        %v3775 = vadd.f32 %v3739, %v3760
        %v3776 = vadd.f32 %v3740, %v3760
        %v3777 = vadd.f32 %v3741, %v3760
        %v3778 = vadd.f32 %v3742, %v3760
        %v3779 = vadd.f32 %v3743, %v3760
        %v3780 = vadd.f32 %v3744, %v3760
        %v3781 = vadd.f32 %v3745, %v3760
        %v3782 = vadd.f32 %v3746, %v3760
        %v3783 = vadd.f32 %v3747, %v3760
        %v3784 = vadd.f32 %v3748, %v3760
        %v3785 = vadd.f32 %v3749, %v3760
        %v3786 = vadd.f32 %v3750, %v3760
        %v3787 = vadd.f32 %v3751, %v3760
        %v3788 = vadd.f32 %v3752, %v3760
        %v3789 = vadd.f32 %v3753, %v3760
        %v3790 = vadd.f32 %v3754, %v3760
        %v3791 = vadd.f32 %v3755, %v3760
        %v3792 = vadd.f32 %v3756, %v3760
        %v3793 = vadd.f32 %v3757, %v3760
        %v3794 = vmax.f32 %v3762, 0.0
        %v3795 = vmax.f32 %v3763, 0.0
        %v3796 = vmax.f32 %v3764, 0.0
        %v3797 = vmax.f32 %v3765, 0.0
        %v3798 = vmax.f32 %v3766, 0.0
        %v3799 = vmax.f32 %v3767, 0.0
        %v3800 = vmax.f32 %v3768, 0.0
        %v3801 = vmax.f32 %v3769, 0.0
        %v3802 = vmax.f32 %v3770, 0.0
        %v3803 = vmax.f32 %v3771, 0.0
        %v3804 = vmax.f32 %v3772, 0.0
        %v3805 = vmax.f32 %v3773, 0.0
        %v3806 = vmax.f32 %v3774, 0.0
        %v3807 = vmax.f32 %v3775, 0.0
        %v3808 = vmax.f32 %v3776, 0.0
        %v3809 = vmax.f32 %v3777, 0.0
        %v3810 = vmax.f32 %v3778, 0.0
        %v3811 = vmax.f32 %v3779, 0.0
        %v3812 = vmax.f32 %v3780, 0.0
        %v3813 = vmax.f32 %v3781, 0.0
        %v3814 = vmax.f32 %v3782, 0.0
        %v3815 = vmax.f32 %v3783, 0.0
        %v3816 = vmax.f32 %v3784, 0.0
        %v3817 = vmax.f32 %v3785, 0.0
        %v3818 = vmax.f32 %v3786, 0.0
        %v3819 = vmax.f32 %v3787, 0.0
        %v3820 = vmax.f32 %v3788, 0.0
        %v3821 = vmax.f32 %v3789, 0.0
        %v3822 = vmax.f32 %v3790, 0.0
        %v3823 = vmax.f32 %v3791, 0.0
        %v3824 = vmax.f32 %v3792, 0.0
        %v3825 = vmax.f32 %v3793, 0.0
        %vm3826 = vcmask 31744
        %3827 = vst.msk [vmem:[#allocation2] sm:$0xff] %vm3826, 0.0
        %3828 = vst.msk [vmem:[#allocation2 + $0x8] sm:$0xff] %vm3826, 0.0
        %3829 = vst.msk [vmem:[#allocation2 + $0x10] sm:$0xff] %vm3826, 0.0
        %3830 = vst.msk [vmem:[#allocation2 + $0x18] sm:$0xff] %vm3826, 0.0
        %s3831 = scalar_lea.vmem [#allocation2], 544
        %3832 = vst.msk [vmem:[%s3831] sm:$0xff] %vm3826, 0.0
        %3833 = vst.msk [vmem:[%s3831 + $0x8] sm:$0xff] %vm3826, 0.0
        %3834 = vst.msk [vmem:[%s3831 + $0x10] sm:$0xff] %vm3826, 0.0
        %3835 = vst.msk [vmem:[%s3831 + $0x18] sm:$0xff] %vm3826, 0.0
        %s3836 = scalar_lea.vmem [#allocation2], 32
        %3837 = vst.msk [vmem:[%s3836] sm:$0xff] %vm3826, 0.0
        %3838 = vst.msk [vmem:[%s3836 + $0x20] sm:$0xff] %vm3826, 0.0
        %3839 = vst.msk [vmem:[%s3836 + $0x40] sm:$0xff] %vm3826, 0.0
        %3840 = vst.msk [vmem:[%s3836 + $0x60] sm:$0xff] %vm3826, 0.0
        %3841 = vst.msk [vmem:[%s3836 + $0x80] sm:$0xff] %vm3826, 0.0
        %3842 = vst.msk [vmem:[%s3836 + $0xa0] sm:$0xff] %vm3826, 0.0
        %3843 = vst.msk [vmem:[%s3836 + $0xc0] sm:$0xff] %vm3826, 0.0
        %3844 = vst.msk [vmem:[%s3836 + $0xe0] sm:$0xff] %vm3826, 0.0
        %3845 = vst.msk [vmem:[%s3836 + $0x100] sm:$0xff] %vm3826, 0.0
        %3846 = vst.msk [vmem:[%s3836 + $0x120] sm:$0xff] %vm3826, 0.0
        %3847 = vst.msk [vmem:[%s3836 + $0x140] sm:$0xff] %vm3826, 0.0
        %3848 = vst.msk [vmem:[%s3836 + $0x160] sm:$0xff] %vm3826, 0.0
        %3849 = vst.msk [vmem:[%s3836 + $0x180] sm:$0xff] %vm3826, 0.0
        %3850 = vst.msk [vmem:[%s3836 + $0x1a0] sm:$0xff] %vm3826, 0.0
        %3851 = vst.msk [vmem:[%s3836 + $0x1c0] sm:$0xff] %vm3826, 0.0
        %3852 = vst.msk [vmem:[%s3836 + $0x1e0] sm:$0xff] %vm3826, 0.0
        %3853 = vst.msk [vmem:[%s3836 + $0x18] sm:$0xff] %vm3826, 0.0
        %3854 = vst.msk [vmem:[%s3836 + $0x38] sm:$0xff] %vm3826, 0.0
        %3855 = vst.msk [vmem:[%s3836 + $0x58] sm:$0xff] %vm3826, 0.0
        %3856 = vst.msk [vmem:[%s3836 + $0x78] sm:$0xff] %vm3826, 0.0
        %3857 = vst.msk [vmem:[%s3836 + $0x98] sm:$0xff] %vm3826, 0.0
        %3858 = vst.msk [vmem:[%s3836 + $0xb8] sm:$0xff] %vm3826, 0.0
        %3859 = vst.msk [vmem:[%s3836 + $0xd8] sm:$0xff] %vm3826, 0.0
        %3860 = vst.msk [vmem:[%s3836 + $0xf8] sm:$0xff] %vm3826, 0.0
        %3861 = vst.msk [vmem:[%s3836 + $0x118] sm:$0xff] %vm3826, 0.0
        %3862 = vst.msk [vmem:[%s3836 + $0x138] sm:$0xff] %vm3826, 0.0
        %3863 = vst.msk [vmem:[%s3836 + $0x158] sm:$0xff] %vm3826, 0.0
        %3864 = vst.msk [vmem:[%s3836 + $0x178] sm:$0xff] %vm3826, 0.0
        %3865 = vst.msk [vmem:[%s3836 + $0x198] sm:$0xff] %vm3826, 0.0
        %3866 = vst.msk [vmem:[%s3836 + $0x1b8] sm:$0xff] %vm3826, 0.0
        %3867 = vst.msk [vmem:[%s3836 + $0x1d8] sm:$0xff] %vm3826, 0.0
        %3868 = vst.msk [vmem:[%s3836 + $0x1f8] sm:$0xff] %vm3826, 0.0
        %3869 = vst.msk [vmem:[%s3836 + $0x8] sm:$0xff] %vm3826, %v3794
        %3870 = vst.msk [vmem:[%s3836 + $0x10] sm:$0xff] %vm3826, %v3795
        %3871 = vst.msk [vmem:[%s3836 + $0x28] sm:$0xff] %vm3826, %v3796
        %3872 = vst.msk [vmem:[%s3836 + $0x30] sm:$0xff] %vm3826, %v3797
        %3873 = vst.msk [vmem:[%s3836 + $0x48] sm:$0xff] %vm3826, %v3798
        %3874 = vst.msk [vmem:[%s3836 + $0x50] sm:$0xff] %vm3826, %v3799
        %3875 = vst.msk [vmem:[%s3836 + $0x68] sm:$0xff] %vm3826, %v3800
        %3876 = vst.msk [vmem:[%s3836 + $0x70] sm:$0xff] %vm3826, %v3801
        %3877 = vst.msk [vmem:[%s3836 + $0x88] sm:$0xff] %vm3826, %v3802
        %3878 = vst.msk [vmem:[%s3836 + $0x90] sm:$0xff] %vm3826, %v3803
        %3879 = vst.msk [vmem:[%s3836 + $0xa8] sm:$0xff] %vm3826, %v3804
        %3880 = vst.msk [vmem:[%s3836 + $0xb0] sm:$0xff] %vm3826, %v3805
        %3881 = vst.msk [vmem:[%s3836 + $0xc8] sm:$0xff] %vm3826, %v3806
        %3882 = vst.msk [vmem:[%s3836 + $0xd0] sm:$0xff] %vm3826, %v3807
        %3883 = vst.msk [vmem:[%s3836 + $0xe8] sm:$0xff] %vm3826, %v3808
        %3884 = vst.msk [vmem:[%s3836 + $0xf0] sm:$0xff] %vm3826, %v3809
        %3885 = vst.msk [vmem:[%s3836 + $0x108] sm:$0xff] %vm3826, %v3810
        %3886 = vst.msk [vmem:[%s3836 + $0x110] sm:$0xff] %vm3826, %v3811
        %3887 = vst.msk [vmem:[%s3836 + $0x128] sm:$0xff] %vm3826, %v3812
        %3888 = vst.msk [vmem:[%s3836 + $0x130] sm:$0xff] %vm3826, %v3813
        %3889 = vst.msk [vmem:[%s3836 + $0x148] sm:$0xff] %vm3826, %v3814
        %3890 = vst.msk [vmem:[%s3836 + $0x150] sm:$0xff] %vm3826, %v3815
        %3891 = vst.msk [vmem:[%s3836 + $0x168] sm:$0xff] %vm3826, %v3816
        %3892 = vst.msk [vmem:[%s3836 + $0x170] sm:$0xff] %vm3826, %v3817
        %3893 = vst.msk [vmem:[%s3836 + $0x188] sm:$0xff] %vm3826, %v3818
        %3894 = vst.msk [vmem:[%s3836 + $0x190] sm:$0xff] %vm3826, %v3819
        %3895 = vst.msk [vmem:[%s3836 + $0x1a8] sm:$0xff] %vm3826, %v3820
        %3896 = vst.msk [vmem:[%s3836 + $0x1b0] sm:$0xff] %vm3826, %v3821
        %3897 = vst.msk [vmem:[%s3836 + $0x1c8] sm:$0xff] %vm3826, %v3822
        %3898 = vst.msk [vmem:[%s3836 + $0x1d0] sm:$0xff] %vm3826, %v3823
        %3899 = vst.msk [vmem:[%s3836 + $0x1e8] sm:$0xff] %vm3826, %v3824
        %3900 = vst.msk [vmem:[%s3836 + $0x1f0] sm:$0xff] %vm3826, %v3825
        %v3901 = vld [vmem:[#allocation2 + $0x7] sm:$0xff]
        %v3902 = vld [vmem:[#allocation2 + $0xf] sm:$0xff]
        %v3903 = vld [vmem:[#allocation2 + $0x27] sm:$0xff]
        %v3904 = vld [vmem:[#allocation2 + $0x2f] sm:$0xff]
        %v3905 = vld [vmem:[#allocation2 + $0x47] sm:$0xff]
        %v3906 = vld [vmem:[#allocation2 + $0x4f] sm:$0xff]
        %v3907 = vld [vmem:[#allocation2 + $0x67] sm:$0xff]
        %v3908 = vld [vmem:[#allocation2 + $0x6f] sm:$0xff]
        %v3909 = vld [vmem:[#allocation2 + $0x87] sm:$0xff]
        %v3910 = vld [vmem:[#allocation2 + $0x8f] sm:$0xff]
        %v3911 = vld [vmem:[#allocation2 + $0xa7] sm:$0xff]
        %v3912 = vld [vmem:[#allocation2 + $0xaf] sm:$0xff]
        %v3913 = vld [vmem:[#allocation2 + $0xc7] sm:$0xff]
        %v3914 = vld [vmem:[#allocation2 + $0xcf] sm:$0xff]
        %v3915 = vld [vmem:[#allocation2 + $0xe7] sm:$0xff]
        %v3916 = vld [vmem:[#allocation2 + $0xef] sm:$0xff]
        %v3917 = vld [vmem:[#allocation2 + $0x107] sm:$0xff]
        %v3918 = vld [vmem:[#allocation2 + $0x10f] sm:$0xff]
        %v3919 = vld [vmem:[#allocation2 + $0x127] sm:$0xff]
        %v3920 = vld [vmem:[#allocation2 + $0x12f] sm:$0xff]
        %v3921 = vld [vmem:[#allocation2 + $0x147] sm:$0xff]
        %v3922 = vld [vmem:[#allocation2 + $0x14f] sm:$0xff]
        %v3923 = vld [vmem:[#allocation2 + $0x167] sm:$0xff]
        %v3924 = vld [vmem:[#allocation2 + $0x16f] sm:$0xff]
        %v3925 = vld [vmem:[#allocation2 + $0x187] sm:$0xff]
        %v3926 = vld [vmem:[#allocation2 + $0x18f] sm:$0xff]
        %v3927 = vld [vmem:[#allocation2 + $0x1a7] sm:$0xff]
        %v3928 = vld [vmem:[#allocation2 + $0x1af] sm:$0xff]
        %v3929 = vld [vmem:[#allocation2 + $0x1c7] sm:$0xff]
        %v3930 = vld [vmem:[#allocation2 + $0x1cf] sm:$0xff]
        %v3931 = vld [vmem:[#allocation2 + $0x1e7] sm:$0xff]
        %v3932 = vld [vmem:[#allocation2 + $0x1ef] sm:$0xff]
        %v3933 = vpack.c.bf16 %v3901, %v3901
        %v3934 = vpack.c.bf16 %v3902, %v3902
        %v3935 = vpack.c.bf16 %v3903, %v3903
        %v3936 = vpack.c.bf16 %v3904, %v3904
        %v3937 = vpack.c.bf16 %v3905, %v3905
        %v3938 = vpack.c.bf16 %v3906, %v3906
        %v3939 = vpack.c.bf16 %v3907, %v3907
        %v3940 = vpack.c.bf16 %v3908, %v3908
        %v3941 = vpack.c.bf16 %v3909, %v3909
        %v3942 = vpack.c.bf16 %v3910, %v3910
        %v3943 = vpack.c.bf16 %v3911, %v3911
        %v3944 = vpack.c.bf16 %v3912, %v3912
        %v3945 = vpack.c.bf16 %v3913, %v3913
        %v3946 = vpack.c.bf16 %v3914, %v3914
        %v3947 = vpack.c.bf16 %v3915, %v3915
        %v3948 = vpack.c.bf16 %v3916, %v3916
        %v3949 = vpack.c.bf16 %v3917, %v3917
        %v3950 = vpack.c.bf16 %v3918, %v3918
        %v3951 = vpack.c.bf16 %v3919, %v3919
        %v3952 = vpack.c.bf16 %v3920, %v3920
        %v3953 = vpack.c.bf16 %v3921, %v3921
        %v3954 = vpack.c.bf16 %v3922, %v3922
        %v3955 = vpack.c.bf16 %v3923, %v3923
        %v3956 = vpack.c.bf16 %v3924, %v3924
        %v3957 = vpack.c.bf16 %v3925, %v3925
        %v3958 = vpack.c.bf16 %v3926, %v3926
        %v3959 = vpack.c.bf16 %v3927, %v3927
        %v3960 = vpack.c.bf16 %v3928, %v3928
        %v3961 = vpack.c.bf16 %v3929, %v3929
        %v3962 = vpack.c.bf16 %v3930, %v3930
        %v3963 = vpack.c.bf16 %v3931, %v3931
        %v3964 = vpack.c.bf16 %v3932, %v3932
        %vm3965 = vcmask 27648
        %3966 = vst.msk [vmem:[#allocation4] sm:$0xf] %vm3965, %v3933
        %3967 = vst.msk [vmem:[#allocation4 + $0x4] sm:$0xf] %vm3965, %v3934
        %3968 = vst.msk [vmem:[#allocation4 + $0x8] sm:$0xf] %vm3965, %v3935
        %3969 = vst.msk [vmem:[#allocation4 + $0xc] sm:$0xf] %vm3965, %v3936
        %3970 = vst.msk [vmem:[#allocation4 + $0x10] sm:$0xf] %vm3965, %v3937
        %3971 = vst.msk [vmem:[#allocation4 + $0x14] sm:$0xf] %vm3965, %v3938
        %3972 = vst.msk [vmem:[#allocation4 + $0x18] sm:$0xf] %vm3965, %v3939
        %3973 = vst.msk [vmem:[#allocation4 + $0x1c] sm:$0xf] %vm3965, %v3940
        %3974 = vst.msk [vmem:[#allocation4 + $0x20] sm:$0xf] %vm3965, %v3941
        %3975 = vst.msk [vmem:[#allocation4 + $0x24] sm:$0xf] %vm3965, %v3942
        %3976 = vst.msk [vmem:[#allocation4 + $0x28] sm:$0xf] %vm3965, %v3943
        %3977 = vst.msk [vmem:[#allocation4 + $0x2c] sm:$0xf] %vm3965, %v3944
        %3978 = vst.msk [vmem:[#allocation4 + $0x30] sm:$0xf] %vm3965, %v3945
        %3979 = vst.msk [vmem:[#allocation4 + $0x34] sm:$0xf] %vm3965, %v3946
        %3980 = vst.msk [vmem:[#allocation4 + $0x38] sm:$0xf] %vm3965, %v3947
        %3981 = vst.msk [vmem:[#allocation4 + $0x3c] sm:$0xf] %vm3965, %v3948
        %3982 = vst.msk [vmem:[#allocation4 + $0x40] sm:$0xf] %vm3965, %v3949
        %3983 = vst.msk [vmem:[#allocation4 + $0x44] sm:$0xf] %vm3965, %v3950
        %3984 = vst.msk [vmem:[#allocation4 + $0x48] sm:$0xf] %vm3965, %v3951
        %3985 = vst.msk [vmem:[#allocation4 + $0x4c] sm:$0xf] %vm3965, %v3952
        %3986 = vst.msk [vmem:[#allocation4 + $0x50] sm:$0xf] %vm3965, %v3953
        %3987 = vst.msk [vmem:[#allocation4 + $0x54] sm:$0xf] %vm3965, %v3954
        %3988 = vst.msk [vmem:[#allocation4 + $0x58] sm:$0xf] %vm3965, %v3955
        %3989 = vst.msk [vmem:[#allocation4 + $0x5c] sm:$0xf] %vm3965, %v3956
        %3990 = vst.msk [vmem:[#allocation4 + $0x60] sm:$0xf] %vm3965, %v3957
        %3991 = vst.msk [vmem:[#allocation4 + $0x64] sm:$0xf] %vm3965, %v3958
        %3992 = vst.msk [vmem:[#allocation4 + $0x68] sm:$0xf] %vm3965, %v3959
        %3993 = vst.msk [vmem:[#allocation4 + $0x6c] sm:$0xf] %vm3965, %v3960
        %3994 = vst.msk [vmem:[#allocation4 + $0x70] sm:$0xf] %vm3965, %v3961
        %3995 = vst.msk [vmem:[#allocation4 + $0x74] sm:$0xf] %vm3965, %v3962
        %3996 = vst.msk [vmem:[#allocation4 + $0x78] sm:$0xf] %vm3965, %v3963
        %3997 = vst.msk [vmem:[#allocation4 + $0x7c] sm:$0xf] %vm3965, %v3964
        %v3998 = vld [vmem:[#allocation2 + $0x8] sm:$0xff]
        %v3999 = vld [vmem:[#allocation2 + $0x10] sm:$0xff]
        %v4000 = vld [vmem:[#allocation2 + $0x28] sm:$0xff]
        %v4001 = vld [vmem:[#allocation2 + $0x30] sm:$0xff]
        %v4002 = vld [vmem:[#allocation2 + $0x48] sm:$0xff]
        %v4003 = vld [vmem:[#allocation2 + $0x50] sm:$0xff]
        %v4004 = vld [vmem:[#allocation2 + $0x68] sm:$0xff]
        %v4005 = vld [vmem:[#allocation2 + $0x70] sm:$0xff]
        %v4006 = vld [vmem:[#allocation2 + $0x88] sm:$0xff]
        %v4007 = vld [vmem:[#allocation2 + $0x90] sm:$0xff]
        %v4008 = vld [vmem:[#allocation2 + $0xa8] sm:$0xff]
        %v4009 = vld [vmem:[#allocation2 + $0xb0] sm:$0xff]
        %v4010 = vld [vmem:[#allocation2 + $0xc8] sm:$0xff]
        %v4011 = vld [vmem:[#allocation2 + $0xd0] sm:$0xff]
        %v4012 = vld [vmem:[#allocation2 + $0xe8] sm:$0xff]
        %v4013 = vld [vmem:[#allocation2 + $0xf0] sm:$0xff]
        %v4014 = vld [vmem:[#allocation2 + $0x108] sm:$0xff]
        %v4015 = vld [vmem:[#allocation2 + $0x110] sm:$0xff]
        %v4016 = vld [vmem:[#allocation2 + $0x128] sm:$0xff]
        %v4017 = vld [vmem:[#allocation2 + $0x130] sm:$0xff]
        %v4018 = vld [vmem:[#allocation2 + $0x148] sm:$0xff]
        %v4019 = vld [vmem:[#allocation2 + $0x150] sm:$0xff]
        %v4020 = vld [vmem:[#allocation2 + $0x168] sm:$0xff]
        %v4021 = vld [vmem:[#allocation2 + $0x170] sm:$0xff]
        %v4022 = vld [vmem:[#allocation2 + $0x188] sm:$0xff]
        %v4023 = vld [vmem:[#allocation2 + $0x190] sm:$0xff]
        %v4024 = vld [vmem:[#allocation2 + $0x1a8] sm:$0xff]
        %v4025 = vld [vmem:[#allocation2 + $0x1b0] sm:$0xff]
        %v4026 = vld [vmem:[#allocation2 + $0x1c8] sm:$0xff]
        %v4027 = vld [vmem:[#allocation2 + $0x1d0] sm:$0xff]
        %v4028 = vld [vmem:[#allocation2 + $0x1e8] sm:$0xff]
        %v4029 = vld [vmem:[#allocation2 + $0x1f0] sm:$0xff]
        %v4030 = vpack.c.bf16 %v3998, %v3998
        %v4031 = vpack.c.bf16 %v3999, %v3999
        %v4032 = vpack.c.bf16 %v4000, %v4000
        %v4033 = vpack.c.bf16 %v4001, %v4001
        %v4034 = vpack.c.bf16 %v4002, %v4002
        %v4035 = vpack.c.bf16 %v4003, %v4003
        %v4036 = vpack.c.bf16 %v4004, %v4004
        %v4037 = vpack.c.bf16 %v4005, %v4005
        %v4038 = vpack.c.bf16 %v4006, %v4006
        %v4039 = vpack.c.bf16 %v4007, %v4007
        %v4040 = vpack.c.bf16 %v4008, %v4008
        %v4041 = vpack.c.bf16 %v4009, %v4009
        %v4042 = vpack.c.bf16 %v4010, %v4010
        %v4043 = vpack.c.bf16 %v4011, %v4011
        %v4044 = vpack.c.bf16 %v4012, %v4012
        %v4045 = vpack.c.bf16 %v4013, %v4013
        %v4046 = vpack.c.bf16 %v4014, %v4014
        %v4047 = vpack.c.bf16 %v4015, %v4015
        %v4048 = vpack.c.bf16 %v4016, %v4016
        %v4049 = vpack.c.bf16 %v4017, %v4017
        %v4050 = vpack.c.bf16 %v4018, %v4018
        %v4051 = vpack.c.bf16 %v4019, %v4019
        %v4052 = vpack.c.bf16 %v4020, %v4020
        %v4053 = vpack.c.bf16 %v4021, %v4021
        %v4054 = vpack.c.bf16 %v4022, %v4022
        %v4055 = vpack.c.bf16 %v4023, %v4023
        %v4056 = vpack.c.bf16 %v4024, %v4024
        %v4057 = vpack.c.bf16 %v4025, %v4025
        %v4058 = vpack.c.bf16 %v4026, %v4026
        %v4059 = vpack.c.bf16 %v4027, %v4027
        %v4060 = vpack.c.bf16 %v4028, %v4028
        %v4061 = vpack.c.bf16 %v4029, %v4029
        %4094 = vrot.lane.b32.xlu0 %v4030, 4
        %v4095 = vpop.permute.xlu0 %4094
        %4096 = vrot.lane.b32.xlu0 %v4031, 4
        %v4097 = vpop.permute.xlu0 %4096
        %4098 = vrot.lane.b32.xlu0 %v4032, 4
        %v4099 = vpop.permute.xlu0 %4098
        %4100 = vrot.lane.b32.xlu0 %v4033, 4
        %v4101 = vpop.permute.xlu0 %4100
        %4102 = vrot.lane.b32.xlu0 %v4034, 4
        %v4103 = vpop.permute.xlu0 %4102
        %4104 = vrot.lane.b32.xlu0 %v4035, 4
        %v4105 = vpop.permute.xlu0 %4104
        %4106 = vrot.lane.b32.xlu0 %v4036, 4
        %v4107 = vpop.permute.xlu0 %4106
        %4108 = vrot.lane.b32.xlu0 %v4037, 4
        %v4109 = vpop.permute.xlu0 %4108
        %4110 = vrot.lane.b32.xlu0 %v4038, 4
        %v4111 = vpop.permute.xlu0 %4110
        %4112 = vrot.lane.b32.xlu0 %v4039, 4
        %v4113 = vpop.permute.xlu0 %4112
        %4114 = vrot.lane.b32.xlu0 %v4040, 4
        %v4115 = vpop.permute.xlu0 %4114
        %4116 = vrot.lane.b32.xlu0 %v4041, 4
        %v4117 = vpop.permute.xlu0 %4116
        %4118 = vrot.lane.b32.xlu0 %v4042, 4
        %v4119 = vpop.permute.xlu0 %4118
        %4120 = vrot.lane.b32.xlu0 %v4043, 4
        %v4121 = vpop.permute.xlu0 %4120
        %4122 = vrot.lane.b32.xlu0 %v4044, 4
        %v4123 = vpop.permute.xlu0 %4122
        %4124 = vrot.lane.b32.xlu0 %v4045, 4
        %v4125 = vpop.permute.xlu0 %4124
        %4126 = vrot.lane.b32.xlu0 %v4046, 4
        %v4127 = vpop.permute.xlu0 %4126
        %4128 = vrot.lane.b32.xlu0 %v4047, 4
        %v4129 = vpop.permute.xlu0 %4128
        %4130 = vrot.lane.b32.xlu0 %v4048, 4
        %v4131 = vpop.permute.xlu0 %4130
        %4132 = vrot.lane.b32.xlu0 %v4049, 4
        %v4133 = vpop.permute.xlu0 %4132
        %4134 = vrot.lane.b32.xlu0 %v4050, 4
        %v4135 = vpop.permute.xlu0 %4134
        %4136 = vrot.lane.b32.xlu0 %v4051, 4
        %v4137 = vpop.permute.xlu0 %4136
        %4138 = vrot.lane.b32.xlu0 %v4052, 4
        %v4139 = vpop.permute.xlu0 %4138
        %4140 = vrot.lane.b32.xlu0 %v4053, 4
        %v4141 = vpop.permute.xlu0 %4140
        %4142 = vrot.lane.b32.xlu0 %v4054, 4
        %v4143 = vpop.permute.xlu0 %4142
        %4144 = vrot.lane.b32.xlu0 %v4055, 4
        %v4145 = vpop.permute.xlu0 %4144
        %4146 = vrot.lane.b32.xlu0 %v4056, 4
        %v4147 = vpop.permute.xlu0 %4146
        %4148 = vrot.lane.b32.xlu0 %v4057, 4
        %v4149 = vpop.permute.xlu0 %4148
        %4150 = vrot.lane.b32.xlu0 %v4058, 4
        %v4151 = vpop.permute.xlu0 %4150
        %4152 = vrot.lane.b32.xlu0 %v4059, 4
        %v4153 = vpop.permute.xlu0 %4152
        %4154 = vrot.lane.b32.xlu0 %v4060, 4
        %v4155 = vpop.permute.xlu0 %4154
        %4156 = vrot.lane.b32.xlu0 %v4061, 4
        %v4157 = vpop.permute.xlu0 %4156
        %vm4190 = vcmask 60448
        %4191 = vst.msk [vmem:[#allocation4] sm:$0xf] %vm4190, %v4095
        %4192 = vst.msk [vmem:[#allocation4 + $0x4] sm:$0xf] %vm4190, %v4097
        %4193 = vst.msk [vmem:[#allocation4 + $0x8] sm:$0xf] %vm4190, %v4099
        %4194 = vst.msk [vmem:[#allocation4 + $0xc] sm:$0xf] %vm4190, %v4101
        %4195 = vst.msk [vmem:[#allocation4 + $0x10] sm:$0xf] %vm4190, %v4103
        %4196 = vst.msk [vmem:[#allocation4 + $0x14] sm:$0xf] %vm4190, %v4105
        %4197 = vst.msk [vmem:[#allocation4 + $0x18] sm:$0xf] %vm4190, %v4107
        %4198 = vst.msk [vmem:[#allocation4 + $0x1c] sm:$0xf] %vm4190, %v4109
        %4199 = vst.msk [vmem:[#allocation4 + $0x20] sm:$0xf] %vm4190, %v4111
        %4200 = vst.msk [vmem:[#allocation4 + $0x24] sm:$0xf] %vm4190, %v4113
        %4201 = vst.msk [vmem:[#allocation4 + $0x28] sm:$0xf] %vm4190, %v4115
        %4202 = vst.msk [vmem:[#allocation4 + $0x2c] sm:$0xf] %vm4190, %v4117
        %4203 = vst.msk [vmem:[#allocation4 + $0x30] sm:$0xf] %vm4190, %v4119
        %4204 = vst.msk [vmem:[#allocation4 + $0x34] sm:$0xf] %vm4190, %v4121
        %4205 = vst.msk [vmem:[#allocation4 + $0x38] sm:$0xf] %vm4190, %v4123
        %4206 = vst.msk [vmem:[#allocation4 + $0x3c] sm:$0xf] %vm4190, %v4125
        %4207 = vst.msk [vmem:[#allocation4 + $0x40] sm:$0xf] %vm4190, %v4127
        %4208 = vst.msk [vmem:[#allocation4 + $0x44] sm:$0xf] %vm4190, %v4129
        %4209 = vst.msk [vmem:[#allocation4 + $0x48] sm:$0xf] %vm4190, %v4131
        %4210 = vst.msk [vmem:[#allocation4 + $0x4c] sm:$0xf] %vm4190, %v4133
        %4211 = vst.msk [vmem:[#allocation4 + $0x50] sm:$0xf] %vm4190, %v4135
        %4212 = vst.msk [vmem:[#allocation4 + $0x54] sm:$0xf] %vm4190, %v4137
        %4213 = vst.msk [vmem:[#allocation4 + $0x58] sm:$0xf] %vm4190, %v4139
        %4214 = vst.msk [vmem:[#allocation4 + $0x5c] sm:$0xf] %vm4190, %v4141
        %4215 = vst.msk [vmem:[#allocation4 + $0x60] sm:$0xf] %vm4190, %v4143
        %4216 = vst.msk [vmem:[#allocation4 + $0x64] sm:$0xf] %vm4190, %v4145
        %4217 = vst.msk [vmem:[#allocation4 + $0x68] sm:$0xf] %vm4190, %v4147
        %4218 = vst.msk [vmem:[#allocation4 + $0x6c] sm:$0xf] %vm4190, %v4149
        %4219 = vst.msk [vmem:[#allocation4 + $0x70] sm:$0xf] %vm4190, %v4151
        %4220 = vst.msk [vmem:[#allocation4 + $0x74] sm:$0xf] %vm4190, %v4153
        %4221 = vst.msk [vmem:[#allocation4 + $0x78] sm:$0xf] %vm4190, %v4155
        %4222 = vst.msk [vmem:[#allocation4 + $0x7c] sm:$0xf] %vm4190, %v4157
        %v4223 = vld [vmem:[#allocation2 + $0x9] sm:$0xff]
        %v4224 = vld [vmem:[#allocation2 + $0x11] sm:$0xff]
        %v4225 = vld [vmem:[#allocation2 + $0x29] sm:$0xff]
        %v4226 = vld [vmem:[#allocation2 + $0x31] sm:$0xff]
        %v4227 = vld [vmem:[#allocation2 + $0x49] sm:$0xff]
        %v4228 = vld [vmem:[#allocation2 + $0x51] sm:$0xff]
        %v4229 = vld [vmem:[#allocation2 + $0x69] sm:$0xff]
        %v4230 = vld [vmem:[#allocation2 + $0x71] sm:$0xff]
        %v4231 = vld [vmem:[#allocation2 + $0x89] sm:$0xff]
        %v4232 = vld [vmem:[#allocation2 + $0x91] sm:$0xff]
        %v4233 = vld [vmem:[#allocation2 + $0xa9] sm:$0xff]
        %v4234 = vld [vmem:[#allocation2 + $0xb1] sm:$0xff]
        %v4235 = vld [vmem:[#allocation2 + $0xc9] sm:$0xff]
        %v4236 = vld [vmem:[#allocation2 + $0xd1] sm:$0xff]
        %v4237 = vld [vmem:[#allocation2 + $0xe9] sm:$0xff]
        %v4238 = vld [vmem:[#allocation2 + $0xf1] sm:$0xff]
        %v4239 = vld [vmem:[#allocation2 + $0x109] sm:$0xff]
        %v4240 = vld [vmem:[#allocation2 + $0x111] sm:$0xff]
        %v4241 = vld [vmem:[#allocation2 + $0x129] sm:$0xff]
        %v4242 = vld [vmem:[#allocation2 + $0x131] sm:$0xff]
        %v4243 = vld [vmem:[#allocation2 + $0x149] sm:$0xff]
        %v4244 = vld [vmem:[#allocation2 + $0x151] sm:$0xff]
        %v4245 = vld [vmem:[#allocation2 + $0x169] sm:$0xff]
        %v4246 = vld [vmem:[#allocation2 + $0x171] sm:$0xff]
        %v4247 = vld [vmem:[#allocation2 + $0x189] sm:$0xff]
        %v4248 = vld [vmem:[#allocation2 + $0x191] sm:$0xff]
        %v4249 = vld [vmem:[#allocation2 + $0x1a9] sm:$0xff]
        %v4250 = vld [vmem:[#allocation2 + $0x1b1] sm:$0xff]
        %v4251 = vld [vmem:[#allocation2 + $0x1c9] sm:$0xff]
        %v4252 = vld [vmem:[#allocation2 + $0x1d1] sm:$0xff]
        %v4253 = vld [vmem:[#allocation2 + $0x1e9] sm:$0xff]
        %v4254 = vld [vmem:[#allocation2 + $0x1f1] sm:$0xff]
        %v4255 = vpack.c.bf16 %v4223, %v4223
        %v4256 = vpack.c.bf16 %v4224, %v4224
        %v4257 = vpack.c.bf16 %v4225, %v4225
        %v4258 = vpack.c.bf16 %v4226, %v4226
        %v4259 = vpack.c.bf16 %v4227, %v4227
        %v4260 = vpack.c.bf16 %v4228, %v4228
        %v4261 = vpack.c.bf16 %v4229, %v4229
        %v4262 = vpack.c.bf16 %v4230, %v4230
        %v4263 = vpack.c.bf16 %v4231, %v4231
        %v4264 = vpack.c.bf16 %v4232, %v4232
        %v4265 = vpack.c.bf16 %v4233, %v4233
        %v4266 = vpack.c.bf16 %v4234, %v4234
        %v4267 = vpack.c.bf16 %v4235, %v4235
        %v4268 = vpack.c.bf16 %v4236, %v4236
        %v4269 = vpack.c.bf16 %v4237, %v4237
        %v4270 = vpack.c.bf16 %v4238, %v4238
        %v4271 = vpack.c.bf16 %v4239, %v4239
        %v4272 = vpack.c.bf16 %v4240, %v4240
        %v4273 = vpack.c.bf16 %v4241, %v4241
        %v4274 = vpack.c.bf16 %v4242, %v4242
        %v4275 = vpack.c.bf16 %v4243, %v4243
        %v4276 = vpack.c.bf16 %v4244, %v4244
        %v4277 = vpack.c.bf16 %v4245, %v4245
        %v4278 = vpack.c.bf16 %v4246, %v4246
        %v4279 = vpack.c.bf16 %v4247, %v4247
        %v4280 = vpack.c.bf16 %v4248, %v4248
        %v4281 = vpack.c.bf16 %v4249, %v4249
        %v4282 = vpack.c.bf16 %v4250, %v4250
        %v4283 = vpack.c.bf16 %v4251, %v4251
        %v4284 = vpack.c.bf16 %v4252, %v4252
        %v4285 = vpack.c.bf16 %v4253, %v4253
        %v4286 = vpack.c.bf16 %v4254, %v4254
        %4319 = vrot.lane.b32.xlu0 %v4255, 8
        %v4320 = vpop.permute.xlu0 %4319
        %4321 = vrot.lane.b32.xlu0 %v4256, 8
        %v4322 = vpop.permute.xlu0 %4321
        %4323 = vrot.lane.b32.xlu0 %v4257, 8
        %v4324 = vpop.permute.xlu0 %4323
        %4325 = vrot.lane.b32.xlu0 %v4258, 8
        %v4326 = vpop.permute.xlu0 %4325
        %4327 = vrot.lane.b32.xlu0 %v4259, 8
        %v4328 = vpop.permute.xlu0 %4327
        %4329 = vrot.lane.b32.xlu0 %v4260, 8
        %v4330 = vpop.permute.xlu0 %4329
        %4331 = vrot.lane.b32.xlu0 %v4261, 8
        %v4332 = vpop.permute.xlu0 %4331
        %4333 = vrot.lane.b32.xlu0 %v4262, 8
        %v4334 = vpop.permute.xlu0 %4333
        %4335 = vrot.lane.b32.xlu0 %v4263, 8
        %v4336 = vpop.permute.xlu0 %4335
        %4337 = vrot.lane.b32.xlu0 %v4264, 8
        %v4338 = vpop.permute.xlu0 %4337
        %4339 = vrot.lane.b32.xlu0 %v4265, 8
        %v4340 = vpop.permute.xlu0 %4339
        %4341 = vrot.lane.b32.xlu0 %v4266, 8
        %v4342 = vpop.permute.xlu0 %4341
        %4343 = vrot.lane.b32.xlu0 %v4267, 8
        %v4344 = vpop.permute.xlu0 %4343
        %4345 = vrot.lane.b32.xlu0 %v4268, 8
        %v4346 = vpop.permute.xlu0 %4345
        %4347 = vrot.lane.b32.xlu0 %v4269, 8
        %v4348 = vpop.permute.xlu0 %4347
        %4349 = vrot.lane.b32.xlu0 %v4270, 8
        %v4350 = vpop.permute.xlu0 %4349
        %4351 = vrot.lane.b32.xlu0 %v4271, 8
        %v4352 = vpop.permute.xlu0 %4351
        %4353 = vrot.lane.b32.xlu0 %v4272, 8
        %v4354 = vpop.permute.xlu0 %4353
        %4355 = vrot.lane.b32.xlu0 %v4273, 8
        %v4356 = vpop.permute.xlu0 %4355
        %4357 = vrot.lane.b32.xlu0 %v4274, 8
        %v4358 = vpop.permute.xlu0 %4357
        %4359 = vrot.lane.b32.xlu0 %v4275, 8
        %v4360 = vpop.permute.xlu0 %4359
        %4361 = vrot.lane.b32.xlu0 %v4276, 8
        %v4362 = vpop.permute.xlu0 %4361
        %4363 = vrot.lane.b32.xlu0 %v4277, 8
        %v4364 = vpop.permute.xlu0 %4363
        %4365 = vrot.lane.b32.xlu0 %v4278, 8
        %v4366 = vpop.permute.xlu0 %4365
        %4367 = vrot.lane.b32.xlu0 %v4279, 8
        %v4368 = vpop.permute.xlu0 %4367
        %4369 = vrot.lane.b32.xlu0 %v4280, 8
        %v4370 = vpop.permute.xlu0 %4369
        %4371 = vrot.lane.b32.xlu0 %v4281, 8
        %v4372 = vpop.permute.xlu0 %4371
        %4373 = vrot.lane.b32.xlu0 %v4282, 8
        %v4374 = vpop.permute.xlu0 %4373
        %4375 = vrot.lane.b32.xlu0 %v4283, 8
        %v4376 = vpop.permute.xlu0 %4375
        %4377 = vrot.lane.b32.xlu0 %v4284, 8
        %v4378 = vpop.permute.xlu0 %4377
        %4379 = vrot.lane.b32.xlu0 %v4285, 8
        %v4380 = vpop.permute.xlu0 %4379
        %4381 = vrot.lane.b32.xlu0 %v4286, 8
        %v4382 = vpop.permute.xlu0 %4381
        %vm4415 = vcmask 93248
        %4416 = vst.msk [vmem:[#allocation4] sm:$0xf] %vm4415, %v4320
        %4417 = vst.msk [vmem:[#allocation4 + $0x4] sm:$0xf] %vm4415, %v4322
        %4418 = vst.msk [vmem:[#allocation4 + $0x8] sm:$0xf] %vm4415, %v4324
        %4419 = vst.msk [vmem:[#allocation4 + $0xc] sm:$0xf] %vm4415, %v4326
        %4420 = vst.msk [vmem:[#allocation4 + $0x10] sm:$0xf] %vm4415, %v4328
        %4421 = vst.msk [vmem:[#allocation4 + $0x14] sm:$0xf] %vm4415, %v4330
        %4422 = vst.msk [vmem:[#allocation4 + $0x18] sm:$0xf] %vm4415, %v4332
        %4423 = vst.msk [vmem:[#allocation4 + $0x1c] sm:$0xf] %vm4415, %v4334
        %4424 = vst.msk [vmem:[#allocation4 + $0x20] sm:$0xf] %vm4415, %v4336
        %4425 = vst.msk [vmem:[#allocation4 + $0x24] sm:$0xf] %vm4415, %v4338
        %4426 = vst.msk [vmem:[#allocation4 + $0x28] sm:$0xf] %vm4415, %v4340
        %4427 = vst.msk [vmem:[#allocation4 + $0x2c] sm:$0xf] %vm4415, %v4342
        %4428 = vst.msk [vmem:[#allocation4 + $0x30] sm:$0xf] %vm4415, %v4344
        %4429 = vst.msk [vmem:[#allocation4 + $0x34] sm:$0xf] %vm4415, %v4346
        %4430 = vst.msk [vmem:[#allocation4 + $0x38] sm:$0xf] %vm4415, %v4348
        %4431 = vst.msk [vmem:[#allocation4 + $0x3c] sm:$0xf] %vm4415, %v4350
        %4432 = vst.msk [vmem:[#allocation4 + $0x40] sm:$0xf] %vm4415, %v4352
        %4433 = vst.msk [vmem:[#allocation4 + $0x44] sm:$0xf] %vm4415, %v4354
        %4434 = vst.msk [vmem:[#allocation4 + $0x48] sm:$0xf] %vm4415, %v4356
        %4435 = vst.msk [vmem:[#allocation4 + $0x4c] sm:$0xf] %vm4415, %v4358
        %4436 = vst.msk [vmem:[#allocation4 + $0x50] sm:$0xf] %vm4415, %v4360
        %4437 = vst.msk [vmem:[#allocation4 + $0x54] sm:$0xf] %vm4415, %v4362
        %4438 = vst.msk [vmem:[#allocation4 + $0x58] sm:$0xf] %vm4415, %v4364
        %4439 = vst.msk [vmem:[#allocation4 + $0x5c] sm:$0xf] %vm4415, %v4366
        %4440 = vst.msk [vmem:[#allocation4 + $0x60] sm:$0xf] %vm4415, %v4368
        %4441 = vst.msk [vmem:[#allocation4 + $0x64] sm:$0xf] %vm4415, %v4370
        %4442 = vst.msk [vmem:[#allocation4 + $0x68] sm:$0xf] %vm4415, %v4372
        %4443 = vst.msk [vmem:[#allocation4 + $0x6c] sm:$0xf] %vm4415, %v4374
        %4444 = vst.msk [vmem:[#allocation4 + $0x70] sm:$0xf] %vm4415, %v4376
        %4445 = vst.msk [vmem:[#allocation4 + $0x74] sm:$0xf] %vm4415, %v4378
        %4446 = vst.msk [vmem:[#allocation4 + $0x78] sm:$0xf] %vm4415, %v4380
        %4447 = vst.msk [vmem:[#allocation4 + $0x7c] sm:$0xf] %vm4415, %v4382
        %v4448 = vld [vmem:[%s3836 + $0x7] sm:$0xff]
        %v4449 = vld [vmem:[%s3836 + $0xf] sm:$0xff]
        %v4450 = vld [vmem:[%s3836 + $0x27] sm:$0xff]
        %v4451 = vld [vmem:[%s3836 + $0x2f] sm:$0xff]
        %v4452 = vld [vmem:[%s3836 + $0x47] sm:$0xff]
        %v4453 = vld [vmem:[%s3836 + $0x4f] sm:$0xff]
        %v4454 = vld [vmem:[%s3836 + $0x67] sm:$0xff]
        %v4455 = vld [vmem:[%s3836 + $0x6f] sm:$0xff]
        %v4456 = vld [vmem:[%s3836 + $0x87] sm:$0xff]
        %v4457 = vld [vmem:[%s3836 + $0x8f] sm:$0xff]
        %v4458 = vld [vmem:[%s3836 + $0xa7] sm:$0xff]
        %v4459 = vld [vmem:[%s3836 + $0xaf] sm:$0xff]
        %v4460 = vld [vmem:[%s3836 + $0xc7] sm:$0xff]
        %v4461 = vld [vmem:[%s3836 + $0xcf] sm:$0xff]
        %v4462 = vld [vmem:[%s3836 + $0xe7] sm:$0xff]
        %v4463 = vld [vmem:[%s3836 + $0xef] sm:$0xff]
        %v4464 = vld [vmem:[%s3836 + $0x107] sm:$0xff]
        %v4465 = vld [vmem:[%s3836 + $0x10f] sm:$0xff]
        %v4466 = vld [vmem:[%s3836 + $0x127] sm:$0xff]
        %v4467 = vld [vmem:[%s3836 + $0x12f] sm:$0xff]
        %v4468 = vld [vmem:[%s3836 + $0x147] sm:$0xff]
        %v4469 = vld [vmem:[%s3836 + $0x14f] sm:$0xff]
        %v4470 = vld [vmem:[%s3836 + $0x167] sm:$0xff]
        %v4471 = vld [vmem:[%s3836 + $0x16f] sm:$0xff]
        %v4472 = vld [vmem:[%s3836 + $0x187] sm:$0xff]
        %v4473 = vld [vmem:[%s3836 + $0x18f] sm:$0xff]
        %v4474 = vld [vmem:[%s3836 + $0x1a7] sm:$0xff]
        %v4475 = vld [vmem:[%s3836 + $0x1af] sm:$0xff]
        %v4476 = vld [vmem:[%s3836 + $0x1c7] sm:$0xff]
        %v4477 = vld [vmem:[%s3836 + $0x1cf] sm:$0xff]
        %v4478 = vld [vmem:[%s3836 + $0x1e7] sm:$0xff]
        %v4479 = vld [vmem:[%s3836 + $0x1ef] sm:$0xff]
        %v4480 = vpack.c.bf16 %v4448, %v4448
        %v4481 = vpack.c.bf16 %v4449, %v4449
        %v4482 = vpack.c.bf16 %v4450, %v4450
        %v4483 = vpack.c.bf16 %v4451, %v4451
        %v4484 = vpack.c.bf16 %v4452, %v4452
        %v4485 = vpack.c.bf16 %v4453, %v4453
        %v4486 = vpack.c.bf16 %v4454, %v4454
        %v4487 = vpack.c.bf16 %v4455, %v4455
        %v4488 = vpack.c.bf16 %v4456, %v4456
        %v4489 = vpack.c.bf16 %v4457, %v4457
        %v4490 = vpack.c.bf16 %v4458, %v4458
        %v4491 = vpack.c.bf16 %v4459, %v4459
        %v4492 = vpack.c.bf16 %v4460, %v4460
        %v4493 = vpack.c.bf16 %v4461, %v4461
        %v4494 = vpack.c.bf16 %v4462, %v4462
        %v4495 = vpack.c.bf16 %v4463, %v4463
        %v4496 = vpack.c.bf16 %v4464, %v4464
        %v4497 = vpack.c.bf16 %v4465, %v4465
        %v4498 = vpack.c.bf16 %v4466, %v4466
        %v4499 = vpack.c.bf16 %v4467, %v4467
        %v4500 = vpack.c.bf16 %v4468, %v4468
        %v4501 = vpack.c.bf16 %v4469, %v4469
        %v4502 = vpack.c.bf16 %v4470, %v4470
        %v4503 = vpack.c.bf16 %v4471, %v4471
        %v4504 = vpack.c.bf16 %v4472, %v4472
        %v4505 = vpack.c.bf16 %v4473, %v4473
        %v4506 = vpack.c.bf16 %v4474, %v4474
        %v4507 = vpack.c.bf16 %v4475, %v4475
        %v4508 = vpack.c.bf16 %v4476, %v4476
        %v4509 = vpack.c.bf16 %v4477, %v4477
        %v4510 = vpack.c.bf16 %v4478, %v4478
        %v4511 = vpack.c.bf16 %v4479, %v4479
        %4544 = vrot.lane.b32.xlu0 %v4480, 12
        %v4545 = vpop.permute.xlu0 %4544
        %4546 = vrot.lane.b32.xlu0 %v4481, 12
        %v4547 = vpop.permute.xlu0 %4546
        %4548 = vrot.lane.b32.xlu0 %v4482, 12
        %v4549 = vpop.permute.xlu0 %4548
        %4550 = vrot.lane.b32.xlu0 %v4483, 12
        %v4551 = vpop.permute.xlu0 %4550
        %4552 = vrot.lane.b32.xlu0 %v4484, 12
        %v4553 = vpop.permute.xlu0 %4552
        %4554 = vrot.lane.b32.xlu0 %v4485, 12
        %v4555 = vpop.permute.xlu0 %4554
        %4556 = vrot.lane.b32.xlu0 %v4486, 12
        %v4557 = vpop.permute.xlu0 %4556
        %4558 = vrot.lane.b32.xlu0 %v4487, 12
        %v4559 = vpop.permute.xlu0 %4558
        %4560 = vrot.lane.b32.xlu0 %v4488, 12
        %v4561 = vpop.permute.xlu0 %4560
        %4562 = vrot.lane.b32.xlu0 %v4489, 12
        %v4563 = vpop.permute.xlu0 %4562
        %4564 = vrot.lane.b32.xlu0 %v4490, 12
        %v4565 = vpop.permute.xlu0 %4564
        %4566 = vrot.lane.b32.xlu0 %v4491, 12
        %v4567 = vpop.permute.xlu0 %4566
        %4568 = vrot.lane.b32.xlu0 %v4492, 12
        %v4569 = vpop.permute.xlu0 %4568
        %4570 = vrot.lane.b32.xlu0 %v4493, 12
        %v4571 = vpop.permute.xlu0 %4570
        %4572 = vrot.lane.b32.xlu0 %v4494, 12
        %v4573 = vpop.permute.xlu0 %4572
        %4574 = vrot.lane.b32.xlu0 %v4495, 12
        %v4575 = vpop.permute.xlu0 %4574
        %4576 = vrot.lane.b32.xlu0 %v4496, 12
        %v4577 = vpop.permute.xlu0 %4576
        %4578 = vrot.lane.b32.xlu0 %v4497, 12
        %v4579 = vpop.permute.xlu0 %4578
        %4580 = vrot.lane.b32.xlu0 %v4498, 12
        %v4581 = vpop.permute.xlu0 %4580
        %4582 = vrot.lane.b32.xlu0 %v4499, 12
        %v4583 = vpop.permute.xlu0 %4582
        %4584 = vrot.lane.b32.xlu0 %v4500, 12
        %v4585 = vpop.permute.xlu0 %4584
        %4586 = vrot.lane.b32.xlu0 %v4501, 12
        %v4587 = vpop.permute.xlu0 %4586
        %4588 = vrot.lane.b32.xlu0 %v4502, 12
        %v4589 = vpop.permute.xlu0 %4588
        %4590 = vrot.lane.b32.xlu0 %v4503, 12
        %v4591 = vpop.permute.xlu0 %4590
        %4592 = vrot.lane.b32.xlu0 %v4504, 12
        %v4593 = vpop.permute.xlu0 %4592
        %4594 = vrot.lane.b32.xlu0 %v4505, 12
        %v4595 = vpop.permute.xlu0 %4594
        %4596 = vrot.lane.b32.xlu0 %v4506, 12
        %v4597 = vpop.permute.xlu0 %4596
        %4598 = vrot.lane.b32.xlu0 %v4507, 12
        %v4599 = vpop.permute.xlu0 %4598
        %4600 = vrot.lane.b32.xlu0 %v4508, 12
        %v4601 = vpop.permute.xlu0 %4600
        %4602 = vrot.lane.b32.xlu0 %v4509, 12
        %v4603 = vpop.permute.xlu0 %4602
        %4604 = vrot.lane.b32.xlu0 %v4510, 12
        %v4605 = vpop.permute.xlu0 %4604
        %4606 = vrot.lane.b32.xlu0 %v4511, 12
        %v4607 = vpop.permute.xlu0 %4606
        %vm4640 = vcmask 126048
        %4641 = vst.msk [vmem:[#allocation4] sm:$0xf] %vm4640, %v4545
        %4642 = vst.msk [vmem:[#allocation4 + $0x4] sm:$0xf] %vm4640, %v4547
        %4643 = vst.msk [vmem:[#allocation4 + $0x8] sm:$0xf] %vm4640, %v4549
        %4644 = vst.msk [vmem:[#allocation4 + $0xc] sm:$0xf] %vm4640, %v4551
        %4645 = vst.msk [vmem:[#allocation4 + $0x10] sm:$0xf] %vm4640, %v4553
        %4646 = vst.msk [vmem:[#allocation4 + $0x14] sm:$0xf] %vm4640, %v4555
        %4647 = vst.msk [vmem:[#allocation4 + $0x18] sm:$0xf] %vm4640, %v4557
        %4648 = vst.msk [vmem:[#allocation4 + $0x1c] sm:$0xf] %vm4640, %v4559
        %4649 = vst.msk [vmem:[#allocation4 + $0x20] sm:$0xf] %vm4640, %v4561
        %4650 = vst.msk [vmem:[#allocation4 + $0x24] sm:$0xf] %vm4640, %v4563
        %4651 = vst.msk [vmem:[#allocation4 + $0x28] sm:$0xf] %vm4640, %v4565
        %4652 = vst.msk [vmem:[#allocation4 + $0x2c] sm:$0xf] %vm4640, %v4567
        %4653 = vst.msk [vmem:[#allocation4 + $0x30] sm:$0xf] %vm4640, %v4569
        %4654 = vst.msk [vmem:[#allocation4 + $0x34] sm:$0xf] %vm4640, %v4571
        %4655 = vst.msk [vmem:[#allocation4 + $0x38] sm:$0xf] %vm4640, %v4573
        %4656 = vst.msk [vmem:[#allocation4 + $0x3c] sm:$0xf] %vm4640, %v4575
        %4657 = vst.msk [vmem:[#allocation4 + $0x40] sm:$0xf] %vm4640, %v4577
        %4658 = vst.msk [vmem:[#allocation4 + $0x44] sm:$0xf] %vm4640, %v4579
        %4659 = vst.msk [vmem:[#allocation4 + $0x48] sm:$0xf] %vm4640, %v4581
        %4660 = vst.msk [vmem:[#allocation4 + $0x4c] sm:$0xf] %vm4640, %v4583
        %4661 = vst.msk [vmem:[#allocation4 + $0x50] sm:$0xf] %vm4640, %v4585
        %4662 = vst.msk [vmem:[#allocation4 + $0x54] sm:$0xf] %vm4640, %v4587
        %4663 = vst.msk [vmem:[#allocation4 + $0x58] sm:$0xf] %vm4640, %v4589
        %4664 = vst.msk [vmem:[#allocation4 + $0x5c] sm:$0xf] %vm4640, %v4591
        %4665 = vst.msk [vmem:[#allocation4 + $0x60] sm:$0xf] %vm4640, %v4593
        %4666 = vst.msk [vmem:[#allocation4 + $0x64] sm:$0xf] %vm4640, %v4595
        %4667 = vst.msk [vmem:[#allocation4 + $0x68] sm:$0xf] %vm4640, %v4597
        %4668 = vst.msk [vmem:[#allocation4 + $0x6c] sm:$0xf] %vm4640, %v4599
        %4669 = vst.msk [vmem:[#allocation4 + $0x70] sm:$0xf] %vm4640, %v4601
        %4670 = vst.msk [vmem:[#allocation4 + $0x74] sm:$0xf] %vm4640, %v4603
        %4671 = vst.msk [vmem:[#allocation4 + $0x78] sm:$0xf] %vm4640, %v4605
        %4672 = vst.msk [vmem:[#allocation4 + $0x7c] sm:$0xf] %vm4640, %v4607
        %v4673 = vld [vmem:[%s3836 + $0x8] sm:$0xff]
        %v4674 = vld [vmem:[%s3836 + $0x10] sm:$0xff]
        %v4675 = vld [vmem:[%s3836 + $0x28] sm:$0xff]
        %v4676 = vld [vmem:[%s3836 + $0x30] sm:$0xff]
        %v4677 = vld [vmem:[%s3836 + $0x48] sm:$0xff]
        %v4678 = vld [vmem:[%s3836 + $0x50] sm:$0xff]
        %v4679 = vld [vmem:[%s3836 + $0x68] sm:$0xff]
        %v4680 = vld [vmem:[%s3836 + $0x70] sm:$0xff]
        %v4681 = vld [vmem:[%s3836 + $0x88] sm:$0xff]
        %v4682 = vld [vmem:[%s3836 + $0x90] sm:$0xff]
        %v4683 = vld [vmem:[%s3836 + $0xa8] sm:$0xff]
        %v4684 = vld [vmem:[%s3836 + $0xb0] sm:$0xff]
        %v4685 = vld [vmem:[%s3836 + $0xc8] sm:$0xff]
        %v4686 = vld [vmem:[%s3836 + $0xd0] sm:$0xff]
        %v4687 = vld [vmem:[%s3836 + $0xe8] sm:$0xff]
        %v4688 = vld [vmem:[%s3836 + $0xf0] sm:$0xff]
        %v4689 = vld [vmem:[%s3836 + $0x108] sm:$0xff]
        %v4690 = vld [vmem:[%s3836 + $0x110] sm:$0xff]
        %v4691 = vld [vmem:[%s3836 + $0x128] sm:$0xff]
        %v4692 = vld [vmem:[%s3836 + $0x130] sm:$0xff]
        %v4693 = vld [vmem:[%s3836 + $0x148] sm:$0xff]
        %v4694 = vld [vmem:[%s3836 + $0x150] sm:$0xff]
        %v4695 = vld [vmem:[%s3836 + $0x168] sm:$0xff]
        %v4696 = vld [vmem:[%s3836 + $0x170] sm:$0xff]
        %v4697 = vld [vmem:[%s3836 + $0x188] sm:$0xff]
        %v4698 = vld [vmem:[%s3836 + $0x190] sm:$0xff]
        %v4699 = vld [vmem:[%s3836 + $0x1a8] sm:$0xff]
        %v4700 = vld [vmem:[%s3836 + $0x1b0] sm:$0xff]
        %v4701 = vld [vmem:[%s3836 + $0x1c8] sm:$0xff]
        %v4702 = vld [vmem:[%s3836 + $0x1d0] sm:$0xff]
        %v4703 = vld [vmem:[%s3836 + $0x1e8] sm:$0xff]
        %v4704 = vld [vmem:[%s3836 + $0x1f0] sm:$0xff]
        %v4705 = vpack.c.bf16 %v4673, %v4673
        %v4706 = vpack.c.bf16 %v4674, %v4674
        %v4707 = vpack.c.bf16 %v4675, %v4675
        %v4708 = vpack.c.bf16 %v4676, %v4676
        %v4709 = vpack.c.bf16 %v4677, %v4677
        %v4710 = vpack.c.bf16 %v4678, %v4678
        %v4711 = vpack.c.bf16 %v4679, %v4679
        %v4712 = vpack.c.bf16 %v4680, %v4680
        %v4713 = vpack.c.bf16 %v4681, %v4681
        %v4714 = vpack.c.bf16 %v4682, %v4682
        %v4715 = vpack.c.bf16 %v4683, %v4683
        %v4716 = vpack.c.bf16 %v4684, %v4684
        %v4717 = vpack.c.bf16 %v4685, %v4685
        %v4718 = vpack.c.bf16 %v4686, %v4686
        %v4719 = vpack.c.bf16 %v4687, %v4687
        %v4720 = vpack.c.bf16 %v4688, %v4688
        %v4721 = vpack.c.bf16 %v4689, %v4689
        %v4722 = vpack.c.bf16 %v4690, %v4690
        %v4723 = vpack.c.bf16 %v4691, %v4691
        %v4724 = vpack.c.bf16 %v4692, %v4692
        %v4725 = vpack.c.bf16 %v4693, %v4693
        %v4726 = vpack.c.bf16 %v4694, %v4694
        %v4727 = vpack.c.bf16 %v4695, %v4695
        %v4728 = vpack.c.bf16 %v4696, %v4696
        %v4729 = vpack.c.bf16 %v4697, %v4697
        %v4730 = vpack.c.bf16 %v4698, %v4698
        %v4731 = vpack.c.bf16 %v4699, %v4699
        %v4732 = vpack.c.bf16 %v4700, %v4700
        %v4733 = vpack.c.bf16 %v4701, %v4701
        %v4734 = vpack.c.bf16 %v4702, %v4702
        %v4735 = vpack.c.bf16 %v4703, %v4703
        %v4736 = vpack.c.bf16 %v4704, %v4704
        %4769 = vrot.lane.b32.xlu0 %v4705, 16
        %v4770 = vpop.permute.xlu0 %4769
        %4771 = vrot.lane.b32.xlu0 %v4706, 16
        %v4772 = vpop.permute.xlu0 %4771
        %4773 = vrot.lane.b32.xlu0 %v4707, 16
        %v4774 = vpop.permute.xlu0 %4773
        %4775 = vrot.lane.b32.xlu0 %v4708, 16
        %v4776 = vpop.permute.xlu0 %4775
        %4777 = vrot.lane.b32.xlu0 %v4709, 16
        %v4778 = vpop.permute.xlu0 %4777
        %4779 = vrot.lane.b32.xlu0 %v4710, 16
        %v4780 = vpop.permute.xlu0 %4779
        %4781 = vrot.lane.b32.xlu0 %v4711, 16
        %v4782 = vpop.permute.xlu0 %4781
        %4783 = vrot.lane.b32.xlu0 %v4712, 16
        %v4784 = vpop.permute.xlu0 %4783
        %4785 = vrot.lane.b32.xlu0 %v4713, 16
        %v4786 = vpop.permute.xlu0 %4785
        %4787 = vrot.lane.b32.xlu0 %v4714, 16
        %v4788 = vpop.permute.xlu0 %4787
        %4789 = vrot.lane.b32.xlu0 %v4715, 16
        %v4790 = vpop.permute.xlu0 %4789
        %4791 = vrot.lane.b32.xlu0 %v4716, 16
        %v4792 = vpop.permute.xlu0 %4791
        %4793 = vrot.lane.b32.xlu0 %v4717, 16
        %v4794 = vpop.permute.xlu0 %4793
        %4795 = vrot.lane.b32.xlu0 %v4718, 16
        %v4796 = vpop.permute.xlu0 %4795
        %4797 = vrot.lane.b32.xlu0 %v4719, 16
        %v4798 = vpop.permute.xlu0 %4797
        %4799 = vrot.lane.b32.xlu0 %v4720, 16
        %v4800 = vpop.permute.xlu0 %4799
        %4801 = vrot.lane.b32.xlu0 %v4721, 16
        %v4802 = vpop.permute.xlu0 %4801
        %4803 = vrot.lane.b32.xlu0 %v4722, 16
        %v4804 = vpop.permute.xlu0 %4803
        %4805 = vrot.lane.b32.xlu0 %v4723, 16
        %v4806 = vpop.permute.xlu0 %4805
        %4807 = vrot.lane.b32.xlu0 %v4724, 16
        %v4808 = vpop.permute.xlu0 %4807
        %4809 = vrot.lane.b32.xlu0 %v4725, 16
        %v4810 = vpop.permute.xlu0 %4809
        %4811 = vrot.lane.b32.xlu0 %v4726, 16
        %v4812 = vpop.permute.xlu0 %4811
        %4813 = vrot.lane.b32.xlu0 %v4727, 16
        %v4814 = vpop.permute.xlu0 %4813
        %4815 = vrot.lane.b32.xlu0 %v4728, 16
        %v4816 = vpop.permute.xlu0 %4815
        %4817 = vrot.lane.b32.xlu0 %v4729, 16
        %v4818 = vpop.permute.xlu0 %4817
        %4819 = vrot.lane.b32.xlu0 %v4730, 16
        %v4820 = vpop.permute.xlu0 %4819
        %4821 = vrot.lane.b32.xlu0 %v4731, 16
        %v4822 = vpop.permute.xlu0 %4821
        %4823 = vrot.lane.b32.xlu0 %v4732, 16
        %v4824 = vpop.permute.xlu0 %4823
        %4825 = vrot.lane.b32.xlu0 %v4733, 16
        %v4826 = vpop.permute.xlu0 %4825
        %4827 = vrot.lane.b32.xlu0 %v4734, 16
        %v4828 = vpop.permute.xlu0 %4827
        %4829 = vrot.lane.b32.xlu0 %v4735, 16
        %v4830 = vpop.permute.xlu0 %4829
        %4831 = vrot.lane.b32.xlu0 %v4736, 16
        %v4832 = vpop.permute.xlu0 %4831
        %vm4865 = vcmask 158848
        %4866 = vst.msk [vmem:[#allocation4] sm:$0xf] %vm4865, %v4770
        %4867 = vst.msk [vmem:[#allocation4 + $0x4] sm:$0xf] %vm4865, %v4772
        %4868 = vst.msk [vmem:[#allocation4 + $0x8] sm:$0xf] %vm4865, %v4774
        %4869 = vst.msk [vmem:[#allocation4 + $0xc] sm:$0xf] %vm4865, %v4776
        %4870 = vst.msk [vmem:[#allocation4 + $0x10] sm:$0xf] %vm4865, %v4778
        %4871 = vst.msk [vmem:[#allocation4 + $0x14] sm:$0xf] %vm4865, %v4780
        %4872 = vst.msk [vmem:[#allocation4 + $0x18] sm:$0xf] %vm4865, %v4782
        %4873 = vst.msk [vmem:[#allocation4 + $0x1c] sm:$0xf] %vm4865, %v4784
        %4874 = vst.msk [vmem:[#allocation4 + $0x20] sm:$0xf] %vm4865, %v4786
        %4875 = vst.msk [vmem:[#allocation4 + $0x24] sm:$0xf] %vm4865, %v4788
        %4876 = vst.msk [vmem:[#allocation4 + $0x28] sm:$0xf] %vm4865, %v4790
        %4877 = vst.msk [vmem:[#allocation4 + $0x2c] sm:$0xf] %vm4865, %v4792
        %4878 = vst.msk [vmem:[#allocation4 + $0x30] sm:$0xf] %vm4865, %v4794
        %4879 = vst.msk [vmem:[#allocation4 + $0x34] sm:$0xf] %vm4865, %v4796
        %4880 = vst.msk [vmem:[#allocation4 + $0x38] sm:$0xf] %vm4865, %v4798
        %4881 = vst.msk [vmem:[#allocation4 + $0x3c] sm:$0xf] %vm4865, %v4800
        %4882 = vst.msk [vmem:[#allocation4 + $0x40] sm:$0xf] %vm4865, %v4802
        %4883 = vst.msk [vmem:[#allocation4 + $0x44] sm:$0xf] %vm4865, %v4804
        %4884 = vst.msk [vmem:[#allocation4 + $0x48] sm:$0xf] %vm4865, %v4806
        %4885 = vst.msk [vmem:[#allocation4 + $0x4c] sm:$0xf] %vm4865, %v4808
        %4886 = vst.msk [vmem:[#allocation4 + $0x50] sm:$0xf] %vm4865, %v4810
        %4887 = vst.msk [vmem:[#allocation4 + $0x54] sm:$0xf] %vm4865, %v4812
        %4888 = vst.msk [vmem:[#allocation4 + $0x58] sm:$0xf] %vm4865, %v4814
        %4889 = vst.msk [vmem:[#allocation4 + $0x5c] sm:$0xf] %vm4865, %v4816
        %4890 = vst.msk [vmem:[#allocation4 + $0x60] sm:$0xf] %vm4865, %v4818
        %4891 = vst.msk [vmem:[#allocation4 + $0x64] sm:$0xf] %vm4865, %v4820
        %4892 = vst.msk [vmem:[#allocation4 + $0x68] sm:$0xf] %vm4865, %v4822
        %4893 = vst.msk [vmem:[#allocation4 + $0x6c] sm:$0xf] %vm4865, %v4824
        %4894 = vst.msk [vmem:[#allocation4 + $0x70] sm:$0xf] %vm4865, %v4826
        %4895 = vst.msk [vmem:[#allocation4 + $0x74] sm:$0xf] %vm4865, %v4828
        %4896 = vst.msk [vmem:[#allocation4 + $0x78] sm:$0xf] %vm4865, %v4830
        %4897 = vst.msk [vmem:[#allocation4 + $0x7c] sm:$0xf] %vm4865, %v4832
        %v4898 = vld [vmem:[%s3836 + $0x9] sm:$0xff]
        %v4899 = vld [vmem:[%s3836 + $0x11] sm:$0xff]
        %v4900 = vld [vmem:[%s3836 + $0x29] sm:$0xff]
        %v4901 = vld [vmem:[%s3836 + $0x31] sm:$0xff]
        %v4902 = vld [vmem:[%s3836 + $0x49] sm:$0xff]
        %v4903 = vld [vmem:[%s3836 + $0x51] sm:$0xff]
        %v4904 = vld [vmem:[%s3836 + $0x69] sm:$0xff]
        %v4905 = vld [vmem:[%s3836 + $0x71] sm:$0xff]
        %v4906 = vld [vmem:[%s3836 + $0x89] sm:$0xff]
        %v4907 = vld [vmem:[%s3836 + $0x91] sm:$0xff]
        %v4908 = vld [vmem:[%s3836 + $0xa9] sm:$0xff]
        %v4909 = vld [vmem:[%s3836 + $0xb1] sm:$0xff]
        %v4910 = vld [vmem:[%s3836 + $0xc9] sm:$0xff]
        %v4911 = vld [vmem:[%s3836 + $0xd1] sm:$0xff]
        %v4912 = vld [vmem:[%s3836 + $0xe9] sm:$0xff]
        %v4913 = vld [vmem:[%s3836 + $0xf1] sm:$0xff]
        %v4914 = vld [vmem:[%s3836 + $0x109] sm:$0xff]
        %v4915 = vld [vmem:[%s3836 + $0x111] sm:$0xff]
        %v4916 = vld [vmem:[%s3836 + $0x129] sm:$0xff]
        %v4917 = vld [vmem:[%s3836 + $0x131] sm:$0xff]
        %v4918 = vld [vmem:[%s3836 + $0x149] sm:$0xff]
        %v4919 = vld [vmem:[%s3836 + $0x151] sm:$0xff]
        %v4920 = vld [vmem:[%s3836 + $0x169] sm:$0xff]
        %v4921 = vld [vmem:[%s3836 + $0x171] sm:$0xff]
        %v4922 = vld [vmem:[%s3836 + $0x189] sm:$0xff]
        %v4923 = vld [vmem:[%s3836 + $0x191] sm:$0xff]
        %v4924 = vld [vmem:[%s3836 + $0x1a9] sm:$0xff]
        %v4925 = vld [vmem:[%s3836 + $0x1b1] sm:$0xff]
        %v4926 = vld [vmem:[%s3836 + $0x1c9] sm:$0xff]
        %v4927 = vld [vmem:[%s3836 + $0x1d1] sm:$0xff]
        %v4928 = vld [vmem:[%s3836 + $0x1e9] sm:$0xff]
        %v4929 = vld [vmem:[%s3836 + $0x1f1] sm:$0xff]
        %v4930 = vpack.c.bf16 %v4898, %v4898
        %v4931 = vpack.c.bf16 %v4899, %v4899
        %v4932 = vpack.c.bf16 %v4900, %v4900
        %v4933 = vpack.c.bf16 %v4901, %v4901
        %v4934 = vpack.c.bf16 %v4902, %v4902
        %v4935 = vpack.c.bf16 %v4903, %v4903
        %v4936 = vpack.c.bf16 %v4904, %v4904
        %v4937 = vpack.c.bf16 %v4905, %v4905
        %v4938 = vpack.c.bf16 %v4906, %v4906
        %v4939 = vpack.c.bf16 %v4907, %v4907
        %v4940 = vpack.c.bf16 %v4908, %v4908
        %v4941 = vpack.c.bf16 %v4909, %v4909
        %v4942 = vpack.c.bf16 %v4910, %v4910
        %v4943 = vpack.c.bf16 %v4911, %v4911
        %v4944 = vpack.c.bf16 %v4912, %v4912
        %v4945 = vpack.c.bf16 %v4913, %v4913
        %v4946 = vpack.c.bf16 %v4914, %v4914
        %v4947 = vpack.c.bf16 %v4915, %v4915
        %v4948 = vpack.c.bf16 %v4916, %v4916
        %v4949 = vpack.c.bf16 %v4917, %v4917
        %v4950 = vpack.c.bf16 %v4918, %v4918
        %v4951 = vpack.c.bf16 %v4919, %v4919
        %v4952 = vpack.c.bf16 %v4920, %v4920
        %v4953 = vpack.c.bf16 %v4921, %v4921
        %v4954 = vpack.c.bf16 %v4922, %v4922
        %v4955 = vpack.c.bf16 %v4923, %v4923
        %v4956 = vpack.c.bf16 %v4924, %v4924
        %v4957 = vpack.c.bf16 %v4925, %v4925
        %v4958 = vpack.c.bf16 %v4926, %v4926
        %v4959 = vpack.c.bf16 %v4927, %v4927
        %v4960 = vpack.c.bf16 %v4928, %v4928
        %v4961 = vpack.c.bf16 %v4929, %v4929
        %4994 = vrot.lane.b32.xlu0 %v4930, 20
        %v4995 = vpop.permute.xlu0 %4994
        %4996 = vrot.lane.b32.xlu0 %v4931, 20
        %v4997 = vpop.permute.xlu0 %4996
        %4998 = vrot.lane.b32.xlu0 %v4932, 20
        %v4999 = vpop.permute.xlu0 %4998
        %5000 = vrot.lane.b32.xlu0 %v4933, 20
        %v5001 = vpop.permute.xlu0 %5000
        %5002 = vrot.lane.b32.xlu0 %v4934, 20
        %v5003 = vpop.permute.xlu0 %5002
        %5004 = vrot.lane.b32.xlu0 %v4935, 20
        %v5005 = vpop.permute.xlu0 %5004
        %5006 = vrot.lane.b32.xlu0 %v4936, 20
        %v5007 = vpop.permute.xlu0 %5006
        %5008 = vrot.lane.b32.xlu0 %v4937, 20
        %v5009 = vpop.permute.xlu0 %5008
        %5010 = vrot.lane.b32.xlu0 %v4938, 20
        %v5011 = vpop.permute.xlu0 %5010
        %5012 = vrot.lane.b32.xlu0 %v4939, 20
        %v5013 = vpop.permute.xlu0 %5012
        %5014 = vrot.lane.b32.xlu0 %v4940, 20
        %v5015 = vpop.permute.xlu0 %5014
        %5016 = vrot.lane.b32.xlu0 %v4941, 20
        %v5017 = vpop.permute.xlu0 %5016
        %5018 = vrot.lane.b32.xlu0 %v4942, 20
        %v5019 = vpop.permute.xlu0 %5018
        %5020 = vrot.lane.b32.xlu0 %v4943, 20
        %v5021 = vpop.permute.xlu0 %5020
        %5022 = vrot.lane.b32.xlu0 %v4944, 20
        %v5023 = vpop.permute.xlu0 %5022
        %5024 = vrot.lane.b32.xlu0 %v4945, 20
        %v5025 = vpop.permute.xlu0 %5024
        %5026 = vrot.lane.b32.xlu0 %v4946, 20
        %v5027 = vpop.permute.xlu0 %5026
        %5028 = vrot.lane.b32.xlu0 %v4947, 20
        %v5029 = vpop.permute.xlu0 %5028
        %5030 = vrot.lane.b32.xlu0 %v4948, 20
        %v5031 = vpop.permute.xlu0 %5030
        %5032 = vrot.lane.b32.xlu0 %v4949, 20
        %v5033 = vpop.permute.xlu0 %5032
        %5034 = vrot.lane.b32.xlu0 %v4950, 20
        %v5035 = vpop.permute.xlu0 %5034
        %5036 = vrot.lane.b32.xlu0 %v4951, 20
        %v5037 = vpop.permute.xlu0 %5036
        %5038 = vrot.lane.b32.xlu0 %v4952, 20
        %v5039 = vpop.permute.xlu0 %5038
        %5040 = vrot.lane.b32.xlu0 %v4953, 20
        %v5041 = vpop.permute.xlu0 %5040
        %5042 = vrot.lane.b32.xlu0 %v4954, 20
        %v5043 = vpop.permute.xlu0 %5042
        %5044 = vrot.lane.b32.xlu0 %v4955, 20
        %v5045 = vpop.permute.xlu0 %5044
        %5046 = vrot.lane.b32.xlu0 %v4956, 20
        %v5047 = vpop.permute.xlu0 %5046
        %5048 = vrot.lane.b32.xlu0 %v4957, 20
        %v5049 = vpop.permute.xlu0 %5048
        %5050 = vrot.lane.b32.xlu0 %v4958, 20
        %v5051 = vpop.permute.xlu0 %5050
        %5052 = vrot.lane.b32.xlu0 %v4959, 20
        %v5053 = vpop.permute.xlu0 %5052
        %5054 = vrot.lane.b32.xlu0 %v4960, 20
        %v5055 = vpop.permute.xlu0 %5054
        %5056 = vrot.lane.b32.xlu0 %v4961, 20
        %v5057 = vpop.permute.xlu0 %5056
        %vm5090 = vcmask 191648
        %5091 = vst.msk [vmem:[#allocation4] sm:$0xf] %vm5090, %v4995
        %5092 = vst.msk [vmem:[#allocation4 + $0x4] sm:$0xf] %vm5090, %v4997
        %5093 = vst.msk [vmem:[#allocation4 + $0x8] sm:$0xf] %vm5090, %v4999
        %5094 = vst.msk [vmem:[#allocation4 + $0xc] sm:$0xf] %vm5090, %v5001
        %5095 = vst.msk [vmem:[#allocation4 + $0x10] sm:$0xf] %vm5090, %v5003
        %5096 = vst.msk [vmem:[#allocation4 + $0x14] sm:$0xf] %vm5090, %v5005
        %5097 = vst.msk [vmem:[#allocation4 + $0x18] sm:$0xf] %vm5090, %v5007
        %5098 = vst.msk [vmem:[#allocation4 + $0x1c] sm:$0xf] %vm5090, %v5009
        %5099 = vst.msk [vmem:[#allocation4 + $0x20] sm:$0xf] %vm5090, %v5011
        %5100 = vst.msk [vmem:[#allocation4 + $0x24] sm:$0xf] %vm5090, %v5013
        %5101 = vst.msk [vmem:[#allocation4 + $0x28] sm:$0xf] %vm5090, %v5015
        %5102 = vst.msk [vmem:[#allocation4 + $0x2c] sm:$0xf] %vm5090, %v5017
        %5103 = vst.msk [vmem:[#allocation4 + $0x30] sm:$0xf] %vm5090, %v5019
        %5104 = vst.msk [vmem:[#allocation4 + $0x34] sm:$0xf] %vm5090, %v5021
        %5105 = vst.msk [vmem:[#allocation4 + $0x38] sm:$0xf] %vm5090, %v5023
        %5106 = vst.msk [vmem:[#allocation4 + $0x3c] sm:$0xf] %vm5090, %v5025
        %5107 = vst.msk [vmem:[#allocation4 + $0x40] sm:$0xf] %vm5090, %v5027
        %5108 = vst.msk [vmem:[#allocation4 + $0x44] sm:$0xf] %vm5090, %v5029
        %5109 = vst.msk [vmem:[#allocation4 + $0x48] sm:$0xf] %vm5090, %v5031
        %5110 = vst.msk [vmem:[#allocation4 + $0x4c] sm:$0xf] %vm5090, %v5033
        %5111 = vst.msk [vmem:[#allocation4 + $0x50] sm:$0xf] %vm5090, %v5035
        %5112 = vst.msk [vmem:[#allocation4 + $0x54] sm:$0xf] %vm5090, %v5037
        %5113 = vst.msk [vmem:[#allocation4 + $0x58] sm:$0xf] %vm5090, %v5039
        %5114 = vst.msk [vmem:[#allocation4 + $0x5c] sm:$0xf] %vm5090, %v5041
        %5115 = vst.msk [vmem:[#allocation4 + $0x60] sm:$0xf] %vm5090, %v5043
        %5116 = vst.msk [vmem:[#allocation4 + $0x64] sm:$0xf] %vm5090, %v5045
        %5117 = vst.msk [vmem:[#allocation4 + $0x68] sm:$0xf] %vm5090, %v5047
        %5118 = vst.msk [vmem:[#allocation4 + $0x6c] sm:$0xf] %vm5090, %v5049
        %5119 = vst.msk [vmem:[#allocation4 + $0x70] sm:$0xf] %vm5090, %v5051
        %5120 = vst.msk [vmem:[#allocation4 + $0x74] sm:$0xf] %vm5090, %v5053
        %5121 = vst.msk [vmem:[#allocation4 + $0x78] sm:$0xf] %vm5090, %v5055
        %5122 = vst.msk [vmem:[#allocation4 + $0x7c] sm:$0xf] %vm5090, %v5057
        %s5123 = scalar_lea.vmem [#allocation2], 64
        %v5124 = vld [vmem:[%s5123 + $0x7] sm:$0xff]
        %v5125 = vld [vmem:[%s5123 + $0xf] sm:$0xff]
        %v5126 = vld [vmem:[%s5123 + $0x27] sm:$0xff]
        %v5127 = vld [vmem:[%s5123 + $0x2f] sm:$0xff]
        %v5128 = vld [vmem:[%s5123 + $0x47] sm:$0xff]
        %v5129 = vld [vmem:[%s5123 + $0x4f] sm:$0xff]
        %v5130 = vld [vmem:[%s5123 + $0x67] sm:$0xff]
        %v5131 = vld [vmem:[%s5123 + $0x6f] sm:$0xff]
        %v5132 = vld [vmem:[%s5123 + $0x87] sm:$0xff]
        %v5133 = vld [vmem:[%s5123 + $0x8f] sm:$0xff]
        %v5134 = vld [vmem:[%s5123 + $0xa7] sm:$0xff]
        %v5135 = vld [vmem:[%s5123 + $0xaf] sm:$0xff]
        %v5136 = vld [vmem:[%s5123 + $0xc7] sm:$0xff]
        %v5137 = vld [vmem:[%s5123 + $0xcf] sm:$0xff]
        %v5138 = vld [vmem:[%s5123 + $0xe7] sm:$0xff]
        %v5139 = vld [vmem:[%s5123 + $0xef] sm:$0xff]
        %v5140 = vld [vmem:[%s5123 + $0x107] sm:$0xff]
        %v5141 = vld [vmem:[%s5123 + $0x10f] sm:$0xff]
        %v5142 = vld [vmem:[%s5123 + $0x127] sm:$0xff]
        %v5143 = vld [vmem:[%s5123 + $0x12f] sm:$0xff]
        %v5144 = vld [vmem:[%s5123 + $0x147] sm:$0xff]
        %v5145 = vld [vmem:[%s5123 + $0x14f] sm:$0xff]
        %v5146 = vld [vmem:[%s5123 + $0x167] sm:$0xff]
        %v5147 = vld [vmem:[%s5123 + $0x16f] sm:$0xff]
        %v5148 = vld [vmem:[%s5123 + $0x187] sm:$0xff]
        %v5149 = vld [vmem:[%s5123 + $0x18f] sm:$0xff]
        %v5150 = vld [vmem:[%s5123 + $0x1a7] sm:$0xff]
        %v5151 = vld [vmem:[%s5123 + $0x1af] sm:$0xff]
        %v5152 = vld [vmem:[%s5123 + $0x1c7] sm:$0xff]
        %v5153 = vld [vmem:[%s5123 + $0x1cf] sm:$0xff]
        %v5154 = vld [vmem:[%s5123 + $0x1e7] sm:$0xff]
        %v5155 = vld [vmem:[%s5123 + $0x1ef] sm:$0xff]
        %v5156 = vpack.c.bf16 %v5124, %v5124
        %v5157 = vpack.c.bf16 %v5125, %v5125
        %v5158 = vpack.c.bf16 %v5126, %v5126
        %v5159 = vpack.c.bf16 %v5127, %v5127
        %v5160 = vpack.c.bf16 %v5128, %v5128
        %v5161 = vpack.c.bf16 %v5129, %v5129
        %v5162 = vpack.c.bf16 %v5130, %v5130
        %v5163 = vpack.c.bf16 %v5131, %v5131
        %v5164 = vpack.c.bf16 %v5132, %v5132
        %v5165 = vpack.c.bf16 %v5133, %v5133
        %v5166 = vpack.c.bf16 %v5134, %v5134
        %v5167 = vpack.c.bf16 %v5135, %v5135
        %v5168 = vpack.c.bf16 %v5136, %v5136
        %v5169 = vpack.c.bf16 %v5137, %v5137
        %v5170 = vpack.c.bf16 %v5138, %v5138
        %v5171 = vpack.c.bf16 %v5139, %v5139
        %v5172 = vpack.c.bf16 %v5140, %v5140
        %v5173 = vpack.c.bf16 %v5141, %v5141
        %v5174 = vpack.c.bf16 %v5142, %v5142
        %v5175 = vpack.c.bf16 %v5143, %v5143
        %v5176 = vpack.c.bf16 %v5144, %v5144
        %v5177 = vpack.c.bf16 %v5145, %v5145
        %v5178 = vpack.c.bf16 %v5146, %v5146
        %v5179 = vpack.c.bf16 %v5147, %v5147
        %v5180 = vpack.c.bf16 %v5148, %v5148
        %v5181 = vpack.c.bf16 %v5149, %v5149
        %v5182 = vpack.c.bf16 %v5150, %v5150
        %v5183 = vpack.c.bf16 %v5151, %v5151
        %v5184 = vpack.c.bf16 %v5152, %v5152
        %v5185 = vpack.c.bf16 %v5153, %v5153
        %v5186 = vpack.c.bf16 %v5154, %v5154
        %v5187 = vpack.c.bf16 %v5155, %v5155
        %5220 = vrot.lane.b32.xlu0 %v5156, 24
        %v5221 = vpop.permute.xlu0 %5220
        %5222 = vrot.lane.b32.xlu0 %v5157, 24
        %v5223 = vpop.permute.xlu0 %5222
        %5224 = vrot.lane.b32.xlu0 %v5158, 24
        %v5225 = vpop.permute.xlu0 %5224
        %5226 = vrot.lane.b32.xlu0 %v5159, 24
        %v5227 = vpop.permute.xlu0 %5226
        %5228 = vrot.lane.b32.xlu0 %v5160, 24
        %v5229 = vpop.permute.xlu0 %5228
        %5230 = vrot.lane.b32.xlu0 %v5161, 24
        %v5231 = vpop.permute.xlu0 %5230
        %5232 = vrot.lane.b32.xlu0 %v5162, 24
        %v5233 = vpop.permute.xlu0 %5232
        %5234 = vrot.lane.b32.xlu0 %v5163, 24
        %v5235 = vpop.permute.xlu0 %5234
        %5236 = vrot.lane.b32.xlu0 %v5164, 24
        %v5237 = vpop.permute.xlu0 %5236
        %5238 = vrot.lane.b32.xlu0 %v5165, 24
        %v5239 = vpop.permute.xlu0 %5238
        %5240 = vrot.lane.b32.xlu0 %v5166, 24
        %v5241 = vpop.permute.xlu0 %5240
        %5242 = vrot.lane.b32.xlu0 %v5167, 24
        %v5243 = vpop.permute.xlu0 %5242
        %5244 = vrot.lane.b32.xlu0 %v5168, 24
        %v5245 = vpop.permute.xlu0 %5244
        %5246 = vrot.lane.b32.xlu0 %v5169, 24
        %v5247 = vpop.permute.xlu0 %5246
        %5248 = vrot.lane.b32.xlu0 %v5170, 24
        %v5249 = vpop.permute.xlu0 %5248
        %5250 = vrot.lane.b32.xlu0 %v5171, 24
        %v5251 = vpop.permute.xlu0 %5250
        %5252 = vrot.lane.b32.xlu0 %v5172, 24
        %v5253 = vpop.permute.xlu0 %5252
        %5254 = vrot.lane.b32.xlu0 %v5173, 24
        %v5255 = vpop.permute.xlu0 %5254
        %5256 = vrot.lane.b32.xlu0 %v5174, 24
        %v5257 = vpop.permute.xlu0 %5256
        %5258 = vrot.lane.b32.xlu0 %v5175, 24
        %v5259 = vpop.permute.xlu0 %5258
        %5260 = vrot.lane.b32.xlu0 %v5176, 24
        %v5261 = vpop.permute.xlu0 %5260
        %5262 = vrot.lane.b32.xlu0 %v5177, 24
        %v5263 = vpop.permute.xlu0 %5262
        %5264 = vrot.lane.b32.xlu0 %v5178, 24
        %v5265 = vpop.permute.xlu0 %5264
        %5266 = vrot.lane.b32.xlu0 %v5179, 24
        %v5267 = vpop.permute.xlu0 %5266
        %5268 = vrot.lane.b32.xlu0 %v5180, 24
        %v5269 = vpop.permute.xlu0 %5268
        %5270 = vrot.lane.b32.xlu0 %v5181, 24
        %v5271 = vpop.permute.xlu0 %5270
        %5272 = vrot.lane.b32.xlu0 %v5182, 24
        %v5273 = vpop.permute.xlu0 %5272
        %5274 = vrot.lane.b32.xlu0 %v5183, 24
        %v5275 = vpop.permute.xlu0 %5274
        %5276 = vrot.lane.b32.xlu0 %v5184, 24
        %v5277 = vpop.permute.xlu0 %5276
        %5278 = vrot.lane.b32.xlu0 %v5185, 24
        %v5279 = vpop.permute.xlu0 %5278
        %5280 = vrot.lane.b32.xlu0 %v5186, 24
        %v5281 = vpop.permute.xlu0 %5280
        %5282 = vrot.lane.b32.xlu0 %v5187, 24
        %v5283 = vpop.permute.xlu0 %5282
        %vm5316 = vcmask 224448
        %5317 = vst.msk [vmem:[#allocation4] sm:$0xf] %vm5316, %v5221
        %5318 = vst.msk [vmem:[#allocation4 + $0x4] sm:$0xf] %vm5316, %v5223
        %5319 = vst.msk [vmem:[#allocation4 + $0x8] sm:$0xf] %vm5316, %v5225
        %5320 = vst.msk [vmem:[#allocation4 + $0xc] sm:$0xf] %vm5316, %v5227
        %5321 = vst.msk [vmem:[#allocation4 + $0x10] sm:$0xf] %vm5316, %v5229
        %5322 = vst.msk [vmem:[#allocation4 + $0x14] sm:$0xf] %vm5316, %v5231
        %5323 = vst.msk [vmem:[#allocation4 + $0x18] sm:$0xf] %vm5316, %v5233
        %5324 = vst.msk [vmem:[#allocation4 + $0x1c] sm:$0xf] %vm5316, %v5235
        %5325 = vst.msk [vmem:[#allocation4 + $0x20] sm:$0xf] %vm5316, %v5237
        %5326 = vst.msk [vmem:[#allocation4 + $0x24] sm:$0xf] %vm5316, %v5239
        %5327 = vst.msk [vmem:[#allocation4 + $0x28] sm:$0xf] %vm5316, %v5241
        %5328 = vst.msk [vmem:[#allocation4 + $0x2c] sm:$0xf] %vm5316, %v5243
        %5329 = vst.msk [vmem:[#allocation4 + $0x30] sm:$0xf] %vm5316, %v5245
        %5330 = vst.msk [vmem:[#allocation4 + $0x34] sm:$0xf] %vm5316, %v5247
        %5331 = vst.msk [vmem:[#allocation4 + $0x38] sm:$0xf] %vm5316, %v5249
        %5332 = vst.msk [vmem:[#allocation4 + $0x3c] sm:$0xf] %vm5316, %v5251
        %5333 = vst.msk [vmem:[#allocation4 + $0x40] sm:$0xf] %vm5316, %v5253
        %5334 = vst.msk [vmem:[#allocation4 + $0x44] sm:$0xf] %vm5316, %v5255
        %5335 = vst.msk [vmem:[#allocation4 + $0x48] sm:$0xf] %vm5316, %v5257
        %5336 = vst.msk [vmem:[#allocation4 + $0x4c] sm:$0xf] %vm5316, %v5259
        %5337 = vst.msk [vmem:[#allocation4 + $0x50] sm:$0xf] %vm5316, %v5261
        %5338 = vst.msk [vmem:[#allocation4 + $0x54] sm:$0xf] %vm5316, %v5263
        %5339 = vst.msk [vmem:[#allocation4 + $0x58] sm:$0xf] %vm5316, %v5265
        %5340 = vst.msk [vmem:[#allocation4 + $0x5c] sm:$0xf] %vm5316, %v5267
        %5341 = vst.msk [vmem:[#allocation4 + $0x60] sm:$0xf] %vm5316, %v5269
        %5342 = vst.msk [vmem:[#allocation4 + $0x64] sm:$0xf] %vm5316, %v5271
        %5343 = vst.msk [vmem:[#allocation4 + $0x68] sm:$0xf] %vm5316, %v5273
        %5344 = vst.msk [vmem:[#allocation4 + $0x6c] sm:$0xf] %vm5316, %v5275
        %5345 = vst.msk [vmem:[#allocation4 + $0x70] sm:$0xf] %vm5316, %v5277
        %5346 = vst.msk [vmem:[#allocation4 + $0x74] sm:$0xf] %vm5316, %v5279
        %5347 = vst.msk [vmem:[#allocation4 + $0x78] sm:$0xf] %vm5316, %v5281
        %5348 = vst.msk [vmem:[#allocation4 + $0x7c] sm:$0xf] %vm5316, %v5283
        %v5349 = vld [vmem:[%s5123 + $0x8] sm:$0xff]
        %v5350 = vld [vmem:[%s5123 + $0x10] sm:$0xff]
        %v5351 = vld [vmem:[%s5123 + $0x28] sm:$0xff]
        %v5352 = vld [vmem:[%s5123 + $0x30] sm:$0xff]
        %v5353 = vld [vmem:[%s5123 + $0x48] sm:$0xff]
        %v5354 = vld [vmem:[%s5123 + $0x50] sm:$0xff]
        %v5355 = vld [vmem:[%s5123 + $0x68] sm:$0xff]
        %v5356 = vld [vmem:[%s5123 + $0x70] sm:$0xff]
        %v5357 = vld [vmem:[%s5123 + $0x88] sm:$0xff]
        %v5358 = vld [vmem:[%s5123 + $0x90] sm:$0xff]
        %v5359 = vld [vmem:[%s5123 + $0xa8] sm:$0xff]
        %v5360 = vld [vmem:[%s5123 + $0xb0] sm:$0xff]
        %v5361 = vld [vmem:[%s5123 + $0xc8] sm:$0xff]
        %v5362 = vld [vmem:[%s5123 + $0xd0] sm:$0xff]
        %v5363 = vld [vmem:[%s5123 + $0xe8] sm:$0xff]
        %v5364 = vld [vmem:[%s5123 + $0xf0] sm:$0xff]
        %v5365 = vld [vmem:[%s5123 + $0x108] sm:$0xff]
        %v5366 = vld [vmem:[%s5123 + $0x110] sm:$0xff]
        %v5367 = vld [vmem:[%s5123 + $0x128] sm:$0xff]
        %v5368 = vld [vmem:[%s5123 + $0x130] sm:$0xff]
        %v5369 = vld [vmem:[%s5123 + $0x148] sm:$0xff]
        %v5370 = vld [vmem:[%s5123 + $0x150] sm:$0xff]
        %v5371 = vld [vmem:[%s5123 + $0x168] sm:$0xff]
        %v5372 = vld [vmem:[%s5123 + $0x170] sm:$0xff]
        %v5373 = vld [vmem:[%s5123 + $0x188] sm:$0xff]
        %v5374 = vld [vmem:[%s5123 + $0x190] sm:$0xff]
        %v5375 = vld [vmem:[%s5123 + $0x1a8] sm:$0xff]
        %v5376 = vld [vmem:[%s5123 + $0x1b0] sm:$0xff]
        %v5377 = vld [vmem:[%s5123 + $0x1c8] sm:$0xff]
        %v5378 = vld [vmem:[%s5123 + $0x1d0] sm:$0xff]
        %v5379 = vld [vmem:[%s5123 + $0x1e8] sm:$0xff]
        %v5380 = vld [vmem:[%s5123 + $0x1f0] sm:$0xff]
        %v5381 = vpack.c.bf16 %v5349, %v5349
        %v5382 = vpack.c.bf16 %v5350, %v5350
        %v5383 = vpack.c.bf16 %v5351, %v5351
        %v5384 = vpack.c.bf16 %v5352, %v5352
        %v5385 = vpack.c.bf16 %v5353, %v5353
        %v5386 = vpack.c.bf16 %v5354, %v5354
        %v5387 = vpack.c.bf16 %v5355, %v5355
        %v5388 = vpack.c.bf16 %v5356, %v5356
        %v5389 = vpack.c.bf16 %v5357, %v5357
        %v5390 = vpack.c.bf16 %v5358, %v5358
        %v5391 = vpack.c.bf16 %v5359, %v5359
        %v5392 = vpack.c.bf16 %v5360, %v5360
        %v5393 = vpack.c.bf16 %v5361, %v5361
        %v5394 = vpack.c.bf16 %v5362, %v5362
        %v5395 = vpack.c.bf16 %v5363, %v5363
        %v5396 = vpack.c.bf16 %v5364, %v5364
        %v5397 = vpack.c.bf16 %v5365, %v5365
        %v5398 = vpack.c.bf16 %v5366, %v5366
        %v5399 = vpack.c.bf16 %v5367, %v5367
        %v5400 = vpack.c.bf16 %v5368, %v5368
        %v5401 = vpack.c.bf16 %v5369, %v5369
        %v5402 = vpack.c.bf16 %v5370, %v5370
        %v5403 = vpack.c.bf16 %v5371, %v5371
        %v5404 = vpack.c.bf16 %v5372, %v5372
        %v5405 = vpack.c.bf16 %v5373, %v5373
        %v5406 = vpack.c.bf16 %v5374, %v5374
        %v5407 = vpack.c.bf16 %v5375, %v5375
        %v5408 = vpack.c.bf16 %v5376, %v5376
        %v5409 = vpack.c.bf16 %v5377, %v5377
        %v5410 = vpack.c.bf16 %v5378, %v5378
        %v5411 = vpack.c.bf16 %v5379, %v5379
        %v5412 = vpack.c.bf16 %v5380, %v5380
        %5445 = vrot.lane.b32.xlu0 %v5381, 28
        %v5446 = vpop.permute.xlu0 %5445
        %5447 = vrot.lane.b32.xlu0 %v5382, 28
        %v5448 = vpop.permute.xlu0 %5447
        %5449 = vrot.lane.b32.xlu0 %v5383, 28
        %v5450 = vpop.permute.xlu0 %5449
        %5451 = vrot.lane.b32.xlu0 %v5384, 28
        %v5452 = vpop.permute.xlu0 %5451
        %5453 = vrot.lane.b32.xlu0 %v5385, 28
        %v5454 = vpop.permute.xlu0 %5453
        %5455 = vrot.lane.b32.xlu0 %v5386, 28
        %v5456 = vpop.permute.xlu0 %5455
        %5457 = vrot.lane.b32.xlu0 %v5387, 28
        %v5458 = vpop.permute.xlu0 %5457
        %5459 = vrot.lane.b32.xlu0 %v5388, 28
        %v5460 = vpop.permute.xlu0 %5459
        %5461 = vrot.lane.b32.xlu0 %v5389, 28
        %v5462 = vpop.permute.xlu0 %5461
        %5463 = vrot.lane.b32.xlu0 %v5390, 28
        %v5464 = vpop.permute.xlu0 %5463
        %5465 = vrot.lane.b32.xlu0 %v5391, 28
        %v5466 = vpop.permute.xlu0 %5465
        %5467 = vrot.lane.b32.xlu0 %v5392, 28
        %v5468 = vpop.permute.xlu0 %5467
        %5469 = vrot.lane.b32.xlu0 %v5393, 28
        %v5470 = vpop.permute.xlu0 %5469
        %5471 = vrot.lane.b32.xlu0 %v5394, 28
        %v5472 = vpop.permute.xlu0 %5471
        %5473 = vrot.lane.b32.xlu0 %v5395, 28
        %v5474 = vpop.permute.xlu0 %5473
        %5475 = vrot.lane.b32.xlu0 %v5396, 28
        %v5476 = vpop.permute.xlu0 %5475
        %5477 = vrot.lane.b32.xlu0 %v5397, 28
        %v5478 = vpop.permute.xlu0 %5477
        %5479 = vrot.lane.b32.xlu0 %v5398, 28
        %v5480 = vpop.permute.xlu0 %5479
        %5481 = vrot.lane.b32.xlu0 %v5399, 28
        %v5482 = vpop.permute.xlu0 %5481
        %5483 = vrot.lane.b32.xlu0 %v5400, 28
        %v5484 = vpop.permute.xlu0 %5483
        %5485 = vrot.lane.b32.xlu0 %v5401, 28
        %v5486 = vpop.permute.xlu0 %5485
        %5487 = vrot.lane.b32.xlu0 %v5402, 28
        %v5488 = vpop.permute.xlu0 %5487
        %5489 = vrot.lane.b32.xlu0 %v5403, 28
        %v5490 = vpop.permute.xlu0 %5489
        %5491 = vrot.lane.b32.xlu0 %v5404, 28
        %v5492 = vpop.permute.xlu0 %5491
        %5493 = vrot.lane.b32.xlu0 %v5405, 28
        %v5494 = vpop.permute.xlu0 %5493
        %5495 = vrot.lane.b32.xlu0 %v5406, 28
        %v5496 = vpop.permute.xlu0 %5495
        %5497 = vrot.lane.b32.xlu0 %v5407, 28
        %v5498 = vpop.permute.xlu0 %5497
        %5499 = vrot.lane.b32.xlu0 %v5408, 28
        %v5500 = vpop.permute.xlu0 %5499
        %5501 = vrot.lane.b32.xlu0 %v5409, 28
        %v5502 = vpop.permute.xlu0 %5501
        %5503 = vrot.lane.b32.xlu0 %v5410, 28
        %v5504 = vpop.permute.xlu0 %5503
        %5505 = vrot.lane.b32.xlu0 %v5411, 28
        %v5506 = vpop.permute.xlu0 %5505
        %5507 = vrot.lane.b32.xlu0 %v5412, 28
        %v5508 = vpop.permute.xlu0 %5507
        %vm5541 = vcmask 257248
        %5542 = vst.msk [vmem:[#allocation4] sm:$0xf] %vm5541, %v5446
        %5543 = vst.msk [vmem:[#allocation4 + $0x4] sm:$0xf] %vm5541, %v5448
        %5544 = vst.msk [vmem:[#allocation4 + $0x8] sm:$0xf] %vm5541, %v5450
        %5545 = vst.msk [vmem:[#allocation4 + $0xc] sm:$0xf] %vm5541, %v5452
        %5546 = vst.msk [vmem:[#allocation4 + $0x10] sm:$0xf] %vm5541, %v5454
        %5547 = vst.msk [vmem:[#allocation4 + $0x14] sm:$0xf] %vm5541, %v5456
        %5548 = vst.msk [vmem:[#allocation4 + $0x18] sm:$0xf] %vm5541, %v5458
        %5549 = vst.msk [vmem:[#allocation4 + $0x1c] sm:$0xf] %vm5541, %v5460
        %5550 = vst.msk [vmem:[#allocation4 + $0x20] sm:$0xf] %vm5541, %v5462
        %5551 = vst.msk [vmem:[#allocation4 + $0x24] sm:$0xf] %vm5541, %v5464
        %5552 = vst.msk [vmem:[#allocation4 + $0x28] sm:$0xf] %vm5541, %v5466
        %5553 = vst.msk [vmem:[#allocation4 + $0x2c] sm:$0xf] %vm5541, %v5468
        %5554 = vst.msk [vmem:[#allocation4 + $0x30] sm:$0xf] %vm5541, %v5470
        %5555 = vst.msk [vmem:[#allocation4 + $0x34] sm:$0xf] %vm5541, %v5472
        %5556 = vst.msk [vmem:[#allocation4 + $0x38] sm:$0xf] %vm5541, %v5474
        %5557 = vst.msk [vmem:[#allocation4 + $0x3c] sm:$0xf] %vm5541, %v5476
        %5558 = vst.msk [vmem:[#allocation4 + $0x40] sm:$0xf] %vm5541, %v5478
        %5559 = vst.msk [vmem:[#allocation4 + $0x44] sm:$0xf] %vm5541, %v5480
        %5560 = vst.msk [vmem:[#allocation4 + $0x48] sm:$0xf] %vm5541, %v5482
        %5561 = vst.msk [vmem:[#allocation4 + $0x4c] sm:$0xf] %vm5541, %v5484
        %5562 = vst.msk [vmem:[#allocation4 + $0x50] sm:$0xf] %vm5541, %v5486
        %5563 = vst.msk [vmem:[#allocation4 + $0x54] sm:$0xf] %vm5541, %v5488
        %5564 = vst.msk [vmem:[#allocation4 + $0x58] sm:$0xf] %vm5541, %v5490
        %5565 = vst.msk [vmem:[#allocation4 + $0x5c] sm:$0xf] %vm5541, %v5492
        %5566 = vst.msk [vmem:[#allocation4 + $0x60] sm:$0xf] %vm5541, %v5494
        %5567 = vst.msk [vmem:[#allocation4 + $0x64] sm:$0xf] %vm5541, %v5496
        %5568 = vst.msk [vmem:[#allocation4 + $0x68] sm:$0xf] %vm5541, %v5498
        %5569 = vst.msk [vmem:[#allocation4 + $0x6c] sm:$0xf] %vm5541, %v5500
        %5570 = vst.msk [vmem:[#allocation4 + $0x70] sm:$0xf] %vm5541, %v5502
        %5571 = vst.msk [vmem:[#allocation4 + $0x74] sm:$0xf] %vm5541, %v5504
        %5572 = vst.msk [vmem:[#allocation4 + $0x78] sm:$0xf] %vm5541, %v5506
        %5573 = vst.msk [vmem:[#allocation4 + $0x7c] sm:$0xf] %vm5541, %v5508
        %v5574 = vld [vmem:[%s5123 + $0x9] sm:$0xff]
        %v5575 = vld [vmem:[%s5123 + $0x11] sm:$0xff]
        %v5576 = vld [vmem:[%s5123 + $0x29] sm:$0xff]
        %v5577 = vld [vmem:[%s5123 + $0x31] sm:$0xff]
        %v5578 = vld [vmem:[%s5123 + $0x49] sm:$0xff]
        %v5579 = vld [vmem:[%s5123 + $0x51] sm:$0xff]
        %v5580 = vld [vmem:[%s5123 + $0x69] sm:$0xff]
        %v5581 = vld [vmem:[%s5123 + $0x71] sm:$0xff]
        %v5582 = vld [vmem:[%s5123 + $0x89] sm:$0xff]
        %v5583 = vld [vmem:[%s5123 + $0x91] sm:$0xff]
        %v5584 = vld [vmem:[%s5123 + $0xa9] sm:$0xff]
        %v5585 = vld [vmem:[%s5123 + $0xb1] sm:$0xff]
        %v5586 = vld [vmem:[%s5123 + $0xc9] sm:$0xff]
        %v5587 = vld [vmem:[%s5123 + $0xd1] sm:$0xff]
        %v5588 = vld [vmem:[%s5123 + $0xe9] sm:$0xff]
        %v5589 = vld [vmem:[%s5123 + $0xf1] sm:$0xff]
        %v5590 = vld [vmem:[%s5123 + $0x109] sm:$0xff]
        %v5591 = vld [vmem:[%s5123 + $0x111] sm:$0xff]
        %v5592 = vld [vmem:[%s5123 + $0x129] sm:$0xff]
        %v5593 = vld [vmem:[%s5123 + $0x131] sm:$0xff]
        %v5594 = vld [vmem:[%s5123 + $0x149] sm:$0xff]
        %v5595 = vld [vmem:[%s5123 + $0x151] sm:$0xff]
        %v5596 = vld [vmem:[%s5123 + $0x169] sm:$0xff]
        %v5597 = vld [vmem:[%s5123 + $0x171] sm:$0xff]
        %v5598 = vld [vmem:[%s5123 + $0x189] sm:$0xff]
        %v5599 = vld [vmem:[%s5123 + $0x191] sm:$0xff]
        %v5600 = vld [vmem:[%s5123 + $0x1a9] sm:$0xff]
        %v5601 = vld [vmem:[%s5123 + $0x1b1] sm:$0xff]
        %v5602 = vld [vmem:[%s5123 + $0x1c9] sm:$0xff]
        %v5603 = vld [vmem:[%s5123 + $0x1d1] sm:$0xff]
        %v5604 = vld [vmem:[%s5123 + $0x1e9] sm:$0xff]
        %v5605 = vld [vmem:[%s5123 + $0x1f1] sm:$0xff]
        %v5606 = vpack.c.bf16 %v5574, %v5574
        %v5607 = vpack.c.bf16 %v5575, %v5575
        %v5608 = vpack.c.bf16 %v5576, %v5576
        %v5609 = vpack.c.bf16 %v5577, %v5577
        %v5610 = vpack.c.bf16 %v5578, %v5578
        %v5611 = vpack.c.bf16 %v5579, %v5579
        %v5612 = vpack.c.bf16 %v5580, %v5580
        %v5613 = vpack.c.bf16 %v5581, %v5581
        %v5614 = vpack.c.bf16 %v5582, %v5582
        %v5615 = vpack.c.bf16 %v5583, %v5583
        %v5616 = vpack.c.bf16 %v5584, %v5584
        %v5617 = vpack.c.bf16 %v5585, %v5585
        %v5618 = vpack.c.bf16 %v5586, %v5586
        %v5619 = vpack.c.bf16 %v5587, %v5587
        %v5620 = vpack.c.bf16 %v5588, %v5588
        %v5621 = vpack.c.bf16 %v5589, %v5589
        %v5622 = vpack.c.bf16 %v5590, %v5590
        %v5623 = vpack.c.bf16 %v5591, %v5591
        %v5624 = vpack.c.bf16 %v5592, %v5592
        %v5625 = vpack.c.bf16 %v5593, %v5593
        %v5626 = vpack.c.bf16 %v5594, %v5594
        %v5627 = vpack.c.bf16 %v5595, %v5595
        %v5628 = vpack.c.bf16 %v5596, %v5596
        %v5629 = vpack.c.bf16 %v5597, %v5597
        %v5630 = vpack.c.bf16 %v5598, %v5598
        %v5631 = vpack.c.bf16 %v5599, %v5599
        %v5632 = vpack.c.bf16 %v5600, %v5600
        %v5633 = vpack.c.bf16 %v5601, %v5601
        %v5634 = vpack.c.bf16 %v5602, %v5602
        %v5635 = vpack.c.bf16 %v5603, %v5603
        %v5636 = vpack.c.bf16 %v5604, %v5604
        %v5637 = vpack.c.bf16 %v5605, %v5605
        %5670 = vrot.lane.b32.xlu0 %v5606, 32
        %v5671 = vpop.permute.xlu0 %5670
        %5672 = vrot.lane.b32.xlu0 %v5607, 32
        %v5673 = vpop.permute.xlu0 %5672
        %5674 = vrot.lane.b32.xlu0 %v5608, 32
        %v5675 = vpop.permute.xlu0 %5674
        %5676 = vrot.lane.b32.xlu0 %v5609, 32
        %v5677 = vpop.permute.xlu0 %5676
        %5678 = vrot.lane.b32.xlu0 %v5610, 32
        %v5679 = vpop.permute.xlu0 %5678
        %5680 = vrot.lane.b32.xlu0 %v5611, 32
        %v5681 = vpop.permute.xlu0 %5680
        %5682 = vrot.lane.b32.xlu0 %v5612, 32
        %v5683 = vpop.permute.xlu0 %5682
        %5684 = vrot.lane.b32.xlu0 %v5613, 32
        %v5685 = vpop.permute.xlu0 %5684
        %5686 = vrot.lane.b32.xlu0 %v5614, 32
        %v5687 = vpop.permute.xlu0 %5686
        %5688 = vrot.lane.b32.xlu0 %v5615, 32
        %v5689 = vpop.permute.xlu0 %5688
        %5690 = vrot.lane.b32.xlu0 %v5616, 32
        %v5691 = vpop.permute.xlu0 %5690
        %5692 = vrot.lane.b32.xlu0 %v5617, 32
        %v5693 = vpop.permute.xlu0 %5692
        %5694 = vrot.lane.b32.xlu0 %v5618, 32
        %v5695 = vpop.permute.xlu0 %5694
        %5696 = vrot.lane.b32.xlu0 %v5619, 32
        %v5697 = vpop.permute.xlu0 %5696
        %5698 = vrot.lane.b32.xlu0 %v5620, 32
        %v5699 = vpop.permute.xlu0 %5698
        %5700 = vrot.lane.b32.xlu0 %v5621, 32
        %v5701 = vpop.permute.xlu0 %5700
        %5702 = vrot.lane.b32.xlu0 %v5622, 32
        %v5703 = vpop.permute.xlu0 %5702
        %5704 = vrot.lane.b32.xlu0 %v5623, 32
        %v5705 = vpop.permute.xlu0 %5704
        %5706 = vrot.lane.b32.xlu0 %v5624, 32
        %v5707 = vpop.permute.xlu0 %5706
        %5708 = vrot.lane.b32.xlu0 %v5625, 32
        %v5709 = vpop.permute.xlu0 %5708
        %5710 = vrot.lane.b32.xlu0 %v5626, 32
        %v5711 = vpop.permute.xlu0 %5710
        %5712 = vrot.lane.b32.xlu0 %v5627, 32
        %v5713 = vpop.permute.xlu0 %5712
        %5714 = vrot.lane.b32.xlu0 %v5628, 32
        %v5715 = vpop.permute.xlu0 %5714
        %5716 = vrot.lane.b32.xlu0 %v5629, 32
        %v5717 = vpop.permute.xlu0 %5716
        %5718 = vrot.lane.b32.xlu0 %v5630, 32
        %v5719 = vpop.permute.xlu0 %5718
        %5720 = vrot.lane.b32.xlu0 %v5631, 32
        %v5721 = vpop.permute.xlu0 %5720
        %5722 = vrot.lane.b32.xlu0 %v5632, 32
        %v5723 = vpop.permute.xlu0 %5722
        %5724 = vrot.lane.b32.xlu0 %v5633, 32
        %v5725 = vpop.permute.xlu0 %5724
        %5726 = vrot.lane.b32.xlu0 %v5634, 32
        %v5727 = vpop.permute.xlu0 %5726
        %5728 = vrot.lane.b32.xlu0 %v5635, 32
        %v5729 = vpop.permute.xlu0 %5728
        %5730 = vrot.lane.b32.xlu0 %v5636, 32
        %v5731 = vpop.permute.xlu0 %5730
        %5732 = vrot.lane.b32.xlu0 %v5637, 32
        %v5733 = vpop.permute.xlu0 %5732
        %vm5766 = vcmask 290048
        %5767 = vst.msk [vmem:[#allocation4] sm:$0xf] %vm5766, %v5671
        %5768 = vst.msk [vmem:[#allocation4 + $0x4] sm:$0xf] %vm5766, %v5673
        %5769 = vst.msk [vmem:[#allocation4 + $0x8] sm:$0xf] %vm5766, %v5675
        %5770 = vst.msk [vmem:[#allocation4 + $0xc] sm:$0xf] %vm5766, %v5677
        %5771 = vst.msk [vmem:[#allocation4 + $0x10] sm:$0xf] %vm5766, %v5679
        %5772 = vst.msk [vmem:[#allocation4 + $0x14] sm:$0xf] %vm5766, %v5681
        %5773 = vst.msk [vmem:[#allocation4 + $0x18] sm:$0xf] %vm5766, %v5683
        %5774 = vst.msk [vmem:[#allocation4 + $0x1c] sm:$0xf] %vm5766, %v5685
        %5775 = vst.msk [vmem:[#allocation4 + $0x20] sm:$0xf] %vm5766, %v5687
        %5776 = vst.msk [vmem:[#allocation4 + $0x24] sm:$0xf] %vm5766, %v5689
        %5777 = vst.msk [vmem:[#allocation4 + $0x28] sm:$0xf] %vm5766, %v5691
        %5778 = vst.msk [vmem:[#allocation4 + $0x2c] sm:$0xf] %vm5766, %v5693
        %5779 = vst.msk [vmem:[#allocation4 + $0x30] sm:$0xf] %vm5766, %v5695
        %5780 = vst.msk [vmem:[#allocation4 + $0x34] sm:$0xf] %vm5766, %v5697
        %5781 = vst.msk [vmem:[#allocation4 + $0x38] sm:$0xf] %vm5766, %v5699
        %5782 = vst.msk [vmem:[#allocation4 + $0x3c] sm:$0xf] %vm5766, %v5701
        %5783 = vst.msk [vmem:[#allocation4 + $0x40] sm:$0xf] %vm5766, %v5703
        %5784 = vst.msk [vmem:[#allocation4 + $0x44] sm:$0xf] %vm5766, %v5705
        %5785 = vst.msk [vmem:[#allocation4 + $0x48] sm:$0xf] %vm5766, %v5707
        %5786 = vst.msk [vmem:[#allocation4 + $0x4c] sm:$0xf] %vm5766, %v5709
        %5787 = vst.msk [vmem:[#allocation4 + $0x50] sm:$0xf] %vm5766, %v5711
        %5788 = vst.msk [vmem:[#allocation4 + $0x54] sm:$0xf] %vm5766, %v5713
        %5789 = vst.msk [vmem:[#allocation4 + $0x58] sm:$0xf] %vm5766, %v5715
        %5790 = vst.msk [vmem:[#allocation4 + $0x5c] sm:$0xf] %vm5766, %v5717
        %5791 = vst.msk [vmem:[#allocation4 + $0x60] sm:$0xf] %vm5766, %v5719
        %5792 = vst.msk [vmem:[#allocation4 + $0x64] sm:$0xf] %vm5766, %v5721
        %5793 = vst.msk [vmem:[#allocation4 + $0x68] sm:$0xf] %vm5766, %v5723
        %5794 = vst.msk [vmem:[#allocation4 + $0x6c] sm:$0xf] %vm5766, %v5725
        %5795 = vst.msk [vmem:[#allocation4 + $0x70] sm:$0xf] %vm5766, %v5727
        %5796 = vst.msk [vmem:[#allocation4 + $0x74] sm:$0xf] %vm5766, %v5729
        %5797 = vst.msk [vmem:[#allocation4 + $0x78] sm:$0xf] %vm5766, %v5731
        %5798 = vst.msk [vmem:[#allocation4 + $0x7c] sm:$0xf] %vm5766, %v5733
        %v5799 = vld [vmem:[#allocation4] sm:$0xf]
        %v5800 = vld [vmem:[#allocation4 + $0x4] sm:$0xf]
        %v5801 = vld [vmem:[#allocation4 + $0x8] sm:$0xf]
        %v5802 = vld [vmem:[#allocation4 + $0xc] sm:$0xf]
        %v5803 = vld [vmem:[#allocation4 + $0x10] sm:$0xf]
        %v5804 = vld [vmem:[#allocation4 + $0x14] sm:$0xf]
        %v5805 = vld [vmem:[#allocation4 + $0x18] sm:$0xf]
        %v5806 = vld [vmem:[#allocation4 + $0x1c] sm:$0xf]
        %v5807 = vld [vmem:[#allocation4 + $0x20] sm:$0xf]
        %v5808 = vld [vmem:[#allocation4 + $0x24] sm:$0xf]
        %v5809 = vld [vmem:[#allocation4 + $0x28] sm:$0xf]
        %v5810 = vld [vmem:[#allocation4 + $0x2c] sm:$0xf]
        %v5811 = vld [vmem:[#allocation4 + $0x30] sm:$0xf]
        %v5812 = vld [vmem:[#allocation4 + $0x34] sm:$0xf]
        %v5813 = vld [vmem:[#allocation4 + $0x38] sm:$0xf]
        %v5814 = vld [vmem:[#allocation4 + $0x3c] sm:$0xf]
        %v5815 = vld [vmem:[#allocation4 + $0x40] sm:$0xf]
        %v5816 = vld [vmem:[#allocation4 + $0x44] sm:$0xf]
        %v5817 = vld [vmem:[#allocation4 + $0x48] sm:$0xf]
        %v5818 = vld [vmem:[#allocation4 + $0x4c] sm:$0xf]
        %v5819 = vld [vmem:[#allocation4 + $0x50] sm:$0xf]
        %v5820 = vld [vmem:[#allocation4 + $0x54] sm:$0xf]
        %v5821 = vld [vmem:[#allocation4 + $0x58] sm:$0xf]
        %v5822 = vld [vmem:[#allocation4 + $0x5c] sm:$0xf]
        %v5823 = vld [vmem:[#allocation4 + $0x60] sm:$0xf]
        %v5824 = vld [vmem:[#allocation4 + $0x64] sm:$0xf]
        %v5825 = vld [vmem:[#allocation4 + $0x68] sm:$0xf]
        %v5826 = vld [vmem:[#allocation4 + $0x6c] sm:$0xf]
        %v5827 = vld [vmem:[#allocation4 + $0x70] sm:$0xf]
        %v5828 = vld [vmem:[#allocation4 + $0x74] sm:$0xf]
        %v5829 = vld [vmem:[#allocation4 + $0x78] sm:$0xf]
        %v5830 = vld [vmem:[#allocation4 + $0x7c] sm:$0xf]
        %v5831 = vunpack.c.l.bf16 %v5799
        %v5832 = vunpack.c.l.bf16 %v5800
        %v5833 = vunpack.c.l.bf16 %v5801
        %v5834 = vunpack.c.l.bf16 %v5802
        %v5835 = vunpack.c.l.bf16 %v5803
        %v5836 = vunpack.c.l.bf16 %v5804
        %v5837 = vunpack.c.l.bf16 %v5805
        %v5838 = vunpack.c.l.bf16 %v5806
        %v5839 = vunpack.c.l.bf16 %v5807
        %v5840 = vunpack.c.l.bf16 %v5808
        %v5841 = vunpack.c.l.bf16 %v5809
        %v5842 = vunpack.c.l.bf16 %v5810
        %v5843 = vunpack.c.l.bf16 %v5811
        %v5844 = vunpack.c.l.bf16 %v5812
        %v5845 = vunpack.c.l.bf16 %v5813
        %v5846 = vunpack.c.l.bf16 %v5814
        %v5847 = vunpack.c.l.bf16 %v5815
        %v5848 = vunpack.c.l.bf16 %v5816
        %v5849 = vunpack.c.l.bf16 %v5817
        %v5850 = vunpack.c.l.bf16 %v5818
        %v5851 = vunpack.c.l.bf16 %v5819
        %v5852 = vunpack.c.l.bf16 %v5820
        %v5853 = vunpack.c.l.bf16 %v5821
        %v5854 = vunpack.c.l.bf16 %v5822
        %v5855 = vunpack.c.l.bf16 %v5823
        %v5856 = vunpack.c.l.bf16 %v5824
        %v5857 = vunpack.c.l.bf16 %v5825
        %v5858 = vunpack.c.l.bf16 %v5826
        %v5859 = vunpack.c.l.bf16 %v5827
        %v5860 = vunpack.c.l.bf16 %v5828
        %v5861 = vunpack.c.l.bf16 %v5829
        %v5862 = vunpack.c.l.bf16 %v5830
        %v5863 = vld [vmem:[%s4] sm:$0xf]
        %v5864 = vld [vmem:[%s4 + $0x4] sm:$0xf]
        %v5865 = vld [vmem:[%s4 + $0x8] sm:$0xf]
        %v5866 = vld [vmem:[%s4 + $0xc] sm:$0xf]
        %v5867 = vld [vmem:[%s4 + $0x10] sm:$0x3]
        %v5868 = vunpack.c.l.bf16 %v5863
        %v5869 = vunpack.c.l.bf16 %v5864
        %v5870 = vunpack.c.l.bf16 %v5865
        %v5871 = vunpack.c.l.bf16 %v5866
        %v5872 = vunpack.c.l.bf16 %v5867
        %vm5873 = vcmask 293888
        %v5875 = vsel %vm5873, %v5831, 0
        %v5878 = vsel %vm5873, %v5832, 0
        %v5881 = vsel %vm5873, %v5833, 0
        %v5884 = vsel %vm5873, %v5834, 0
        %v5887 = vsel %vm5873, %v5835, 0
        %v5890 = vsel %vm5873, %v5836, 0
        %v5893 = vsel %vm5873, %v5837, 0
        %v5896 = vsel %vm5873, %v5838, 0
        %v5899 = vsel %vm5873, %v5839, 0
        %v5902 = vsel %vm5873, %v5840, 0
        %v5905 = vsel %vm5873, %v5841, 0
        %v5908 = vsel %vm5873, %v5842, 0
        %v5911 = vsel %vm5873, %v5843, 0
        %v5914 = vsel %vm5873, %v5844, 0
        %v5917 = vsel %vm5873, %v5845, 0
        %v5920 = vsel %vm5873, %v5846, 0
        %v5923 = vsel %vm5873, %v5847, 0
        %v5926 = vsel %vm5873, %v5848, 0
        %v5929 = vsel %vm5873, %v5849, 0
        %v5932 = vsel %vm5873, %v5850, 0
        %v5935 = vsel %vm5873, %v5851, 0
        %v5938 = vsel %vm5873, %v5852, 0
        %v5941 = vsel %vm5873, %v5853, 0
        %v5944 = vsel %vm5873, %v5854, 0
        %v5947 = vsel %vm5873, %v5855, 0
        %v5950 = vsel %vm5873, %v5856, 0
        %v5953 = vsel %vm5873, %v5857, 0
        %v5956 = vsel %vm5873, %v5858, 0
        %v5959 = vsel %vm5873, %v5859, 0
        %v5962 = vsel %vm5873, %v5860, 0
        %v5965 = vsel %vm5873, %v5861, 0
        %v5968 = vsel %vm5873, %v5862, 0
        %vm5970 = vcmask 1043456
        %v5972 = vsel %vm5970, %v5872, 0
        %5974 = vmatpush.msra.mxu0 0.0
        %5975 = vmatpush.msra.mxu0 0.0
        %5976 = vmatpush.msra.mxu0 0.0
        %5977 = vmatpush.msra.mxu0 0.0
        %5978 = vmatpush.msra.mxu0 0.0
        %5979 = vmatpush.msra.mxu0 0.0
        %5980 = vmatpush.msra.mxu0 0.0
        %5981 = vmatpush.msra.mxu0 0.0
        %5982 = vmatpush.msra.mxu0 0.0
        %5983 = vmatpush.msra.mxu0 0.0
        %5984 = vmatpush.msra.mxu0 0.0
        %5985 = vmatpush.msra.mxu0 %v5972
        %5986 = vmatpush.msra.mxu0 %v5871
        %5987 = vmatpush.msra.mxu0 %v5870
        %5988 = vmatpush.msra.mxu0 %v5869
        %5989 = vmatpush.msra.mxu0 %v5868
        %5990 = vmatmul.f32.gmra.mxu0 %v5875
        %v5991 = vpop.f32.mrf.mxu0
        %v5992 = vadd.f32 0.0, %v5991
        %5993 = vmatmul.f32.gmra.mxu0 %v5878
        %v5994 = vpop.f32.mrf.mxu0
        %v5995 = vadd.f32 0.0, %v5994
        %5996 = vmatmul.f32.gmra.mxu0 %v5881
        %v5997 = vpop.f32.mrf.mxu0
        %v5998 = vadd.f32 0.0, %v5997
        %5999 = vmatmul.f32.gmra.mxu0 %v5884
        %v6000 = vpop.f32.mrf.mxu0
        %v6001 = vadd.f32 0.0, %v6000
        %6002 = vmatmul.f32.gmra.mxu0 %v5887
        %v6003 = vpop.f32.mrf.mxu0
        %v6004 = vadd.f32 0.0, %v6003
        %6005 = vmatmul.f32.gmra.mxu0 %v5890
        %v6006 = vpop.f32.mrf.mxu0
        %v6007 = vadd.f32 0.0, %v6006
        %6008 = vmatmul.f32.gmra.mxu0 %v5893
        %v6009 = vpop.f32.mrf.mxu0
        %v6010 = vadd.f32 0.0, %v6009
        %6011 = vmatmul.f32.gmra.mxu0 %v5896
        %v6012 = vpop.f32.mrf.mxu0
        %v6013 = vadd.f32 0.0, %v6012
        %6014 = vmatmul.f32.gmra.mxu0 %v5899
        %v6015 = vpop.f32.mrf.mxu0
        %v6016 = vadd.f32 0.0, %v6015
        %6017 = vmatmul.f32.gmra.mxu0 %v5902
        %v6018 = vpop.f32.mrf.mxu0
        %v6019 = vadd.f32 0.0, %v6018
        %6020 = vmatmul.f32.gmra.mxu0 %v5905
        %v6021 = vpop.f32.mrf.mxu0
        %v6022 = vadd.f32 0.0, %v6021
        %6023 = vmatmul.f32.gmra.mxu0 %v5908
        %v6024 = vpop.f32.mrf.mxu0
        %v6025 = vadd.f32 0.0, %v6024
        %6026 = vmatmul.f32.gmra.mxu0 %v5911
        %v6027 = vpop.f32.mrf.mxu0
        %v6028 = vadd.f32 0.0, %v6027
        %6029 = vmatmul.f32.gmra.mxu0 %v5914
        %v6030 = vpop.f32.mrf.mxu0
        %v6031 = vadd.f32 0.0, %v6030
        %6032 = vmatmul.f32.gmra.mxu0 %v5917
        %v6033 = vpop.f32.mrf.mxu0
        %v6034 = vadd.f32 0.0, %v6033
        %6035 = vmatmul.f32.gmra.mxu0 %v5920
        %v6036 = vpop.f32.mrf.mxu0
        %v6037 = vadd.f32 0.0, %v6036
        %6038 = vmatmul.f32.gmra.mxu0 %v5923
        %v6039 = vpop.f32.mrf.mxu0
        %v6040 = vadd.f32 0.0, %v6039
        %6041 = vmatmul.f32.gmra.mxu0 %v5926
        %v6042 = vpop.f32.mrf.mxu0
        %v6043 = vadd.f32 0.0, %v6042
        %6044 = vmatmul.f32.gmra.mxu0 %v5929
        %v6045 = vpop.f32.mrf.mxu0
        %v6046 = vadd.f32 0.0, %v6045
        %6047 = vmatmul.f32.gmra.mxu0 %v5932
        %v6048 = vpop.f32.mrf.mxu0
        %v6049 = vadd.f32 0.0, %v6048
        %6050 = vmatmul.f32.gmra.mxu0 %v5935
        %v6051 = vpop.f32.mrf.mxu0
        %v6052 = vadd.f32 0.0, %v6051
        %6053 = vmatmul.f32.gmra.mxu0 %v5938
        %v6054 = vpop.f32.mrf.mxu0
        %v6055 = vadd.f32 0.0, %v6054
        %6056 = vmatmul.f32.gmra.mxu0 %v5941
        %v6057 = vpop.f32.mrf.mxu0
        %v6058 = vadd.f32 0.0, %v6057
        %6059 = vmatmul.f32.gmra.mxu0 %v5944
        %v6060 = vpop.f32.mrf.mxu0
        %v6061 = vadd.f32 0.0, %v6060
        %6062 = vmatmul.f32.gmra.mxu0 %v5947
        %v6063 = vpop.f32.mrf.mxu0
        %v6064 = vadd.f32 0.0, %v6063
        %6065 = vmatmul.f32.gmra.mxu0 %v5950
        %v6066 = vpop.f32.mrf.mxu0
        %v6067 = vadd.f32 0.0, %v6066
        %6068 = vmatmul.f32.gmra.mxu0 %v5953
        %v6069 = vpop.f32.mrf.mxu0
        %v6070 = vadd.f32 0.0, %v6069
        %6071 = vmatmul.f32.gmra.mxu0 %v5956
        %v6072 = vpop.f32.mrf.mxu0
        %v6073 = vadd.f32 0.0, %v6072
        %6074 = vmatmul.f32.gmra.mxu0 %v5959
        %v6075 = vpop.f32.mrf.mxu0
        %v6076 = vadd.f32 0.0, %v6075
        %6077 = vmatmul.f32.gmra.mxu0 %v5962
        %v6078 = vpop.f32.mrf.mxu0
        %v6079 = vadd.f32 0.0, %v6078
        %6080 = vmatmul.f32.gmra.mxu0 %v5965
        %v6081 = vpop.f32.mrf.mxu0
        %v6082 = vadd.f32 0.0, %v6081
        %6083 = vmatmul.f32.gmra.mxu0 %v5968
        %v6084 = vpop.f32.mrf.mxu0
        %v6085 = vadd.f32 0.0, %v6084
        %6086 = vdwg.mxu0
        %6087 = vxpose.xlu0.b32.start [1/16] %v5992, 128
        %6088 = vxpose.xlu0.b32.cont [2/16] %v5995, 128
        %6089 = vxpose.xlu0.b32.cont [3/16] %v5998, 128
        %6090 = vxpose.xlu0.b32.cont [4/16] %v6001, 128
        %6091 = vxpose.xlu0.b32.cont [5/16] %v6004, 128
        %6092 = vxpose.xlu0.b32.cont [6/16] %v6007, 128
        %6093 = vxpose.xlu0.b32.cont [7/16] %v6010, 128
        %6094 = vxpose.xlu0.b32.cont [8/16] %v6013, 128
        %6095 = vxpose.xlu0.b32.cont [9/16] %v6016, 128
        %6096 = vxpose.xlu0.b32.cont [10/16] %v6019, 128
        %6097 = vxpose.xlu0.b32.cont [11/16] %v6022, 128
        %6098 = vxpose.xlu0.b32.cont [12/16] %v6025, 128
        %6099 = vxpose.xlu0.b32.cont [13/16] %v6028, 128
        %6100 = vxpose.xlu0.b32.cont [14/16] %v6031, 128
        %6101 = vxpose.xlu0.b32.cont [15/16] %v6034, 128
        %6102 = vxpose.xlu0.b32.end [16/16] %v6037, 128
        %v6103 = vpop.trf.xlu0
        %v6104 = vpop.trf.xlu0
        %v6105 = vpop.trf.xlu0
        %v6106 = vpop.trf.xlu0
        %v6107 = vpop.trf.xlu0
        %v6108 = vpop.trf.xlu0
        %v6109 = vpop.trf.xlu0
        %v6110 = vpop.trf.xlu0
        %v6111 = vpop.trf.xlu0
        %v6112 = vpop.trf.xlu0
        %v6113 = vpop.trf.xlu0
        %v6114 = vpop.trf.xlu0
        %v6115 = vpop.trf.xlu0
        %v6116 = vpop.trf.xlu0
        %v6117 = vpop.trf.xlu0
        %v6118 = vpop.trf.xlu0
        %6119 = vxpose.xlu0.b32.start [1/16] %v6040, 128
        %6120 = vxpose.xlu0.b32.cont [2/16] %v6043, 128
        %6121 = vxpose.xlu0.b32.cont [3/16] %v6046, 128
        %6122 = vxpose.xlu0.b32.cont [4/16] %v6049, 128
        %6123 = vxpose.xlu0.b32.cont [5/16] %v6052, 128
        %6124 = vxpose.xlu0.b32.cont [6/16] %v6055, 128
        %6125 = vxpose.xlu0.b32.cont [7/16] %v6058, 128
        %6126 = vxpose.xlu0.b32.cont [8/16] %v6061, 128
        %6127 = vxpose.xlu0.b32.cont [9/16] %v6064, 128
        %6128 = vxpose.xlu0.b32.cont [10/16] %v6067, 128
        %6129 = vxpose.xlu0.b32.cont [11/16] %v6070, 128
        %6130 = vxpose.xlu0.b32.cont [12/16] %v6073, 128
        %6131 = vxpose.xlu0.b32.cont [13/16] %v6076, 128
        %6132 = vxpose.xlu0.b32.cont [14/16] %v6079, 128
        %6133 = vxpose.xlu0.b32.cont [15/16] %v6082, 128
        %6134 = vxpose.xlu0.b32.end [16/16] %v6085, 128
        %v6135 = vpop.trf.xlu0
        %v6136 = vpop.trf.xlu0
        %v6137 = vpop.trf.xlu0
        %v6138 = vpop.trf.xlu0
        %v6139 = vpop.trf.xlu0
        %v6140 = vpop.trf.xlu0
        %v6141 = vpop.trf.xlu0
        %v6142 = vpop.trf.xlu0
        %v6143 = vpop.trf.xlu0
        %v6144 = vpop.trf.xlu0
        %v6145 = vpop.trf.xlu0
        %v6146 = vpop.trf.xlu0
        %v6147 = vpop.trf.xlu0
        %v6148 = vpop.trf.xlu0
        %v6149 = vpop.trf.xlu0
        %v6150 = vpop.trf.xlu0
        %v6151 = vld [vmem:[%s5] sm:$0xf]
        %6153 = vset.pattern.permute.xlu0 0
        %6154 = vperm.xlu0 %6153, %v6151
        %v6155 = vpop.permute.xlu0 %6154
        %v6157 = vmul.f32 %v6103, %v6155
        %v6158 = vmul.f32 %v6135, %v6155
        %v6159 = vld [vmem:[%s6] sm:$0xf]
        %6161 = vset.pattern.permute.xlu0 0
        %6162 = vperm.xlu0 %6161, %v6159
        %v6163 = vpop.permute.xlu0 %6162
        %v6165 = vadd.f32 %v6157, %v6163
        %v6166 = vadd.f32 %v6158, %v6163
        %v6167 = vmax.f32 %v6165, 0.0
        %v6168 = vmax.f32 %v6166, 0.0
        %v6169 = vsel %vm5970, %v6167, -inf
        %v6170 = vrot.slane %v6169, 4
        %v6171 = vmax.f32 %v6169, %v6170
        %v6172 = vrot.slane %v6171, 2
        %v6173 = vmax.f32 %v6171, %v6172
        %v6174 = vrot.slane %v6173, 1
        %v6175 = vmax.f32 %v6173, %v6174
        %v6176 = vsel %vm5970, %v6168, -inf
        %v6177 = vrot.slane %v6176, 4
        %v6178 = vmax.f32 %v6176, %v6177
        %v6179 = vrot.slane %v6178, 2
        %v6180 = vmax.f32 %v6178, %v6179
        %v6181 = vrot.slane %v6180, 1
        %v6182 = vmax.f32 %v6180, %v6181
        %v6183 = vsub.f32 %v6167, %v6175
        %v6184 = vsub.f32 %v6168, %v6182
        %v6185 = vmul.f32 %v6183, 1.442695
        %v6186 = vpow.pop %v6185
        %v6187 = vmul.f32 %v6184, 1.442695
        %v6188 = vpow.pop %v6187
        %v6189 = vsel %vm5970, %v6186, 0.0
        %v6190 = vrot.slane %v6189, 4
        %v6191 = vadd.f32 %v6189, %v6190
        %v6192 = vrot.slane %v6191, 2
        %v6193 = vadd.f32 %v6191, %v6192
        %v6194 = vrot.slane %v6193, 1
        %v6195 = vadd.f32 %v6193, %v6194
        %v6196 = vsel %vm5970, %v6188, 0.0
        %v6197 = vrot.slane %v6196, 4
        %v6198 = vadd.f32 %v6196, %v6197
        %v6199 = vrot.slane %v6198, 2
        %v6200 = vadd.f32 %v6198, %v6199
        %v6201 = vrot.slane %v6200, 1
        %v6202 = vadd.f32 %v6200, %v6201
        %v6203 = vrcp.pop %v6195
        %v6204 = vmul.f32 %v6195, %v6203
        %v6205 = vsub.f32 1.0, %v6204
        %v6206 = vmul.f32 %v6203, %v6205
        %v6207 = vadd.f32 %v6203, %v6206
        %vm6208 = vweird.f32 %v6195
        %vm6209 = vweird.f32 %v6203
        %vm6210 = vmor %vm6208, %vm6209
        %v6211 = vsel %vm6210, %v6203, %v6207
        %v6212 = vand.u32 2147483647, %v6195
        %vm6213 = vcmp.eq.f32.partialorder %v6212, 8.507059e+37
        %v6214 = vand.u32 %v6195, 2147483648
        %v6215 = vor.u32 1.1754944e-38, %v6214
        %v6216 = vsel %vm6213, %v6215, %v6211
        %v6217 = vmul.f32 %v6186, %v6216
        %v6218 = vrcp.pop %v6202
        %v6219 = vmul.f32 %v6202, %v6218
        %v6220 = vsub.f32 1.0, %v6219
        %v6221 = vmul.f32 %v6218, %v6220
        %v6222 = vadd.f32 %v6218, %v6221
        %vm6223 = vweird.f32 %v6202
        %vm6224 = vweird.f32 %v6218
        %vm6225 = vmor %vm6223, %vm6224
        %v6226 = vsel %vm6225, %v6218, %v6222
        %v6227 = vand.u32 2147483647, %v6202
        %vm6228 = vcmp.eq.f32.partialorder %v6227, 8.507059e+37
        %v6229 = vand.u32 %v6202, 2147483648
        %v6230 = vor.u32 1.1754944e-38, %v6229
        %v6231 = vsel %vm6228, %v6230, %v6226
        %v6232 = vmul.f32 %v6188, %v6231
        %v6235 = vrot.slane %v6232, 4
        %v6236 = vsel %vm5970, %v6217, %v6235
        %6238 = vst [vmem:[%s271] sm:$0xff] %v6236
        %s6239 = sand.u32 %s181, 1
        %s6240 = scalar_lea.sflag [#allocation6], %s6239
        %s6241 = sand.u32 %s181, 1
        %s6242 = smul.addr %s6241, 8
        %s6243 = scalar_lea.vmem [#allocation5], %s6242
        // Predicated region
        $region49: #{tpu_custom_call.1} parent=47 // pred_check
          %p6244 = pneg %p191
        $region50: #{tpu_custom_call.1} parent=47 // pred_check_branch
          %6246 = sbr.rel (%p6244) target = $region52
        $region51: #{tpu_custom_call.1} parent=47 // pred_region
          %6248 = vsyncadd %s6240, 0
          %s6249 = smul.addr %s21, 2
          %s6250 = smul.addr %s6249, 4
          %s6251 = scalar_lea.hbm %s7, %s6250
          %s6253 = sshll.u32 %s6243, 4
          %s6254 = int_to_ptr.vmem [resolvable:$true] %s6253
          %s6255 = sshll.u32 %s6251, 4
          %s6256 = int_to_ptr.hbm [resolvable:$true] %s6255
          %6258 = dma.vmem_to_hbm [thread:$0]  %s6254, 128, %s6256, %s6240
        $region52: #{tpu_custom_call.1} parent=47 // pred_fallthru
          _
      $region48: #{tpu_custom_call.1} parent=5 // pred_fallthru
        _
      %p6259 = scmp.le.s32.totalorder 2, %s16
      // Predicated region
      $region53: #{tpu_custom_call.1} parent=5 // pred_check
        %p6260 = pneg %p6259
      $region54: #{tpu_custom_call.1} parent=5 // pred_check_branch
        %6262 = sbr.rel (%p6260) target = $region56
      $region55: #{tpu_custom_call.1} parent=5 // pred_region
        %s6263 = ssub.s32 %s16, 2
        // Predicated region
        $region57: #{tpu_custom_call.1} parent=55 // pred_check
          %p6264 = pneg %p197
        $region58: #{tpu_custom_call.1} parent=55 // pred_check_branch
          %6266 = sbr.rel (%p6264) target = $region60
        $region59: #{tpu_custom_call.1} parent=55 // pred_region
          %s6267 = sand.u32 %s182, 1
          %s6268 = scalar_lea.sflag [#allocation6], %s6267
          %s6269 = sand.u32 %s182, 1
          %s6270 = smul.addr %s6269, 8
          %s6271 = scalar_lea.vmem [#allocation5], %s6270
          %6273 = dma.done %s6268, 128
        $region60: #{tpu_custom_call.1} parent=55 // pred_fallthru
          _
      $region56: #{tpu_custom_call.1} parent=5 // pred_fallthru
        _
    $region6: #{tpu_custom_call.1} parent=1 // loop_footer
      %s20 = sadd.s32 1, %s16
    $region7: #{tpu_custom_call.1} parent=1 // loop_footer_branch
      %15 = sbr.rel target = $region3
    $region8: #{tpu_custom_call.1} parent=1 // loop_exit
      _
    %6274 = vsyncpa [#allocation6], 1
    %s6275 = scalar_lea.sflag [#allocation6], 1
    %6276 = vsyncpa %s6275, 1

</llo_original>
